<compile_context>
chip_gen: v5e
topology: v5e:2x2
jax: 0.10.0
libtpu: 0.0.40
codegen_flags: <defaults>
</compile_context>

<pallas_src>
import functools
import numpy as np
import jax
import jax.numpy as jnp
from jax.experimental import pallas as pl
from jax.experimental.pallas import tpu as pltpu

jax.config.update("jax_default_matmul_precision", "highest")

# ----------------------------- configuration --------------------------------
STATE_KEYS = ("U", "V")
NUM_VARS = len(STATE_KEYS)
NX = 16                 # spatial points per state var
BASIS_DIM = 8           # ROM basis size
D_MODEL = 32
NUM_HEADS = 4
HEAD_DIM = D_MODEL // NUM_HEADS
BC_STATE_DIM = 2
NUM_CONTROLS = 1
TOTAL_BC = BC_STATE_DIM + NUM_CONTROLS
BC_PROCESSED_DIM = 8
HIDDEN_BC_DIM = 16
BATCH = 2
T_STEPS = 4
ALPHA_INIT = 0.1
LN_EPS = 1e-5
HID_STATE_BRANCH = 64
HID_CONTROL = (64, 128)
HID_FUSION = (256, 512, 256)

# Packed per-variable parameter layout: rows of a (PACK_ROWS, D_MODEL) array.
# Every row offset is a multiple of 8, so all in-kernel slices are sublane aligned.
PK_W1 = 0                        # rows [0, 8)    : f1_w^T   (basis,  d_model)
PK_W2 = PK_W1 + BASIS_DIM        # rows [8, 40)   : f2_w^T   (d_model, d_model)
PK_W3 = PK_W2 + D_MODEL          # rows [40, 72)  : f3_w^T   (d_model, basis) in cols 0:8
PK_B1 = PK_W3 + D_MODEL          # row 72         : f1_b
PK_B2 = PK_B1 + 8                # row 80         : f2_b
PK_B3 = PK_B2 + 8                # row 88         : f3_b            (cols 0:8)
PK_LNG = PK_B3 + 8               # row 96         : alpha * LN gamma (cols 0:8)
PK_LNB = PK_LNG + 8              # row 104        : alpha * LN beta  (cols 0:8)
PK_S = PK_LNB + 8                # row 112, col 0 : s = 1 + c1
PACK_ROWS = PK_S + 8             # 120 rows total


# ------------------------------ activations ---------------------------------
def gelu_exact(x):
    # PyTorch nn.GELU default (erf form), used in the plain-JAX glue.
    return jax.nn.gelu(x, approximate=False)


def gelu_tanh(x):
    # TODO(synk): PyTorch nn.GELU default is erf-exact; inside the Pallas kernel
    # (and the matching FFN reference) we use the tanh approximation since Mosaic
    # erf lowering support is not guaranteed (max abs deviation ~3e-4).
    c = 0.7978845608028654  # sqrt(2/pi)
    return 0.5 * x * (1.0 + jnp.tanh(c * (x + 0.044715 * x * x * x)))


def layernorm(x, g, b, eps=LN_EPS):
    mu = jnp.mean(x, axis=-1, keepdims=True)
    var = jnp.mean(jnp.square(x - mu), axis=-1, keepdims=True)
    return (x - mu) * jax.lax.rsqrt(var + eps) * g + b


# ------------------------- deterministic parameters --------------------------
def _dense(key, out_dim, in_dim, scale=0.15):
    kw, kb = jax.random.split(key)
    w = scale * jax.random.normal(kw, (out_dim, in_dim), dtype=jnp.float32)
    b = scale * jax.random.normal(kb, (out_dim,), dtype=jnp.float32)
    return w, b


def init_params(seed=0):
    root = jax.random.PRNGKey(seed)
    cnt = [0]

    def nk():
        cnt[0] += 1
        return jax.random.fold_in(root, cnt[0])

    # --- UniversalLifting ---
    lift = {}
    sbw, sbb = [], []
    for _ in range(BC_STATE_DIM):
        w, b = _dense(nk(), HID_STATE_BRANCH, 1)
        sbw.append(w[:, 0])
        sbb.append(b)
    lift["sb_w"] = jnp.stack(sbw)                   # (bc_state_dim, 64)
    lift["sb_b"] = jnp.stack(sbb)                   # (bc_state_dim, 64)
    lift["c1_w"], lift["c1_b"] = _dense(nk(), HID_CONTROL[0], NUM_CONTROLS)
    lift["c2_w"], lift["c2_b"] = _dense(nk(), HID_CONTROL[1], HID_CONTROL[0])
    fin = BC_STATE_DIM * HID_STATE_BRANCH + HID_CONTROL[1]
    lift["f1_w"], lift["f1_b"] = _dense(nk(), HID_FUSION[0], fin)
    lift["f2_w"], lift["f2_b"] = _dense(nk(), HID_FUSION[1], HID_FUSION[0])
    lift["f3_w"], lift["f3_b"] = _dense(nk(), HID_FUSION[2], HID_FUSION[1])
    lift["fo_w"], lift["fo_b"] = _dense(nk(), NUM_VARS * NX, HID_FUSION[2])

    # --- per state variable modules (shared_attention=False) ---
    var_params = {}
    for k in STATE_KEYS:
        p = {}
        g = jax.random.normal(nk(), (NX, BASIS_DIM), jnp.float32)
        q, _ = jnp.linalg.qr(g)                     # orthogonal init of Phi
        p["phi"] = q[:, :BASIS_DIM]                 # (nx, basis_dim)
        p["wq_w"], p["wq_b"] = _dense(nk(), D_MODEL, 1)
        p["wk_w"], p["wk_b"] = _dense(nk(), D_MODEL, NX)
        p["wv_w"], p["wv_b"] = _dense(nk(), D_MODEL, NX)
        p["wo_w"], p["wo_b"] = _dense(nk(), D_MODEL, D_MODEL)   # attn out_proj
        p["wp_w"], p["wp_b"] = _dense(nk(), 1, D_MODEL)         # proj_to_coef
        p["f1_w"], p["f1_b"] = _dense(nk(), D_MODEL, BASIS_DIM)  # FFN
        p["f2_w"], p["f2_b"] = _dense(nk(), D_MODEL, D_MODEL)
        p["f3_w"], p["f3_b"] = _dense(nk(), BASIS_DIM, D_MODEL)
        p["ffn_lng"] = jnp.ones((BASIS_DIM,), jnp.float32)
        p["ffn_lnb"] = jnp.zeros((BASIS_DIM,), jnp.float32)
        p["a0_w"], p["a0_b"] = _dense(nk(), BASIS_DIM, BASIS_DIM)
        p["a0_lng"] = jnp.ones((BASIS_DIM,), jnp.float32)
        p["a0_lnb"] = jnp.zeros((BASIS_DIM,), jnp.float32)
        p["alpha"] = jnp.asarray(ALPHA_INIT, dtype=jnp.float32)
        p["bcp1_w"], p["bcp1_b"] = _dense(nk(), HIDDEN_BC_DIM, TOTAL_BC)
        p["bcp2_w"], p["bcp2_b"] = _dense(nk(), BC_PROCESSED_DIM, HIDDEN_BC_DIM)
        p["bc2a_w"], p["bc2a_b"] = _dense(nk(), BASIS_DIM, BC_PROCESSED_DIM)
        var_params[k] = p
    return {"lifting": lift, "vars": var_params}


# ------------------------------- JAX glue ------------------------------------
def universal_lifting(lift, bc):
    """UniversalLifting.forward: (N, total_bc) -> (N, num_vars, nx)."""
    bs = bc[:, :BC_STATE_DIM]
    sf = gelu_exact(bs[:, :, None] * lift["sb_w"][None] + lift["sb_b"][None])
    sf = sf.reshape(bc.shape[0], BC_STATE_DIM * HID_STATE_BRANCH)
    ctrl = bc[:, BC_STATE_DIM:]
    h = gelu_exact(ctrl @ lift["c1_w"].T + lift["c1_b"])
    h = gelu_exact(h @ lift["c2_w"].T + lift["c2_b"])
    x = jnp.concatenate([sf, h], axis=-1)
    x = gelu_exact(x @ lift["f1_w"].T + lift["f1_b"])
    x = gelu_exact(x @ lift["f2_w"].T + lift["f2_b"])
    x = gelu_exact(x @ lift["f3_w"].T + lift["f3_b"])
    out = x @ lift["fo_w"].T + lift["fo_b"]
    return out.reshape(-1, NUM_VARS, NX)


def bc_driven_update(p, bc):
    """bc_to_a_update(bc_feature_processor(BC_Ctrl_n)) : (N, total_bc) -> (N, basis)."""
    f = gelu_exact(bc @ p["bcp1_w"].T + p["bcp1_b"])
    f = f @ p["bcp2_w"].T + p["bcp2_b"]
    return f @ p["bc2a_w"].T + p["bc2a_b"]


def a0_map(p, a0):
    """a0_mapping: Linear -> ReLU -> LayerNorm."""
    x = jax.nn.relu(a0 @ p["a0_w"].T + p["a0_b"])
    return layernorm(x, p["a0_lng"], p["a0_lnb"])


def attention_affine(p):
    """attn_update(a) = c1 * a + c0 elementwise over (batch, basis).

    Valid because W_q has input dim 1 and K/V depend only on Phi (batch/time
    independent), so the linear multi-head attention + out_proj + proj_to_coef
    pipeline is affine in each coefficient.  Time-invariant -> hoisted out of
    the kernel entirely."""
    phi = p["phi"]
    K = phi.T @ p["wk_w"].T + p["wk_b"]              # (basis, d)
    Vm = phi.T @ p["wv_w"].T + p["wv_b"]
    blocks = [K[:, h * HEAD_DIM:(h + 1) * HEAD_DIM].T
              @ Vm[:, h * HEAD_DIM:(h + 1) * HEAD_DIM]
              for h in range(NUM_HEADS)]
    M = jax.scipy.linalg.block_diag(*blocks)         # (d, d) block-diag K_h^T V_h
    scale = 1.0 / np.sqrt(float(D_MODEL))
    wq = p["wq_w"][:, 0]                             # (d,)
    v1 = (wq @ M) @ p["wo_w"].T                      # (d,)
    v0 = (p["wq_b"] @ M) @ p["wo_w"].T + p["wo_b"]   # (d,)
    wp = p["wp_w"][0]                                # (d,)
    c1 = scale * jnp.dot(v1, wp)
    c0 = scale * jnp.dot(v0, wp) + p["wp_b"][0]
    return c0, c1


def build_packed_params(p, s):
    """Consolidate FFN weights/biases, (alpha-folded) LN params and the scalar s
    into one sublane-aligned (PACK_ROWS, D_MODEL) VMEM block."""
    pk = jnp.zeros((PACK_ROWS, D_MODEL), jnp.float32)
    pk = pk.at[PK_W1:PK_W1 + BASIS_DIM, :].set(p["f1_w"].T)
    pk = pk.at[PK_W2:PK_W2 + D_MODEL, :].set(p["f2_w"].T)
    pk = pk.at[PK_W3:PK_W3 + D_MODEL, 0:BASIS_DIM].set(p["f3_w"].T)
    pk = pk.at[PK_B1, :].set(p["f1_b"])
    pk = pk.at[PK_B2, :].set(p["f2_b"])
    pk = pk.at[PK_B3, 0:BASIS_DIM].set(p["f3_b"])
    pk = pk.at[PK_LNG, 0:BASIS_DIM].set(p["alpha"] * p["ffn_lng"])   # alpha folded
    pk = pk.at[PK_LNB, 0:BASIS_DIM].set(p["alpha"] * p["ffn_lnb"])
    pk = pk.at[PK_S, 0].set(s)
    return pk


# ------------------------------ Pallas kernel --------------------------------
def _rom_fused_kernel(T, a0_ref, phiT_ref, drive_ref, ub_ref, pack_ref, uhat_ref):
    """One grid step == one state variable; the full T-step recurrence is a single
    statically-unrolled basic block (T is tiny), everything VMEM resident."""
    # Per-variable constants — loaded once, kept in vregs across the unrolled loop.
    w1 = pack_ref[0, PK_W1:PK_W1 + BASIS_DIM, :]              # (r, d)
    w2 = pack_ref[0, PK_W2:PK_W2 + D_MODEL, :]                # (d, d)
    w3 = pack_ref[0, PK_W3:PK_W3 + D_MODEL, 0:BASIS_DIM]      # (d, r)
    b1 = pack_ref[0, PK_B1:PK_B1 + 1, :]                      # (1, d)
    b2 = pack_ref[0, PK_B2:PK_B2 + 1, :]                      # (1, d)
    b3 = pack_ref[0, PK_B3:PK_B3 + 1, 0:BASIS_DIM]            # (1, r)
    ln_g = pack_ref[0, PK_LNG:PK_LNG + 1, 0:BASIS_DIM]        # alpha already folded in
    ln_b = pack_ref[0, PK_LNB:PK_LNB + 1, 0:BASIS_DIM]
    s = pack_ref[0, PK_S:PK_S + 1, 0:1]                       # (1,1): 1 + c1
    phiT = phiT_ref[0]                                        # (r, nx)

    a = a0_ref[0]                                             # (B, r); a0 already mapped
    for t in range(T):   # static full unroll — no per-step grid/pipeline overhead
        # ---- ImprovedUpdateFFN (eval mode; dropout = identity) ------------------
        h = gelu_tanh(jnp.dot(a, w1, preferred_element_type=jnp.float32) + b1)
        h = gelu_tanh(jnp.dot(h, w2, preferred_element_type=jnp.float32) + b2)
        mlp = jnp.dot(h, w3, preferred_element_type=jnp.float32) + b3
        pre = mlp + a                                         # residual
        mu = jnp.mean(pre, axis=-1, keepdims=True)
        var = jnp.mean(jnp.square(pre - mu), axis=-1, keepdims=True)
        ffn = (pre - mu) * jax.lax.rsqrt(var + LN_EPS) * ln_g + ln_b

        # ---- coefficient update:  a*(1+c1) + alpha*FFN + (bc_upd - Phi^T U_B + c0)
        a = a * s + ffn + drive_ref[0, t]

        # ---- reconstruction: U_hat^{n+1} = U_B^{n+1} + Phi a^{n+1} ---------------
        uhat_ref[0, t] = ub_ref[0, t] + jnp.dot(a, phiT,
                                                preferred_element_type=jnp.float32)


def rom_rollout_pallas(a0_s, phiT_s, drive_s, ub_s, pack_s, T):
    V, B, r = a0_s.shape
    nx = phiT_s.shape[-1]
    return pl.pallas_call(
        functools.partial(_rom_fused_kernel, T),
        out_shape=jax.ShapeDtypeStruct((V, T, B, nx), jnp.float32),
        grid_spec=pltpu.PrefetchScalarGridSpec(
            num_scalar_prefetch=0,
            grid=(V,),                                   # one grid step per state var
            in_specs=[
                pl.BlockSpec((1, B, r), lambda v: (v, 0, 0)),                 # a0
                pl.BlockSpec((1, r, nx), lambda v: (v, 0, 0)),                # Phi^T
                pl.BlockSpec((1, T, B, r), lambda v: (v, 0, 0, 0)),           # drive
                pl.BlockSpec((1, T, B, nx), lambda v: (v, 0, 0, 0)),          # U_B seq
                pl.BlockSpec((1, PACK_ROWS, D_MODEL), lambda v: (v, 0, 0)),   # packed params
            ],
            out_specs=pl.BlockSpec((1, T, B, nx), lambda v: (v, 0, 0, 0)),
        ),
        compiler_params=pltpu.CompilerParams(
            # State variables are fully independent -> parallel (2 TensorCores on v7x).
            dimension_semantics=("parallel",)),
    )(a0_s, phiT_s, drive_s, ub_s, pack_s)


# --------------------------- full module forward ------------------------------
@functools.partial(jax.jit, static_argnums=(3,))
def multivar_attention_rom_forward(params, a0_dict, BC_Ctrl_seq, T):
    """Returns {key: (batch, T, nx)} like the PyTorch forward."""
    B = BC_Ctrl_seq.shape[0]
    bc_n_flat = BC_Ctrl_seq[:, :T, :].reshape(B * T, TOTAL_BC)
    bc_np1_flat = BC_Ctrl_seq[:, 1:T + 1, :].reshape(B * T, TOTAL_BC)
    ub_np1 = universal_lifting(params["lifting"], bc_np1_flat)
    ub_np1 = ub_np1.reshape(B, T, NUM_VARS, NX)

    a0_s, phiT_s, drive_s, ub_s, pack_s = [], [], [], [], []
    for i, k in enumerate(STATE_KEYS):
        p = params["vars"][k]
        a0m = a0_map(p, a0_dict[k])                                  # (B, r)
        bc_upd = bc_driven_update(p, bc_n_flat).reshape(B, T, BASIS_DIM)
        bc_upd = jnp.transpose(bc_upd, (1, 0, 2))                    # (T, B, r)
        ub_var = jnp.transpose(ub_np1[:, :, i, :], (1, 0, 2))        # (T, B, nx)
        c0, c1 = attention_affine(p)                                 # hoisted attn affine
        term_sub = jnp.einsum("tbx,xr->tbr", ub_var, p["phi"])       # batched Phi^T U_B
        drive = bc_upd - term_sub + c0                               # (T, B, r)
        a0_s.append(a0m)
        phiT_s.append(p["phi"].T)
        drive_s.append(drive)
        ub_s.append(ub_var)
        pack_s.append(build_packed_params(p, 1.0 + c1))
    out = rom_rollout_pallas(jnp.stack(a0_s), jnp.stack(phiT_s), jnp.stack(drive_s),
                             jnp.stack(ub_s), jnp.stack(pack_s), T)  # (V, T, B, nx)
    return {k: jnp.transpose(out[i], (1, 0, 2)) for i, k in enumerate(STATE_KEYS)}


# --------------------------- pure-JAX reference -------------------------------
def reference_forward(params, a0_dict, BC_Ctrl_seq, T):
    B = BC_Ctrl_seq.shape[0]
    a_curr = {k: a0_map(params["vars"][k], a0_dict[k]) for k in STATE_KEYS}
    U_hat_seq = {k: [] for k in STATE_KEYS}
    for t in range(T):
        bc_n = BC_Ctrl_seq[:, t, :]
        ub_np1 = universal_lifting(params["lifting"], BC_Ctrl_seq[:, t + 1, :])
        a_next = {}
        for i, k in enumerate(STATE_KEYS):
            p = params["vars"][k]
            a_n = a_curr[k]
            phi = p["phi"]
            K = jnp.broadcast_to(phi.T @ p["wk_w"].T + p["wk_b"], (B, BASIS_DIM, D_MODEL))
            V = jnp.broadcast_to(phi.T @ p["wv_w"].T + p["wv_b"], (B, BASIS_DIM, D_MODEL))
            Q = a_n[:, :, None] * p["wq_w"][:, 0][None, None, :] + p["wq_b"][None, None, :]
            Qr = Q.reshape(B, BASIS_DIM, NUM_HEADS, HEAD_DIM).transpose(0, 2, 1, 3)
            Kr = K.reshape(B, BASIS_DIM, NUM_HEADS, HEAD_DIM).transpose(0, 2, 1, 3)
            Vr = V.reshape(B, BASIS_DIM, NUM_HEADS, HEAD_DIM).transpose(0, 2, 1, 3)
            KV = jnp.einsum("bhkd,bhke->bhde", Kr, Vr)
            z = jnp.einsum("bhqd,bhde->bhqe", Qr, KV)
            z = z.transpose(0, 2, 1, 3).reshape(B, BASIS_DIM, D_MODEL)
            z = z @ p["wo_w"].T + p["wo_b"]
            z = z / np.sqrt(float(D_MODEL))
            attn_upd = (z.reshape(-1, D_MODEL) @ p["wp_w"].T + p["wp_b"]).reshape(B, BASIS_DIM)
            h = gelu_tanh(a_n @ p["f1_w"].T + p["f1_b"])
            h = gelu_tanh(h @ p["f2_w"].T + p["f2_b"])
            mlp = h @ p["f3_w"].T + p["f3_b"]
            ffn_out = layernorm(mlp + a_n, p["ffn_lng"], p["ffn_lnb"])
            bc_upd = bc_driven_update(p, bc_n)
            ub_var = ub_np1[:, i, :]
            term_sub = ub_var @ phi
            a_nx = a_n + attn_upd + p["alpha"] * ffn_out + bc_upd - term_sub
            a_next[k] = a_nx
            U_hat_seq[k].append(ub_var + a_nx @ phi.T)
        a_curr = a_next
    return {k: jnp.stack(U_hat_seq[k], axis=0).transpose(1, 0, 2) for k in STATE_KEYS}


# ----------------------------------- main -------------------------------------
if __name__ == "__main__":
    params = init_params(0)
    key = jax.random.PRNGKey(0)
    k1, k2, k3 = jax.random.split(key, 3)
    a0_dict = {
        STATE_KEYS[0]: jax.random.normal(k1, (BATCH, BASIS_DIM), jnp.float32),
        STATE_KEYS[1]: jax.random.normal(k2, (BATCH, BASIS_DIM), jnp.float32),
    }
    BC_Ctrl_seq = jax.random.normal(k3, (BATCH, T_STEPS + 1, TOTAL_BC), jnp.float32)

    out = multivar_attention_rom_forward(params, a0_dict, BC_Ctrl_seq, T_STEPS)
    out = {k: jax.block_until_ready(v) for k, v in out.items()}

    ref = reference_forward(params, a0_dict, BC_Ctrl_seq, T_STEPS)
    for k in STATE_KEYS:
        assert out[k].shape == (BATCH, T_STEPS, NX), out[k].shape
        err = float(jnp.max(jnp.abs(out[k] - ref[k])))
        if not np.isfinite(err) or err > 1e-3:
            raise SystemExit(f"mismatch for state var {k}: max abs err {err}")
    print("KERNEL_OK")
</pallas_src>

<mosaic_0001>
module attributes {stable_mosaic.version = 11 : i64} {
  func.func @_rom_fused_kernel(%arg0: i32, %arg1: memref<1x2x8xf32, #tpu.memory_space<vmem>>, %arg2: memref<1x8x16xf32, #tpu.memory_space<vmem>>, %arg3: memref<1x4x2x8xf32, #tpu.memory_space<vmem>>, %arg4: memref<1x4x2x16xf32, #tpu.memory_space<vmem>>, %arg5: memref<1x120x32xf32, #tpu.memory_space<vmem>>, %arg6: memref<1x4x2x16xf32, #tpu.memory_space<vmem>>) attributes {dimension_semantics = [#tpu.dimension_semantics<parallel>], iteration_bounds = array<i64: 2>, scalar_prefetch = 0 : i64, scratch_operands = 0 : i64, tpu.core_type = #tpu.core_type<tc>, window_params = [{transform_indices = @transform_0, window_bounds = array<i64: 1, 2, 8>}, {transform_indices = @transform_1, window_bounds = array<i64: 1, 8, 16>}, {transform_indices = @transform_2, window_bounds = array<i64: 1, 4, 2, 8>}, {transform_indices = @transform_3, window_bounds = array<i64: 1, 4, 2, 16>}, {transform_indices = @transform_4, window_bounds = array<i64: 1, 120, 32>}, {transform_indices = @transform_5, window_bounds = array<i64: 1, 4, 2, 16>}]} {
    %c0 = arith.constant 0 : index
    %c0_0 = arith.constant 0 : index
    %c0_1 = arith.constant 0 : index
    %0 = vector.load %arg5[%c0, %c0_0, %c0_1] : memref<1x120x32xf32, #tpu.memory_space<vmem>>, vector<1x8x32xf32>
    %1 = vector.shape_cast %0 : vector<1x8x32xf32> to vector<8x32xf32>
    %c0_2 = arith.constant 0 : index
    %c8 = arith.constant 8 : index
    %c0_3 = arith.constant 0 : index
    %2 = vector.load %arg5[%c0_2, %c8, %c0_3] : memref<1x120x32xf32, #tpu.memory_space<vmem>>, vector<1x32x32xf32>
    %3 = vector.shape_cast %2 : vector<1x32x32xf32> to vector<32x32xf32>
    %c0_4 = arith.constant 0 : index
    %c40 = arith.constant 40 : index
    %c0_5 = arith.constant 0 : index
    %4 = vector.load %arg5[%c0_4, %c40, %c0_5] : memref<1x120x32xf32, #tpu.memory_space<vmem>>, vector<1x32x8xf32>
    %5 = vector.shape_cast %4 : vector<1x32x8xf32> to vector<32x8xf32>
    %c0_6 = arith.constant 0 : index
    %c72 = arith.constant 72 : index
    %c0_7 = arith.constant 0 : index
    %6 = vector.load %arg5[%c0_6, %c72, %c0_7] : memref<1x120x32xf32, #tpu.memory_space<vmem>>, vector<1x1x32xf32>
    %7 = vector.shape_cast %6 : vector<1x1x32xf32> to vector<1x32xf32>
    %c0_8 = arith.constant 0 : index
    %c80 = arith.constant 80 : index
    %c0_9 = arith.constant 0 : index
    %8 = vector.load %arg5[%c0_8, %c80, %c0_9] : memref<1x120x32xf32, #tpu.memory_space<vmem>>, vector<1x1x32xf32>
    %9 = vector.shape_cast %8 : vector<1x1x32xf32> to vector<1x32xf32>
    %c0_10 = arith.constant 0 : index
    %c88 = arith.constant 88 : index
    %c0_11 = arith.constant 0 : index
    %10 = vector.load %arg5[%c0_10, %c88, %c0_11] : memref<1x120x32xf32, #tpu.memory_space<vmem>>, vector<1x1x8xf32>
    %11 = vector.shape_cast %10 : vector<1x1x8xf32> to vector<1x8xf32>
    %c0_12 = arith.constant 0 : index
    %c96 = arith.constant 96 : index
    %c0_13 = arith.constant 0 : index
    %12 = vector.load %arg5[%c0_12, %c96, %c0_13] : memref<1x120x32xf32, #tpu.memory_space<vmem>>, vector<1x1x8xf32>
    %13 = vector.shape_cast %12 : vector<1x1x8xf32> to vector<1x8xf32>
    %c0_14 = arith.constant 0 : index
    %c104 = arith.constant 104 : index
    %c0_15 = arith.constant 0 : index
    %14 = vector.load %arg5[%c0_14, %c104, %c0_15] : memref<1x120x32xf32, #tpu.memory_space<vmem>>, vector<1x1x8xf32>
    %15 = vector.shape_cast %14 : vector<1x1x8xf32> to vector<1x8xf32>
    %c0_16 = arith.constant 0 : index
    %c112 = arith.constant 112 : index
    %c0_17 = arith.constant 0 : index
    %16 = vector.load %arg5[%c0_16, %c112, %c0_17] : memref<1x120x32xf32, #tpu.memory_space<vmem>>, vector<1x1x1xf32>
    %17 = vector.shape_cast %16 : vector<1x1x1xf32> to vector<1x1xf32>
    %c0_18 = arith.constant 0 : index
    %c0_19 = arith.constant 0 : index
    %c0_20 = arith.constant 0 : index
    %18 = vector.load %arg2[%c0_18, %c0_19, %c0_20] : memref<1x8x16xf32, #tpu.memory_space<vmem>>, vector<1x8x16xf32>
    %19 = vector.shape_cast %18 : vector<1x8x16xf32> to vector<8x16xf32>
    %c0_21 = arith.constant 0 : index
    %c0_22 = arith.constant 0 : index
    %c0_23 = arith.constant 0 : index
    %20 = vector.load %arg1[%c0_21, %c0_22, %c0_23] : memref<1x2x8xf32, #tpu.memory_space<vmem>>, vector<1x2x8xf32>
    %21 = vector.shape_cast %20 : vector<1x2x8xf32> to vector<2x8xf32>
    %cst = arith.constant dense<0.000000e+00> : vector<2x32xf32>
    %22 = tpu.matmul %21, %1, %cst {dimension_numbers = #tpu.dot_dimension_numbers<[1], [0], [0], [1], [0, 0, 1, 1], [], []>, precision = #tpu.contract_precision<fp32>} : vector<2x8xf32>, vector<8x32xf32>, vector<2x32xf32> -> vector<2x32xf32>
    %23 = vector.broadcast %7 : vector<1x32xf32> to vector<2x32xf32>
    %24 = arith.addf %22, %23 : vector<2x32xf32>
    %cst_24 = arith.constant 5.000000e-01 : f32
    %25 = vector.broadcast %cst_24 : f32 to vector<2x32xf32>
    %26 = arith.mulf %25, %24 : vector<2x32xf32>
    %cst_25 = arith.constant 4.471500e-02 : f32
    %27 = vector.broadcast %cst_25 : f32 to vector<2x32xf32>
    %28 = arith.mulf %27, %24 : vector<2x32xf32>
    %29 = arith.mulf %28, %24 : vector<2x32xf32>
    %30 = arith.mulf %29, %24 : vector<2x32xf32>
    %31 = arith.addf %24, %30 : vector<2x32xf32>
    %cst_26 = arith.constant 0.797884583 : f32
    %32 = vector.broadcast %cst_26 : f32 to vector<2x32xf32>
    %33 = arith.mulf %32, %31 : vector<2x32xf32>
    %34 = math.tanh %33 : vector<2x32xf32>
    %cst_27 = arith.constant 1.000000e+00 : f32
    %35 = vector.broadcast %cst_27 : f32 to vector<2x32xf32>
    %36 = arith.addf %35, %34 : vector<2x32xf32>
    %37 = arith.mulf %26, %36 : vector<2x32xf32>
    %cst_28 = arith.constant dense<0.000000e+00> : vector<2x32xf32>
    %38 = tpu.matmul %37, %3, %cst_28 {dimension_numbers = #tpu.dot_dimension_numbers<[1], [0], [0], [1], [0, 0, 1, 1], [], []>, precision = #tpu.contract_precision<fp32>} : vector<2x32xf32>, vector<32x32xf32>, vector<2x32xf32> -> vector<2x32xf32>
    %39 = vector.broadcast %9 : vector<1x32xf32> to vector<2x32xf32>
    %40 = arith.addf %38, %39 : vector<2x32xf32>
    %cst_29 = arith.constant 5.000000e-01 : f32
    %41 = vector.broadcast %cst_29 : f32 to vector<2x32xf32>
    %42 = arith.mulf %41, %40 : vector<2x32xf32>
    %cst_30 = arith.constant 4.471500e-02 : f32
    %43 = vector.broadcast %cst_30 : f32 to vector<2x32xf32>
    %44 = arith.mulf %43, %40 : vector<2x32xf32>
    %45 = arith.mulf %44, %40 : vector<2x32xf32>
    %46 = arith.mulf %45, %40 : vector<2x32xf32>
    %47 = arith.addf %40, %46 : vector<2x32xf32>
    %cst_31 = arith.constant 0.797884583 : f32
    %48 = vector.broadcast %cst_31 : f32 to vector<2x32xf32>
    %49 = arith.mulf %48, %47 : vector<2x32xf32>
    %50 = math.tanh %49 : vector<2x32xf32>
    %cst_32 = arith.constant 1.000000e+00 : f32
    %51 = vector.broadcast %cst_32 : f32 to vector<2x32xf32>
    %52 = arith.addf %51, %50 : vector<2x32xf32>
    %53 = arith.mulf %42, %52 : vector<2x32xf32>
    %cst_33 = arith.constant dense<0.000000e+00> : vector<2x8xf32>
    %54 = tpu.matmul %53, %5, %cst_33 {dimension_numbers = #tpu.dot_dimension_numbers<[1], [0], [0], [1], [0, 0, 1, 1], [], []>, precision = #tpu.contract_precision<fp32>} : vector<2x32xf32>, vector<32x8xf32>, vector<2x8xf32> -> vector<2x8xf32>
    %55 = vector.broadcast %11 : vector<1x8xf32> to vector<2x8xf32>
    %56 = arith.addf %54, %55 : vector<2x8xf32>
    %57 = arith.addf %56, %21 : vector<2x8xf32>
    %cst_34 = arith.constant dense<0.000000e+00> : vector<2xf32>
    %58 = vector.multi_reduction <add>, %57, %cst_34 [1] : vector<2x8xf32> to vector<2xf32>
    %59 = vector.shape_cast %58 : vector<2xf32> to vector<2x1xf32>
    %cst_35 = arith.constant 8.000000e+00 : f32
    %60 = vector.broadcast %cst_35 : f32 to vector<2x1xf32>
    %61 = arith.divf %59, %60 : vector<2x1xf32>
    %62 = vector.broadcast %61 : vector<2x1xf32> to vector<2x8xf32>
    %63 = arith.subf %57, %62 : vector<2x8xf32>
    %64 = arith.mulf %63, %63 : vector<2x8xf32>
    %cst_36 = arith.constant dense<0.000000e+00> : vector<2xf32>
    %65 = vector.multi_reduction <add>, %64, %cst_36 [1] : vector<2x8xf32> to vector<2xf32>
    %66 = vector.shape_cast %65 : vector<2xf32> to vector<2x1xf32>
    %cst_37 = arith.constant 8.000000e+00 : f32
    %67 = vector.broadcast %cst_37 : f32 to vector<2x1xf32>
    %68 = arith.divf %66, %67 : vector<2x1xf32>
    %69 = vector.broadcast %61 : vector<2x1xf32> to vector<2x8xf32>
    %70 = arith.subf %57, %69 : vector<2x8xf32>
    %cst_38 = arith.constant 9.99999974E-6 : f32
    %71 = vector.broadcast %cst_38 : f32 to vector<2x1xf32>
    %72 = arith.addf %68, %71 : vector<2x1xf32>
    %73 = math.rsqrt %72 : vector<2x1xf32>
    %74 = vector.broadcast %73 : vector<2x1xf32> to vector<2x8xf32>
    %75 = arith.mulf %70, %74 : vector<2x8xf32>
    %76 = vector.broadcast %13 : vector<1x8xf32> to vector<2x8xf32>
    %77 = arith.mulf %75, %76 : vector<2x8xf32>
    %78 = vector.broadcast %15 : vector<1x8xf32> to vector<2x8xf32>
    %79 = arith.addf %77, %78 : vector<2x8xf32>
    %80 = vector.broadcast %17 : vector<1x1xf32> to vector<2x8xf32>
    %81 = arith.mulf %21, %80 : vector<2x8xf32>
    %82 = arith.addf %81, %79 : vector<2x8xf32>
    %c0_39 = arith.constant 0 : index
    %c0_40 = arith.constant 0 : index
    %c0_41 = arith.constant 0 : index
    %c0_42 = arith.constant 0 : index
    %83 = vector.load %arg3[%c0_39, %c0_40, %c0_41, %c0_42] : memref<1x4x2x8xf32, #tpu.memory_space<vmem>>, vector<1x1x2x8xf32>
    %84 = vector.shape_cast %83 : vector<1x1x2x8xf32> to vector<2x8xf32>
    %85 = arith.addf %82, %84 : vector<2x8xf32>
    %c0_43 = arith.constant 0 : index
    %c0_44 = arith.constant 0 : index
    %c0_45 = arith.constant 0 : index
    %c0_46 = arith.constant 0 : index
    %86 = vector.load %arg4[%c0_43, %c0_44, %c0_45, %c0_46] : memref<1x4x2x16xf32, #tpu.memory_space<vmem>>, vector<1x1x2x16xf32>
    %87 = vector.shape_cast %86 : vector<1x1x2x16xf32> to vector<2x16xf32>
    %cst_47 = arith.constant dense<0.000000e+00> : vector<2x16xf32>
    %88 = tpu.matmul %85, %19, %cst_47 {dimension_numbers = #tpu.dot_dimension_numbers<[1], [0], [0], [1], [0, 0, 1, 1], [], []>, precision = #tpu.contract_precision<fp32>} : vector<2x8xf32>, vector<8x16xf32>, vector<2x16xf32> -> vector<2x16xf32>
    %89 = arith.addf %87, %88 : vector<2x16xf32>
    %c0_48 = arith.constant 0 : index
    %c0_49 = arith.constant 0 : index
    %c0_50 = arith.constant 0 : index
    %c0_51 = arith.constant 0 : index
    %90 = vector.load %arg6[%c0_48, %c0_49, %c0_50, %c0_51] : memref<1x4x2x16xf32, #tpu.memory_space<vmem>>, vector<1x1x2x16xf32>
    %91 = vector.shape_cast %90 : vector<1x1x2x16xf32> to vector<2x16xf32>
    %92 = vector.shape_cast %89 : vector<2x16xf32> to vector<1x1x2x16xf32>
    tpu.vector_store %arg6[%c0_48, %c0_49, %c0_50, %c0_51], %92 {strides = array<i32>} : memref<1x4x2x16xf32, #tpu.memory_space<vmem>>, vector<1x1x2x16xf32>,
    %cst_52 = arith.constant dense<0.000000e+00> : vector<2x32xf32>
    %93 = tpu.matmul %85, %1, %cst_52 {dimension_numbers = #tpu.dot_dimension_numbers<[1], [0], [0], [1], [0, 0, 1, 1], [], []>, precision = #tpu.contract_precision<fp32>} : vector<2x8xf32>, vector<8x32xf32>, vector<2x32xf32> -> vector<2x32xf32>
    %94 = vector.broadcast %7 : vector<1x32xf32> to vector<2x32xf32>
    %95 = arith.addf %93, %94 : vector<2x32xf32>
    %cst_53 = arith.constant 5.000000e-01 : f32
    %96 = vector.broadcast %cst_53 : f32 to vector<2x32xf32>
    %97 = arith.mulf %96, %95 : vector<2x32xf32>
    %cst_54 = arith.constant 4.471500e-02 : f32
    %98 = vector.broadcast %cst_54 : f32 to vector<2x32xf32>
    %99 = arith.mulf %98, %95 : vector<2x32xf32>
    %100 = arith.mulf %99, %95 : vector<2x32xf32>
    %101 = arith.mulf %100, %95 : vector<2x32xf32>
    %102 = arith.addf %95, %101 : vector<2x32xf32>
    %cst_55 = arith.constant 0.797884583 : f32
    %103 = vector.broadcast %cst_55 : f32 to vector<2x32xf32>
    %104 = arith.mulf %103, %102 : vector<2x32xf32>
    %105 = math.tanh %104 : vector<2x32xf32>
    %cst_56 = arith.constant 1.000000e+00 : f32
    %106 = vector.broadcast %cst_56 : f32 to vector<2x32xf32>
    %107 = arith.addf %106, %105 : vector<2x32xf32>
    %108 = arith.mulf %97, %107 : vector<2x32xf32>
    %cst_57 = arith.constant dense<0.000000e+00> : vector<2x32xf32>
    %109 = tpu.matmul %108, %3, %cst_57 {dimension_numbers = #tpu.dot_dimension_numbers<[1], [0], [0], [1], [0, 0, 1, 1], [], []>, precision = #tpu.contract_precision<fp32>} : vector<2x32xf32>, vector<32x32xf32>, vector<2x32xf32> -> vector<2x32xf32>
    %110 = vector.broadcast %9 : vector<1x32xf32> to vector<2x32xf32>
    %111 = arith.addf %109, %110 : vector<2x32xf32>
    %cst_58 = arith.constant 5.000000e-01 : f32
    %112 = vector.broadcast %cst_58 : f32 to vector<2x32xf32>
    %113 = arith.mulf %112, %111 : vector<2x32xf32>
    %cst_59 = arith.constant 4.471500e-02 : f32
    %114 = vector.broadcast %cst_59 : f32 to vector<2x32xf32>
    %115 = arith.mulf %114, %111 : vector<2x32xf32>
    %116 = arith.mulf %115, %111 : vector<2x32xf32>
    %117 = arith.mulf %116, %111 : vector<2x32xf32>
    %118 = arith.addf %111, %117 : vector<2x32xf32>
    %cst_60 = arith.constant 0.797884583 : f32
    %119 = vector.broadcast %cst_60 : f32 to vector<2x32xf32>
    %120 = arith.mulf %119, %118 : vector<2x32xf32>
    %121 = math.tanh %120 : vector<2x32xf32>
    %cst_61 = arith.constant 1.000000e+00 : f32
    %122 = vector.broadcast %cst_61 : f32 to vector<2x32xf32>
    %123 = arith.addf %122, %121 : vector<2x32xf32>
    %124 = arith.mulf %113, %123 : vector<2x32xf32>
    %cst_62 = arith.constant dense<0.000000e+00> : vector<2x8xf32>
    %125 = tpu.matmul %124, %5, %cst_62 {dimension_numbers = #tpu.dot_dimension_numbers<[1], [0], [0], [1], [0, 0, 1, 1], [], []>, precision = #tpu.contract_precision<fp32>} : vector<2x32xf32>, vector<32x8xf32>, vector<2x8xf32> -> vector<2x8xf32>
    %126 = vector.broadcast %11 : vector<1x8xf32> to vector<2x8xf32>
    %127 = arith.addf %125, %126 : vector<2x8xf32>
    %128 = arith.addf %127, %85 : vector<2x8xf32>
    %cst_63 = arith.constant dense<0.000000e+00> : vector<2xf32>
    %129 = vector.multi_reduction <add>, %128, %cst_63 [1] : vector<2x8xf32> to vector<2xf32>
    %130 = vector.shape_cast %129 : vector<2xf32> to vector<2x1xf32>
    %cst_64 = arith.constant 8.000000e+00 : f32
    %131 = vector.broadcast %cst_64 : f32 to vector<2x1xf32>
    %132 = arith.divf %130, %131 : vector<2x1xf32>
    %133 = vector.broadcast %132 : vector<2x1xf32> to vector<2x8xf32>
    %134 = arith.subf %128, %133 : vector<2x8xf32>
    %135 = arith.mulf %134, %134 : vector<2x8xf32>
    %cst_65 = arith.constant dense<0.000000e+00> : vector<2xf32>
    %136 = vector.multi_reduction <add>, %135, %cst_65 [1] : vector<2x8xf32> to vector<2xf32>
    %137 = vector.shape_cast %136 : vector<2xf32> to vector<2x1xf32>
    %cst_66 = arith.constant 8.000000e+00 : f32
    %138 = vector.broadcast %cst_66 : f32 to vector<2x1xf32>
    %139 = arith.divf %137, %138 : vector<2x1xf32>
    %140 = vector.broadcast %132 : vector<2x1xf32> to vector<2x8xf32>
    %141 = arith.subf %128, %140 : vector<2x8xf32>
    %cst_67 = arith.constant 9.99999974E-6 : f32
    %142 = vector.broadcast %cst_67 : f32 to vector<2x1xf32>
    %143 = arith.addf %139, %142 : vector<2x1xf32>
    %144 = math.rsqrt %143 : vector<2x1xf32>
    %145 = vector.broadcast %144 : vector<2x1xf32> to vector<2x8xf32>
    %146 = arith.mulf %141, %145 : vector<2x8xf32>
    %147 = vector.broadcast %13 : vector<1x8xf32> to vector<2x8xf32>
    %148 = arith.mulf %146, %147 : vector<2x8xf32>
    %149 = vector.broadcast %15 : vector<1x8xf32> to vector<2x8xf32>
    %150 = arith.addf %148, %149 : vector<2x8xf32>
    %151 = vector.broadcast %17 : vector<1x1xf32> to vector<2x8xf32>
    %152 = arith.mulf %85, %151 : vector<2x8xf32>
    %153 = arith.addf %152, %150 : vector<2x8xf32>
    %c0_68 = arith.constant 0 : index
    %c1 = arith.constant 1 : index
    %c0_69 = arith.constant 0 : index
    %c0_70 = arith.constant 0 : index
    %154 = vector.load %arg3[%c0_68, %c1, %c0_69, %c0_70] : memref<1x4x2x8xf32, #tpu.memory_space<vmem>>, vector<1x1x2x8xf32>
    %155 = vector.shape_cast %154 : vector<1x1x2x8xf32> to vector<2x8xf32>
    %156 = arith.addf %153, %155 : vector<2x8xf32>
    %c0_71 = arith.constant 0 : index
    %c1_72 = arith.constant 1 : index
    %c0_73 = arith.constant 0 : index
    %c0_74 = arith.constant 0 : index
    %157 = vector.load %arg4[%c0_71, %c1_72, %c0_73, %c0_74] : memref<1x4x2x16xf32, #tpu.memory_space<vmem>>, vector<1x1x2x16xf32>
    %158 = vector.shape_cast %157 : vector<1x1x2x16xf32> to vector<2x16xf32>
    %cst_75 = arith.constant dense<0.000000e+00> : vector<2x16xf32>
    %159 = tpu.matmul %156, %19, %cst_75 {dimension_numbers = #tpu.dot_dimension_numbers<[1], [0], [0], [1], [0, 0, 1, 1], [], []>, precision = #tpu.contract_precision<fp32>} : vector<2x8xf32>, vector<8x16xf32>, vector<2x16xf32> -> vector<2x16xf32>
    %160 = arith.addf %158, %159 : vector<2x16xf32>
    %c0_76 = arith.constant 0 : index
    %c1_77 = arith.constant 1 : index
    %c0_78 = arith.constant 0 : index
    %c0_79 = arith.constant 0 : index
    %161 = vector.load %arg6[%c0_76, %c1_77, %c0_78, %c0_79] : memref<1x4x2x16xf32, #tpu.memory_space<vmem>>, vector<1x1x2x16xf32>
    %162 = vector.shape_cast %161 : vector<1x1x2x16xf32> to vector<2x16xf32>
    %163 = vector.shape_cast %160 : vector<2x16xf32> to vector<1x1x2x16xf32>
    tpu.vector_store %arg6[%c0_76, %c1_77, %c0_78, %c0_79], %163 {strides = array<i32>} : memref<1x4x2x16xf32, #tpu.memory_space<vmem>>, vector<1x1x2x16xf32>,
    %cst_80 = arith.constant dense<0.000000e+00> : vector<2x32xf32>
    %164 = tpu.matmul %156, %1, %cst_80 {dimension_numbers = #tpu.dot_dimension_numbers<[1], [0], [0], [1], [0, 0, 1, 1], [], []>, precision = #tpu.contract_precision<fp32>} : vector<2x8xf32>, vector<8x32xf32>, vector<2x32xf32> -> vector<2x32xf32>
    %165 = vector.broadcast %7 : vector<1x32xf32> to vector<2x32xf32>
    %166 = arith.addf %164, %165 : vector<2x32xf32>
    %cst_81 = arith.constant 5.000000e-01 : f32
    %167 = vector.broadcast %cst_81 : f32 to vector<2x32xf32>
    %168 = arith.mulf %167, %166 : vector<2x32xf32>
    %cst_82 = arith.constant 4.471500e-02 : f32
    %169 = vector.broadcast %cst_82 : f32 to vector<2x32xf32>
    %170 = arith.mulf %169, %166 : vector<2x32xf32>
    %171 = arith.mulf %170, %166 : vector<2x32xf32>
    %172 = arith.mulf %171, %166 : vector<2x32xf32>
    %173 = arith.addf %166, %172 : vector<2x32xf32>
    %cst_83 = arith.constant 0.797884583 : f32
    %174 = vector.broadcast %cst_83 : f32 to vector<2x32xf32>
    %175 = arith.mulf %174, %173 : vector<2x32xf32>
    %176 = math.tanh %175 : vector<2x32xf32>
    %cst_84 = arith.constant 1.000000e+00 : f32
    %177 = vector.broadcast %cst_84 : f32 to vector<2x32xf32>
    %178 = arith.addf %177, %176 : vector<2x32xf32>
    %179 = arith.mulf %168, %178 : vector<2x32xf32>
    %cst_85 = arith.constant dense<0.000000e+00> : vector<2x32xf32>
    %180 = tpu.matmul %179, %3, %cst_85 {dimension_numbers = #tpu.dot_dimension_numbers<[1], [0], [0], [1], [0, 0, 1, 1], [], []>, precision = #tpu.contract_precision<fp32>} : vector<2x32xf32>, vector<32x32xf32>, vector<2x32xf32> -> vector<2x32xf32>
    %181 = vector.broadcast %9 : vector<1x32xf32> to vector<2x32xf32>
    %182 = arith.addf %180, %181 : vector<2x32xf32>
    %cst_86 = arith.constant 5.000000e-01 : f32
    %183 = vector.broadcast %cst_86 : f32 to vector<2x32xf32>
    %184 = arith.mulf %183, %182 : vector<2x32xf32>
    %cst_87 = arith.constant 4.471500e-02 : f32
    %185 = vector.broadcast %cst_87 : f32 to vector<2x32xf32>
    %186 = arith.mulf %185, %182 : vector<2x32xf32>
    %187 = arith.mulf %186, %182 : vector<2x32xf32>
    %188 = arith.mulf %187, %182 : vector<2x32xf32>
    %189 = arith.addf %182, %188 : vector<2x32xf32>
    %cst_88 = arith.constant 0.797884583 : f32
    %190 = vector.broadcast %cst_88 : f32 to vector<2x32xf32>
    %191 = arith.mulf %190, %189 : vector<2x32xf32>
    %192 = math.tanh %191 : vector<2x32xf32>
    %cst_89 = arith.constant 1.000000e+00 : f32
    %193 = vector.broadcast %cst_89 : f32 to vector<2x32xf32>
    %194 = arith.addf %193, %192 : vector<2x32xf32>
    %195 = arith.mulf %184, %194 : vector<2x32xf32>
    %cst_90 = arith.constant dense<0.000000e+00> : vector<2x8xf32>
    %196 = tpu.matmul %195, %5, %cst_90 {dimension_numbers = #tpu.dot_dimension_numbers<[1], [0], [0], [1], [0, 0, 1, 1], [], []>, precision = #tpu.contract_precision<fp32>} : vector<2x32xf32>, vector<32x8xf32>, vector<2x8xf32> -> vector<2x8xf32>
    %197 = vector.broadcast %11 : vector<1x8xf32> to vector<2x8xf32>
    %198 = arith.addf %196, %197 : vector<2x8xf32>
    %199 = arith.addf %198, %156 : vector<2x8xf32>
    %cst_91 = arith.constant dense<0.000000e+00> : vector<2xf32>
    %200 = vector.multi_reduction <add>, %199, %cst_91 [1] : vector<2x8xf32> to vector<2xf32>
    %201 = vector.shape_cast %200 : vector<2xf32> to vector<2x1xf32>
    %cst_92 = arith.constant 8.000000e+00 : f32
    %202 = vector.broadcast %cst_92 : f32 to vector<2x1xf32>
    %203 = arith.divf %201, %202 : vector<2x1xf32>
    %204 = vector.broadcast %203 : vector<2x1xf32> to vector<2x8xf32>
    %205 = arith.subf %199, %204 : vector<2x8xf32>
    %206 = arith.mulf %205, %205 : vector<2x8xf32>
    %cst_93 = arith.constant dense<0.000000e+00> : vector<2xf32>
    %207 = vector.multi_reduction <add>, %206, %cst_93 [1] : vector<2x8xf32> to vector<2xf32>
    %208 = vector.shape_cast %207 : vector<2xf32> to vector<2x1xf32>
    %cst_94 = arith.constant 8.000000e+00 : f32
    %209 = vector.broadcast %cst_94 : f32 to vector<2x1xf32>
    %210 = arith.divf %208, %209 : vector<2x1xf32>
    %211 = vector.broadcast %203 : vector<2x1xf32> to vector<2x8xf32>
    %212 = arith.subf %199, %211 : vector<2x8xf32>
    %cst_95 = arith.constant 9.99999974E-6 : f32
    %213 = vector.broadcast %cst_95 : f32 to vector<2x1xf32>
    %214 = arith.addf %210, %213 : vector<2x1xf32>
    %215 = math.rsqrt %214 : vector<2x1xf32>
    %216 = vector.broadcast %215 : vector<2x1xf32> to vector<2x8xf32>
    %217 = arith.mulf %212, %216 : vector<2x8xf32>
    %218 = vector.broadcast %13 : vector<1x8xf32> to vector<2x8xf32>
    %219 = arith.mulf %217, %218 : vector<2x8xf32>
    %220 = vector.broadcast %15 : vector<1x8xf32> to vector<2x8xf32>
    %221 = arith.addf %219, %220 : vector<2x8xf32>
    %222 = vector.broadcast %17 : vector<1x1xf32> to vector<2x8xf32>
    %223 = arith.mulf %156, %222 : vector<2x8xf32>
    %224 = arith.addf %223, %221 : vector<2x8xf32>
    %c0_96 = arith.constant 0 : index
    %c2 = arith.constant 2 : index
    %c0_97 = arith.constant 0 : index
    %c0_98 = arith.constant 0 : index
    %225 = vector.load %arg3[%c0_96, %c2, %c0_97, %c0_98] : memref<1x4x2x8xf32, #tpu.memory_space<vmem>>, vector<1x1x2x8xf32>
    %226 = vector.shape_cast %225 : vector<1x1x2x8xf32> to vector<2x8xf32>
    %227 = arith.addf %224, %226 : vector<2x8xf32>
    %c0_99 = arith.constant 0 : index
    %c2_100 = arith.constant 2 : index
    %c0_101 = arith.constant 0 : index
    %c0_102 = arith.constant 0 : index
    %228 = vector.load %arg4[%c0_99, %c2_100, %c0_101, %c0_102] : memref<1x4x2x16xf32, #tpu.memory_space<vmem>>, vector<1x1x2x16xf32>
    %229 = vector.shape_cast %228 : vector<1x1x2x16xf32> to vector<2x16xf32>
    %cst_103 = arith.constant dense<0.000000e+00> : vector<2x16xf32>
    %230 = tpu.matmul %227, %19, %cst_103 {dimension_numbers = #tpu.dot_dimension_numbers<[1], [0], [0], [1], [0, 0, 1, 1], [], []>, precision = #tpu.contract_precision<fp32>} : vector<2x8xf32>, vector<8x16xf32>, vector<2x16xf32> -> vector<2x16xf32>
    %231 = arith.addf %229, %230 : vector<2x16xf32>
    %c0_104 = arith.constant 0 : index
    %c2_105 = arith.constant 2 : index
    %c0_106 = arith.constant 0 : index
    %c0_107 = arith.constant 0 : index
    %232 = vector.load %arg6[%c0_104, %c2_105, %c0_106, %c0_107] : memref<1x4x2x16xf32, #tpu.memory_space<vmem>>, vector<1x1x2x16xf32>
    %233 = vector.shape_cast %232 : vector<1x1x2x16xf32> to vector<2x16xf32>
    %234 = vector.shape_cast %231 : vector<2x16xf32> to vector<1x1x2x16xf32>
    tpu.vector_store %arg6[%c0_104, %c2_105, %c0_106, %c0_107], %234 {strides = array<i32>} : memref<1x4x2x16xf32, #tpu.memory_space<vmem>>, vector<1x1x2x16xf32>,
    %cst_108 = arith.constant dense<0.000000e+00> : vector<2x32xf32>
    %235 = tpu.matmul %227, %1, %cst_108 {dimension_numbers = #tpu.dot_dimension_numbers<[1], [0], [0], [1], [0, 0, 1, 1], [], []>, precision = #tpu.contract_precision<fp32>} : vector<2x8xf32>, vector<8x32xf32>, vector<2x32xf32> -> vector<2x32xf32>
    %236 = vector.broadcast %7 : vector<1x32xf32> to vector<2x32xf32>
    %237 = arith.addf %235, %236 : vector<2x32xf32>
    %cst_109 = arith.constant 5.000000e-01 : f32
    %238 = vector.broadcast %cst_109 : f32 to vector<2x32xf32>
    %239 = arith.mulf %238, %237 : vector<2x32xf32>
    %cst_110 = arith.constant 4.471500e-02 : f32
    %240 = vector.broadcast %cst_110 : f32 to vector<2x32xf32>
    %241 = arith.mulf %240, %237 : vector<2x32xf32>
    %242 = arith.mulf %241, %237 : vector<2x32xf32>
    %243 = arith.mulf %242, %237 : vector<2x32xf32>
    %244 = arith.addf %237, %243 : vector<2x32xf32>
    %cst_111 = arith.constant 0.797884583 : f32
    %245 = vector.broadcast %cst_111 : f32 to vector<2x32xf32>
    %246 = arith.mulf %245, %244 : vector<2x32xf32>
    %247 = math.tanh %246 : vector<2x32xf32>
    %cst_112 = arith.constant 1.000000e+00 : f32
    %248 = vector.broadcast %cst_112 : f32 to vector<2x32xf32>
    %249 = arith.addf %248, %247 : vector<2x32xf32>
    %250 = arith.mulf %239, %249 : vector<2x32xf32>
    %cst_113 = arith.constant dense<0.000000e+00> : vector<2x32xf32>
    %251 = tpu.matmul %250, %3, %cst_113 {dimension_numbers = #tpu.dot_dimension_numbers<[1], [0], [0], [1], [0, 0, 1, 1], [], []>, precision = #tpu.contract_precision<fp32>} : vector<2x32xf32>, vector<32x32xf32>, vector<2x32xf32> -> vector<2x32xf32>
    %252 = vector.broadcast %9 : vector<1x32xf32> to vector<2x32xf32>
    %253 = arith.addf %251, %252 : vector<2x32xf32>
    %cst_114 = arith.constant 5.000000e-01 : f32
    %254 = vector.broadcast %cst_114 : f32 to vector<2x32xf32>
    %255 = arith.mulf %254, %253 : vector<2x32xf32>
    %cst_115 = arith.constant 4.471500e-02 : f32
    %256 = vector.broadcast %cst_115 : f32 to vector<2x32xf32>
    %257 = arith.mulf %256, %253 : vector<2x32xf32>
    %258 = arith.mulf %257, %253 : vector<2x32xf32>
    %259 = arith.mulf %258, %253 : vector<2x32xf32>
    %260 = arith.addf %253, %259 : vector<2x32xf32>
    %cst_116 = arith.constant 0.797884583 : f32
    %261 = vector.broadcast %cst_116 : f32 to vector<2x32xf32>
    %262 = arith.mulf %261, %260 : vector<2x32xf32>
    %263 = math.tanh %262 : vector<2x32xf32>
    %cst_117 = arith.constant 1.000000e+00 : f32
    %264 = vector.broadcast %cst_117 : f32 to vector<2x32xf32>
    %265 = arith.addf %264, %263 : vector<2x32xf32>
    %266 = arith.mulf %255, %265 : vector<2x32xf32>
    %cst_118 = arith.constant dense<0.000000e+00> : vector<2x8xf32>
    %267 = tpu.matmul %266, %5, %cst_118 {dimension_numbers = #tpu.dot_dimension_numbers<[1], [0], [0], [1], [0, 0, 1, 1], [], []>, precision = #tpu.contract_precision<fp32>} : vector<2x32xf32>, vector<32x8xf32>, vector<2x8xf32> -> vector<2x8xf32>
    %268 = vector.broadcast %11 : vector<1x8xf32> to vector<2x8xf32>
    %269 = arith.addf %267, %268 : vector<2x8xf32>
    %270 = arith.addf %269, %227 : vector<2x8xf32>
    %cst_119 = arith.constant dense<0.000000e+00> : vector<2xf32>
    %271 = vector.multi_reduction <add>, %270, %cst_119 [1] : vector<2x8xf32> to vector<2xf32>
    %272 = vector.shape_cast %271 : vector<2xf32> to vector<2x1xf32>
    %cst_120 = arith.constant 8.000000e+00 : f32
    %273 = vector.broadcast %cst_120 : f32 to vector<2x1xf32>
    %274 = arith.divf %272, %273 : vector<2x1xf32>
    %275 = vector.broadcast %274 : vector<2x1xf32> to vector<2x8xf32>
    %276 = arith.subf %270, %275 : vector<2x8xf32>
    %277 = arith.mulf %276, %276 : vector<2x8xf32>
    %cst_121 = arith.constant dense<0.000000e+00> : vector<2xf32>
    %278 = vector.multi_reduction <add>, %277, %cst_121 [1] : vector<2x8xf32> to vector<2xf32>
    %279 = vector.shape_cast %278 : vector<2xf32> to vector<2x1xf32>
    %cst_122 = arith.constant 8.000000e+00 : f32
    %280 = vector.broadcast %cst_122 : f32 to vector<2x1xf32>
    %281 = arith.divf %279, %280 : vector<2x1xf32>
    %282 = vector.broadcast %274 : vector<2x1xf32> to vector<2x8xf32>
    %283 = arith.subf %270, %282 : vector<2x8xf32>
    %cst_123 = arith.constant 9.99999974E-6 : f32
    %284 = vector.broadcast %cst_123 : f32 to vector<2x1xf32>
    %285 = arith.addf %281, %284 : vector<2x1xf32>
    %286 = math.rsqrt %285 : vector<2x1xf32>
    %287 = vector.broadcast %286 : vector<2x1xf32> to vector<2x8xf32>
    %288 = arith.mulf %283, %287 : vector<2x8xf32>
    %289 = vector.broadcast %13 : vector<1x8xf32> to vector<2x8xf32>
    %290 = arith.mulf %288, %289 : vector<2x8xf32>
    %291 = vector.broadcast %15 : vector<1x8xf32> to vector<2x8xf32>
    %292 = arith.addf %290, %291 : vector<2x8xf32>
    %293 = vector.broadcast %17 : vector<1x1xf32> to vector<2x8xf32>
    %294 = arith.mulf %227, %293 : vector<2x8xf32>
    %295 = arith.addf %294, %292 : vector<2x8xf32>
    %c0_124 = arith.constant 0 : index
    %c3 = arith.constant 3 : index
    %c0_125 = arith.constant 0 : index
    %c0_126 = arith.constant 0 : index
    %296 = vector.load %arg3[%c0_124, %c3, %c0_125, %c0_126] : memref<1x4x2x8xf32, #tpu.memory_space<vmem>>, vector<1x1x2x8xf32>
    %297 = vector.shape_cast %296 : vector<1x1x2x8xf32> to vector<2x8xf32>
    %298 = arith.addf %295, %297 : vector<2x8xf32>
    %c0_127 = arith.constant 0 : index
    %c3_128 = arith.constant 3 : index
    %c0_129 = arith.constant 0 : index
    %c0_130 = arith.constant 0 : index
    %299 = vector.load %arg4[%c0_127, %c3_128, %c0_129, %c0_130] : memref<1x4x2x16xf32, #tpu.memory_space<vmem>>, vector<1x1x2x16xf32>
    %300 = vector.shape_cast %299 : vector<1x1x2x16xf32> to vector<2x16xf32>
    %cst_131 = arith.constant dense<0.000000e+00> : vector<2x16xf32>
    %301 = tpu.matmul %298, %19, %cst_131 {dimension_numbers = #tpu.dot_dimension_numbers<[1], [0], [0], [1], [0, 0, 1, 1], [], []>, precision = #tpu.contract_precision<fp32>} : vector<2x8xf32>, vector<8x16xf32>, vector<2x16xf32> -> vector<2x16xf32>
    %302 = arith.addf %300, %301 : vector<2x16xf32>
    %c0_132 = arith.constant 0 : index
    %c3_133 = arith.constant 3 : index
    %c0_134 = arith.constant 0 : index
    %c0_135 = arith.constant 0 : index
    %303 = vector.load %arg6[%c0_132, %c3_133, %c0_134, %c0_135] : memref<1x4x2x16xf32, #tpu.memory_space<vmem>>, vector<1x1x2x16xf32>
    %304 = vector.shape_cast %303 : vector<1x1x2x16xf32> to vector<2x16xf32>
    %305 = vector.shape_cast %302 : vector<2x16xf32> to vector<1x1x2x16xf32>
    tpu.vector_store %arg6[%c0_132, %c3_133, %c0_134, %c0_135], %305 {strides = array<i32>} : memref<1x4x2x16xf32, #tpu.memory_space<vmem>>, vector<1x1x2x16xf32>,
    return
  }
  func.func @transform_0(%arg0: i32) -> (i32, i32, i32) {
    %c0_i32 = arith.constant 0 : i32
    %c0_i32_0 = arith.constant 0 : i32
    %c0_i32_1 = arith.constant 0 : i32
    return %arg0, %c0_i32, %c0_i32_0 : i32, i32, i32
  }
  func.func @transform_1(%arg0: i32) -> (i32, i32, i32) {
    %c0_i32 = arith.constant 0 : i32
    %c0_i32_0 = arith.constant 0 : i32
    %c0_i32_1 = arith.constant 0 : i32
    return %arg0, %c0_i32, %c0_i32_0 : i32, i32, i32
  }
  func.func @transform_2(%arg0: i32) -> (i32, i32, i32, i32) {
    %c0_i32 = arith.constant 0 : i32
    %c0_i32_0 = arith.constant 0 : i32
    %c0_i32_1 = arith.constant 0 : i32
    %c0_i32_2 = arith.constant 0 : i32
    return %arg0, %c0_i32, %c0_i32_0, %c0_i32_1 : i32, i32, i32, i32
  }
  func.func @transform_3(%arg0: i32) -> (i32, i32, i32, i32) {
    %c0_i32 = arith.constant 0 : i32
    %c0_i32_0 = arith.constant 0 : i32
    %c0_i32_1 = arith.constant 0 : i32
    %c0_i32_2 = arith.constant 0 : i32
    return %arg0, %c0_i32, %c0_i32_0, %c0_i32_1 : i32, i32, i32, i32
  }
  func.func @transform_4(%arg0: i32) -> (i32, i32, i32) {
    %c0_i32 = arith.constant 0 : i32
    %c0_i32_0 = arith.constant 0 : i32
    %c0_i32_1 = arith.constant 0 : i32
    return %arg0, %c0_i32, %c0_i32_0 : i32, i32, i32
  }
  func.func @transform_5(%arg0: i32) -> (i32, i32, i32, i32) {
    %c0_i32 = arith.constant 0 : i32
    %c0_i32_0 = arith.constant 0 : i32
    %c0_i32_1 = arith.constant 0 : i32
    %c0_i32_2 = arith.constant 0 : i32
    return %arg0, %c0_i32, %c0_i32_0, %c0_i32_1 : i32, i32, i32, i32
  }
}

</mosaic_0001>

<llo_original>
// kernel: multivar_attention_rom_forward.1
$region0: #{multivar_attention_rom_forward.1}
  #allocation0 [shape = 'u32[]', space=smem, size = 0x4, offset = 0x4, fixed_abs, tag = 'smem constant byte address 0x4 - core index']
  #allocation1 [shape = 'u32[72,128]{1,0:T(1,128)}', space=vmem, size = 0x9000, scoped, tag = 'internal scratch']
  %s0 = inlined_call_operand.vmem [shape: f32[2,2,8], index: 0, kind: input, shape index: {}]
  %s1 = inlined_call_operand.vmem [shape: f32[2,8,16], index: 1, kind: input, shape index: {}]
  %s2 = inlined_call_operand.vmem [shape: f32[2,4,2,8], index: 2, kind: input, shape index: {}]
  %s3 = inlined_call_operand.vmem [shape: f32[2,4,2,16], index: 3, kind: input, shape index: {}]
  %s4 = inlined_call_operand.vmem [shape: f32[2,120,32], index: 4, kind: input, shape index: {}]
  %s5 = inlined_call_operand.vmem [shape: f32[2,4,2,16], index: 5, kind: output, shape index: {}]
  %s6 = sld [smem:[#allocation0]]
  $region53: #{multivar_attention_rom_forward.1} parent=0
    _
  %s8 = ssub.s32 1, %s6
  %s9 = scalar_select 0, %s8, %s6
  loop: start=0, step=1, limit=4
  $region2: #{multivar_attention_rom_forward.1} parent=0 // loop_pre_header
    _
  $region3: #{multivar_attention_rom_forward.1} parent=0 // loop_header
    %s11 = sphi 0, %s15
    %p12 = scmp.ge.s32.totalorder %s11, 4
    %s21 = sphi 0, %s23
    %s24 = sphi 0, %s21
    %s25 = sphi 0, %s24
    %s41 = sphi 0, %s25
    %s47 = sphi 0, %s49
    %s50 = sphi 0, %s47
    %s51 = sphi 0, %s50
    %s67 = sphi 0, %s51
    %s73 = sphi 0, %s75
    %s76 = sphi 0, %s73
    %s77 = sphi 0, %s76
    %s93 = sphi 0, %s77
    %s99 = sphi 0, %s101
    %s102 = sphi 0, %s99
    %s103 = sphi 0, %s102
    %s119 = sphi 0, %s103
    %s125 = sphi 0, %s127
    %s128 = sphi 0, %s125
    %s129 = sphi 0, %s128
    %s145 = sphi 0, %s129
    %s151 = sphi 0, %s153
    %s154 = sphi 0, %s151
    %s155 = sphi 0, %s154
    %s171 = sphi 0, %s155
  $region4: #{multivar_attention_rom_forward.1} parent=0 // loop_header_branch
    %14 = sbr.rel (%p12) target = $region8
  $region5: #{multivar_attention_rom_forward.1} parent=0 // loop_body
    %s16 = ssub.s32 %s11, 1
    %s17 = ssub.s32 %s11, 2
    %s18 = sadd.s32 %s11, 1
    %s19 = ssub.s32 %s11, %s18
    %p20 = scmp.eq.s32.totalorder %s19, 0
    %s22 = sadd.s32 %s21, 1
    %s23 = scalar_select %p20, %s21, %s22
    %p26 = pneg %p20
    %p27 = scmp.eq.s32.totalorder %s11, 1
    %p28 = por %p26, %p27
    %p29 = scmp.ne.s32.totalorder %s21, %s24
    %p30 = scmp.eq.s32.totalorder %s11, 0
    %p31 = por %p29, %p30
    %p32 = scmp.ne.s32.totalorder %s21, %s24
    %p33 = scmp.eq.s32.totalorder %s16, 1
    %p34 = por %p32, %p33
    %p35 = scmp.ne.s32.totalorder %s24, %s25
    %p36 = scmp.eq.s32.totalorder %s16, 0
    %p37 = por %p35, %p36
    %p38 = scmp.ne.s32.totalorder %s24, %s25
    %p39 = scmp.eq.s32.totalorder %s17, 1
    %p40 = por %p38, %p39
    %p42 = scmp.ne.s32.totalorder %s25, %s41
    %p43 = scmp.eq.s32.totalorder %s17, 0
    %p44 = por %p42, %p43
    %s45 = ssub.s32 %s11, %s18
    %p46 = scmp.eq.s32.totalorder %s45, 0
    %s48 = sadd.s32 %s47, 1
    %s49 = scalar_select %p46, %s47, %s48
    %p52 = pneg %p46
    %p53 = scmp.eq.s32.totalorder %s11, 1
    %p54 = por %p52, %p53
    %p55 = scmp.ne.s32.totalorder %s47, %s50
    %p56 = scmp.eq.s32.totalorder %s11, 0
    %p57 = por %p55, %p56
    %p58 = scmp.ne.s32.totalorder %s47, %s50
    %p59 = scmp.eq.s32.totalorder %s16, 1
    %p60 = por %p58, %p59
    %p61 = scmp.ne.s32.totalorder %s50, %s51
    %p62 = scmp.eq.s32.totalorder %s16, 0
    %p63 = por %p61, %p62
    %p64 = scmp.ne.s32.totalorder %s50, %s51
    %p65 = scmp.eq.s32.totalorder %s17, 1
    %p66 = por %p64, %p65
    %p68 = scmp.ne.s32.totalorder %s51, %s67
    %p69 = scmp.eq.s32.totalorder %s17, 0
    %p70 = por %p68, %p69
    %s71 = ssub.s32 %s11, %s18
    %p72 = scmp.eq.s32.totalorder %s71, 0
    %s74 = sadd.s32 %s73, 1
    %s75 = scalar_select %p72, %s73, %s74
    %p78 = pneg %p72
    %p79 = scmp.eq.s32.totalorder %s11, 1
    %p80 = por %p78, %p79
    %p81 = scmp.ne.s32.totalorder %s73, %s76
    %p82 = scmp.eq.s32.totalorder %s11, 0
    %p83 = por %p81, %p82
    %p84 = scmp.ne.s32.totalorder %s73, %s76
    %p85 = scmp.eq.s32.totalorder %s16, 1
    %p86 = por %p84, %p85
    %p87 = scmp.ne.s32.totalorder %s76, %s77
    %p88 = scmp.eq.s32.totalorder %s16, 0
    %p89 = por %p87, %p88
    %p90 = scmp.ne.s32.totalorder %s76, %s77
    %p91 = scmp.eq.s32.totalorder %s17, 1
    %p92 = por %p90, %p91
    %p94 = scmp.ne.s32.totalorder %s77, %s93
    %p95 = scmp.eq.s32.totalorder %s17, 0
    %p96 = por %p94, %p95
    %s97 = ssub.s32 %s11, %s18
    %p98 = scmp.eq.s32.totalorder %s97, 0
    %s100 = sadd.s32 %s99, 1
    %s101 = scalar_select %p98, %s99, %s100
    %p104 = pneg %p98
    %p105 = scmp.eq.s32.totalorder %s11, 1
    %p106 = por %p104, %p105
    %p107 = scmp.ne.s32.totalorder %s99, %s102
    %p108 = scmp.eq.s32.totalorder %s11, 0
    %p109 = por %p107, %p108
    %p110 = scmp.ne.s32.totalorder %s99, %s102
    %p111 = scmp.eq.s32.totalorder %s16, 1
    %p112 = por %p110, %p111
    %p113 = scmp.ne.s32.totalorder %s102, %s103
    %p114 = scmp.eq.s32.totalorder %s16, 0
    %p115 = por %p113, %p114
    %p116 = scmp.ne.s32.totalorder %s102, %s103
    %p117 = scmp.eq.s32.totalorder %s17, 1
    %p118 = por %p116, %p117
    %p120 = scmp.ne.s32.totalorder %s103, %s119
    %p121 = scmp.eq.s32.totalorder %s17, 0
    %p122 = por %p120, %p121
    %s123 = ssub.s32 %s11, %s18
    %p124 = scmp.eq.s32.totalorder %s123, 0
    %s126 = sadd.s32 %s125, 1
    %s127 = scalar_select %p124, %s125, %s126
    %p130 = pneg %p124
    %p131 = scmp.eq.s32.totalorder %s11, 1
    %p132 = por %p130, %p131
    %p133 = scmp.ne.s32.totalorder %s125, %s128
    %p134 = scmp.eq.s32.totalorder %s11, 0
    %p135 = por %p133, %p134
    %p136 = scmp.ne.s32.totalorder %s125, %s128
    %p137 = scmp.eq.s32.totalorder %s16, 1
    %p138 = por %p136, %p137
    %p139 = scmp.ne.s32.totalorder %s128, %s129
    %p140 = scmp.eq.s32.totalorder %s16, 0
    %p141 = por %p139, %p140
    %p142 = scmp.ne.s32.totalorder %s128, %s129
    %p143 = scmp.eq.s32.totalorder %s17, 1
    %p144 = por %p142, %p143
    %p146 = scmp.ne.s32.totalorder %s129, %s145
    %p147 = scmp.eq.s32.totalorder %s17, 0
    %p148 = por %p146, %p147
    %s149 = ssub.s32 %s11, %s18
    %p150 = scmp.eq.s32.totalorder %s149, 0
    %s152 = sadd.s32 %s151, 1
    %s153 = scalar_select %p150, %s151, %s152
    %p156 = pneg %p150
    %p157 = scmp.eq.s32.totalorder %s11, 1
    %p158 = por %p156, %p157
    %p159 = scmp.ne.s32.totalorder %s151, %s154
    %p160 = scmp.eq.s32.totalorder %s11, 0
    %p161 = por %p159, %p160
    %p162 = scmp.ne.s32.totalorder %s151, %s154
    %p163 = scmp.eq.s32.totalorder %s16, 1
    %p164 = por %p162, %p163
    %p165 = scmp.ne.s32.totalorder %s154, %s155
    %p166 = scmp.eq.s32.totalorder %s16, 0
    %p167 = por %p165, %p166
    %p168 = scmp.ne.s32.totalorder %s154, %s155
    %p169 = scmp.eq.s32.totalorder %s17, 1
    %p170 = por %p168, %p169
    %p172 = scmp.ne.s32.totalorder %s155, %s171
    %p173 = scmp.eq.s32.totalorder %s17, 0
    %p174 = por %p172, %p173
    %p175 = scmp.le.s32.totalorder 1, %s11
    %p176 = scmp.lt.s32.totalorder %s11, 3
    %p177 = pnand %p175, %p176
    %p178 = pneg %p177
    // Predicated region
    $region9: #{multivar_attention_rom_forward.1} parent=5 // pred_check
      _
    $region10: #{multivar_attention_rom_forward.1} parent=5 // pred_check_branch
      %180 = sbr.rel (%p177) target = $region12
    $region11: #{multivar_attention_rom_forward.1} parent=5 // pred_region
      %s181 = ssub.s32 %s11, 1
    $region12: #{multivar_attention_rom_forward.1} parent=5 // pred_fallthru
      _
    %p182 = scmp.lt.s32.totalorder %s11, 2
    // Predicated region
    $region13: #{multivar_attention_rom_forward.1} parent=5 // pred_check
      %p183 = pneg %p182
    $region14: #{multivar_attention_rom_forward.1} parent=5 // pred_check_branch
      %185 = sbr.rel (%p183) target = $region16
    $region15: #{multivar_attention_rom_forward.1} parent=5 // pred_region
      // Predicated region
      $region17: #{multivar_attention_rom_forward.1} parent=15 // pred_check
        %p186 = pneg %p31
      $region18: #{multivar_attention_rom_forward.1} parent=15 // pred_check_branch
        %188 = sbr.rel (%p186) target = $region20
      $region19: #{multivar_attention_rom_forward.1} parent=15 // pred_region
        %p189 = scmp.lt.s32.totalorder %s11, 1
        %s190 = scalar_select %p189, %s11, 1
        %s191 = smul.addr %s190, 2
        %s192 = scalar_lea.vmem %s0, %s191
      $region20: #{multivar_attention_rom_forward.1} parent=15 // pred_fallthru
        _
      // Predicated region
      $region21: #{multivar_attention_rom_forward.1} parent=15 // pred_check
        %p193 = pneg %p57
      $region22: #{multivar_attention_rom_forward.1} parent=15 // pred_check_branch
        %195 = sbr.rel (%p193) target = $region24
      $region23: #{multivar_attention_rom_forward.1} parent=15 // pred_region
        %p196 = scmp.lt.s32.totalorder %s11, 1
        %s197 = scalar_select %p196, %s11, 1
        %s198 = smul.addr %s197, 8
        %s199 = scalar_lea.vmem %s1, %s198
      $region24: #{multivar_attention_rom_forward.1} parent=15 // pred_fallthru
        _
      // Predicated region
      $region25: #{multivar_attention_rom_forward.1} parent=15 // pred_check
        %p200 = pneg %p83
      $region26: #{multivar_attention_rom_forward.1} parent=15 // pred_check_branch
        %202 = sbr.rel (%p200) target = $region28
      $region27: #{multivar_attention_rom_forward.1} parent=15 // pred_region
        %p203 = scmp.lt.s32.totalorder %s11, 1
        %s204 = scalar_select %p203, %s11, 1
        %s205 = smul.addr %s204, 4
        %s206 = smul.addr %s205, 2
        %s207 = scalar_lea.vmem %s2, %s206
      $region28: #{multivar_attention_rom_forward.1} parent=15 // pred_fallthru
        _
      // Predicated region
      $region29: #{multivar_attention_rom_forward.1} parent=15 // pred_check
        %p208 = pneg %p109
      $region30: #{multivar_attention_rom_forward.1} parent=15 // pred_check_branch
        %210 = sbr.rel (%p208) target = $region32
      $region31: #{multivar_attention_rom_forward.1} parent=15 // pred_region
        %p211 = scmp.lt.s32.totalorder %s11, 1
        %s212 = scalar_select %p211, %s11, 1
        %s213 = smul.addr %s212, 4
        %s214 = smul.addr %s213, 2
        %s215 = scalar_lea.vmem %s3, %s214
      $region32: #{multivar_attention_rom_forward.1} parent=15 // pred_fallthru
        _
      // Predicated region
      $region33: #{multivar_attention_rom_forward.1} parent=15 // pred_check
        %p216 = pneg %p135
      $region34: #{multivar_attention_rom_forward.1} parent=15 // pred_check_branch
        %218 = sbr.rel (%p216) target = $region36
      $region35: #{multivar_attention_rom_forward.1} parent=15 // pred_region
        %p219 = scmp.lt.s32.totalorder %s11, 1
        %s220 = scalar_select %p219, %s11, 1
        %s221 = smul.addr %s220, 15
        %s222 = smul.addr %s221, 8
        %s223 = scalar_lea.vmem %s4, %s222
      $region36: #{multivar_attention_rom_forward.1} parent=15 // pred_fallthru
        _
    $region16: #{multivar_attention_rom_forward.1} parent=5 // pred_fallthru
      _
    %p224 = scmp.le.s32.totalorder 1, %s11
    %p225 = scmp.lt.s32.totalorder %s11, 3
    %p226 = pnand %p224, %p225
    %p227 = pneg %p226
    // Predicated region
    $region37: #{multivar_attention_rom_forward.1} parent=5 // pred_check
      _
    $region38: #{multivar_attention_rom_forward.1} parent=5 // pred_check_branch
      %229 = sbr.rel (%p226) target = $region40
    $region39: #{multivar_attention_rom_forward.1} parent=5 // pred_region
      %s230 = ssub.s32 %s11, 1
      %p231 = scmp.lt.s32.totalorder %s16, 1
      %s232 = scalar_select %p231, %s16, 1
      %s233 = smul.addr %s232, 2
      %s234 = scalar_lea.vmem %s0, %s233
      %p235 = pneg %p37
      %p236 = pneg %p34
      %p237 = scmp.lt.s32.totalorder %s16, 1
      %s238 = scalar_select %p237, %s16, 1
      %s239 = smul.addr %s238, 8
      %s240 = scalar_lea.vmem %s1, %s239
      %p241 = pneg %p63
      %p242 = pneg %p60
      %p243 = scmp.lt.s32.totalorder %s16, 1
      %s244 = scalar_select %p243, %s16, 1
      %s245 = smul.addr %s244, 4
      %s246 = smul.addr %s245, 2
      %s247 = scalar_lea.vmem %s2, %s246
      %p248 = pneg %p89
      %p249 = pneg %p86
      %p250 = scmp.lt.s32.totalorder %s16, 1
      %s251 = scalar_select %p250, %s16, 1
      %s252 = smul.addr %s251, 4
      %s253 = smul.addr %s252, 2
      %s254 = scalar_lea.vmem %s3, %s253
      %p255 = pneg %p115
      %p256 = pneg %p112
      %p257 = scmp.lt.s32.totalorder %s16, 1
      %s258 = scalar_select %p257, %s16, 1
      %s259 = smul.addr %s258, 15
      %s260 = smul.addr %s259, 8
      %s261 = scalar_lea.vmem %s4, %s260
      %p262 = pneg %p141
      %p263 = pneg %p138
      %p264 = pneg %p167
      %p265 = pneg %p164
      %p266 = scmp.lt.s32.totalorder %s16, 1
      %s267 = scalar_select %p266, %s16, 1
      %s268 = smul.addr %s267, 4
      %s269 = smul.addr %s268, 2
      %s270 = scalar_lea.vmem %s5, %s269
      %p271 = scmp.lt.s32.totalorder %s16, 1
      %s272 = scalar_select %p271, %s16, 1
      %s273 = smul.addr %s272, 2
      %s274 = scalar_lea.vmem %s0, %s273
      %p275 = scmp.lt.s32.totalorder %s16, 1
      %s276 = scalar_select %p275, %s16, 1
      %s277 = smul.addr %s276, 8
      %s278 = scalar_lea.vmem %s1, %s277
      %p279 = scmp.lt.s32.totalorder %s16, 1
      %s280 = scalar_select %p279, %s16, 1
      %s281 = smul.addr %s280, 4
      %s282 = smul.addr %s281, 2
      %s283 = scalar_lea.vmem %s2, %s282
      %p284 = scmp.lt.s32.totalorder %s16, 1
      %s285 = scalar_select %p284, %s16, 1
      %s286 = smul.addr %s285, 4
      %s287 = smul.addr %s286, 2
      %s288 = scalar_lea.vmem %s3, %s287
      %p289 = scmp.lt.s32.totalorder %s16, 1
      %s290 = scalar_select %p289, %s16, 1
      %s291 = smul.addr %s290, 15
      %s292 = smul.addr %s291, 8
      %s293 = scalar_lea.vmem %s4, %s292
      %p294 = scmp.lt.s32.totalorder %s16, 1
      %s295 = scalar_select %p294, %s16, 1
      %s296 = smul.addr %s295, 4
      %s297 = smul.addr %s296, 2
      %s298 = scalar_lea.vmem %s5, %s297
      %v299 = vld [vmem:[%s293] sm:$0xff]
      %v300 = vld [vmem:[%s293 + $0x8] sm:$0xff]
      %v301 = vld [vmem:[%s293 + $0x10] sm:$0xff]
      %v302 = vld [vmem:[%s293 + $0x18] sm:$0xff]
      %v303 = vld [vmem:[%s293 + $0x20] sm:$0xff]
      %v304 = vld [vmem:[%s293 + $0x28] sm:$0xff]
      %v305 = vld [vmem:[%s293 + $0x30] sm:$0xff]
      %v306 = vld [vmem:[%s293 + $0x38] sm:$0xff]
      %v307 = vld [vmem:[%s293 + $0x40] sm:$0xff]
      %v308 = vld [vmem:[%s293 + $0x48] sm:$0x1]
      %v309 = vld [vmem:[%s293 + $0x50] sm:$0x1]
      %v310 = vld [vmem:[%s293 + $0x58] sm:$0x1]
      %v311 = vld [vmem:[%s293 + $0x60] sm:$0x1]
      %v312 = vld [vmem:[%s293 + $0x68] sm:$0x1]
      %v313 = vld [vmem:[%s293 + $0x70] sm:$0x1]
      %v314 = vld [vmem:[%s278] sm:$0xff]
      %v315 = vld [vmem:[%s274] sm:$0x3]
      %v316 = vperm.slane %v308, 0
      %vm317 = vcmask 64512
      %v319 = vsel %vm317, %v315, 0
      %321 = vmatpush.msra.mxu0 0.0
      %322 = vmatpush.msra.mxu0 0.0
      %323 = vmatpush.msra.mxu0 0.0
      %324 = vmatpush.msra.mxu0 0.0
      %325 = vmatpush.msra.mxu0 0.0
      %326 = vmatpush.msra.mxu0 0.0
      %327 = vmatpush.msra.mxu0 0.0
      %328 = vmatpush.msra.mxu0 0.0
      %329 = vmatpush.msra.mxu0 0.0
      %330 = vmatpush.msra.mxu0 0.0
      %331 = vmatpush.msra.mxu0 0.0
      %332 = vmatpush.msra.mxu0 0.0
      %333 = vmatpush.msra.mxu0 0.0
      %334 = vmatpush.msra.mxu0 0.0
      %335 = vmatpush.msra.mxu0 0.0
      %v336 = vand.u32 %v299, 4294901760
      %337 = vmatpush.msra.mxu0 %v336
      %v338 = vand.u32 %v319, 4294901760
      %v339 = vsub.f32 %v319, %v338
      %v340 = vand.u32 %v339, 4294901760
      %v341 = vsub.f32 %v339, %v340
      %v342 = vand.u32 %v341, 4294901760
      %343 = vmatmul.f32.gmra.mxu0 %v342
      %v344 = vpop.f32.mrf.mxu0
      %v345 = vadd.f32 %v316, %v344
      %346 = vdwg.mxu0
      %347 = vmatpush.msra.mxu0 0.0
      %348 = vmatpush.msra.mxu0 0.0
      %349 = vmatpush.msra.mxu0 0.0
      %350 = vmatpush.msra.mxu0 0.0
      %351 = vmatpush.msra.mxu0 0.0
      %352 = vmatpush.msra.mxu0 0.0
      %353 = vmatpush.msra.mxu0 0.0
      %354 = vmatpush.msra.mxu0 0.0
      %355 = vmatpush.msra.mxu0 0.0
      %356 = vmatpush.msra.mxu0 0.0
      %357 = vmatpush.msra.mxu0 0.0
      %358 = vmatpush.msra.mxu0 0.0
      %359 = vmatpush.msra.mxu0 0.0
      %360 = vmatpush.msra.mxu0 0.0
      %361 = vmatpush.msra.mxu0 0.0
      %v362 = vand.u32 %v299, 4294901760
      %v363 = vsub.f32 %v299, %v362
      %v364 = vand.u32 %v363, 4294901760
      %v365 = vsub.f32 %v363, %v364
      %v366 = vand.u32 %v365, 4294901760
      %367 = vmatpush.msra.mxu0 %v366
      %v368 = vand.u32 %v319, 4294901760
      %369 = vmatmul.f32.gmra.mxu0 %v368
      %v370 = vpop.f32.mrf.mxu0
      %v371 = vadd.f32 %v345, %v370
      %372 = vdwg.mxu0
      %373 = vmatpush.msra.mxu0 0.0
      %374 = vmatpush.msra.mxu0 0.0
      %375 = vmatpush.msra.mxu0 0.0
      %376 = vmatpush.msra.mxu0 0.0
      %377 = vmatpush.msra.mxu0 0.0
      %378 = vmatpush.msra.mxu0 0.0
      %379 = vmatpush.msra.mxu0 0.0
      %380 = vmatpush.msra.mxu0 0.0
      %381 = vmatpush.msra.mxu0 0.0
      %382 = vmatpush.msra.mxu0 0.0
      %383 = vmatpush.msra.mxu0 0.0
      %384 = vmatpush.msra.mxu0 0.0
      %385 = vmatpush.msra.mxu0 0.0
      %386 = vmatpush.msra.mxu0 0.0
      %387 = vmatpush.msra.mxu0 0.0
      %v388 = vand.u32 %v299, 4294901760
      %v389 = vsub.f32 %v299, %v388
      %390 = vmatpush.msra.mxu0 %v389
      %v391 = vand.u32 %v319, 4294901760
      %v392 = vsub.f32 %v319, %v391
      %393 = vmatmul.f32.gmra.mxu0 %v392
      %v394 = vpop.f32.mrf.mxu0
      %v395 = vadd.f32 %v371, %v394
      %396 = vdwg.mxu0
      %397 = vmatpush.msra.mxu0 0.0
      %398 = vmatpush.msra.mxu0 0.0
      %399 = vmatpush.msra.mxu0 0.0
      %400 = vmatpush.msra.mxu0 0.0
      %401 = vmatpush.msra.mxu0 0.0
      %402 = vmatpush.msra.mxu0 0.0
      %403 = vmatpush.msra.mxu0 0.0
      %404 = vmatpush.msra.mxu0 0.0
      %405 = vmatpush.msra.mxu0 0.0
      %406 = vmatpush.msra.mxu0 0.0
      %407 = vmatpush.msra.mxu0 0.0
      %408 = vmatpush.msra.mxu0 0.0
      %409 = vmatpush.msra.mxu0 0.0
      %410 = vmatpush.msra.mxu0 0.0
      %411 = vmatpush.msra.mxu0 0.0
      %v412 = vand.u32 %v299, 4294901760
      %413 = vmatpush.msra.mxu0 %v412
      %v414 = vand.u32 %v319, 4294901760
      %v415 = vsub.f32 %v319, %v414
      %v416 = vand.u32 %v415, 4294901760
      %417 = vmatmul.f32.gmra.mxu0 %v416
      %v418 = vpop.f32.mrf.mxu0
      %v419 = vadd.f32 %v395, %v418
      %420 = vdwg.mxu0
      %421 = vmatpush.msra.mxu0 0.0
      %422 = vmatpush.msra.mxu0 0.0
      %423 = vmatpush.msra.mxu0 0.0
      %424 = vmatpush.msra.mxu0 0.0
      %425 = vmatpush.msra.mxu0 0.0
      %426 = vmatpush.msra.mxu0 0.0
      %427 = vmatpush.msra.mxu0 0.0
      %428 = vmatpush.msra.mxu0 0.0
      %429 = vmatpush.msra.mxu0 0.0
      %430 = vmatpush.msra.mxu0 0.0
      %431 = vmatpush.msra.mxu0 0.0
      %432 = vmatpush.msra.mxu0 0.0
      %433 = vmatpush.msra.mxu0 0.0
      %434 = vmatpush.msra.mxu0 0.0
      %435 = vmatpush.msra.mxu0 0.0
      %v436 = vand.u32 %v299, 4294901760
      %v437 = vsub.f32 %v299, %v436
      %v438 = vand.u32 %v437, 4294901760
      %439 = vmatpush.msra.mxu0 %v438
      %v440 = vand.u32 %v319, 4294901760
      %441 = vmatmul.f32.gmra.mxu0 %v440
      %v442 = vpop.f32.mrf.mxu0
      %v443 = vadd.f32 %v419, %v442
      %444 = vdwg.mxu0
      %445 = vmatpush.msra.mxu0 0.0
      %446 = vmatpush.msra.mxu0 0.0
      %447 = vmatpush.msra.mxu0 0.0
      %448 = vmatpush.msra.mxu0 0.0
      %449 = vmatpush.msra.mxu0 0.0
      %450 = vmatpush.msra.mxu0 0.0
      %451 = vmatpush.msra.mxu0 0.0
      %452 = vmatpush.msra.mxu0 0.0
      %453 = vmatpush.msra.mxu0 0.0
      %454 = vmatpush.msra.mxu0 0.0
      %455 = vmatpush.msra.mxu0 0.0
      %456 = vmatpush.msra.mxu0 0.0
      %457 = vmatpush.msra.mxu0 0.0
      %458 = vmatpush.msra.mxu0 0.0
      %459 = vmatpush.msra.mxu0 0.0
      %v460 = vand.u32 %v299, 4294901760
      %461 = vmatpush.msra.mxu0 %v460
      %v462 = vand.u32 %v319, 4294901760
      %463 = vmatmul.f32.gmra.mxu0 %v462
      %v464 = vpop.f32.mrf.mxu0
      %v465 = vadd.f32 %v443, %v464
      %466 = vdwg.mxu0
      %v467 = vmul.f32 %v465, 0.5
      %v468 = vmul.f32 %v465, 0.044715
      %v469 = vmul.f32 %v468, %v465
      %v470 = vmul.f32 %v469, %v465
      %v471 = vadd.f32 %v465, %v470
      %v472 = vmul.f32 %v471, 0.7978846
      %v473 = vtanh.pop %v472
      %v474 = vadd.f32 %v473, 1.0
      %v475 = vmul.f32 %v467, %v474
      %v476 = vperm.slane %v309, 0
      %vm477 = vcmask 261120
      %v479 = vsel %vm477, %v475, 0
      %481 = vmatpush.msra.mxu0 0.0
      %482 = vmatpush.msra.mxu0 0.0
      %483 = vmatpush.msra.mxu0 0.0
      %484 = vmatpush.msra.mxu0 0.0
      %485 = vmatpush.msra.mxu0 0.0
      %486 = vmatpush.msra.mxu0 0.0
      %487 = vmatpush.msra.mxu0 0.0
      %488 = vmatpush.msra.mxu0 0.0
      %489 = vmatpush.msra.mxu0 0.0
      %490 = vmatpush.msra.mxu0 0.0
      %491 = vmatpush.msra.mxu0 0.0
      %492 = vmatpush.msra.mxu0 0.0
      %v493 = vand.u32 %v303, 4294901760
      %494 = vmatpush.msra.mxu0 %v493
      %v495 = vand.u32 %v302, 4294901760
      %496 = vmatpush.msra.mxu0 %v495
      %v497 = vand.u32 %v301, 4294901760
      %498 = vmatpush.msra.mxu0 %v497
      %v499 = vand.u32 %v300, 4294901760
      %500 = vmatpush.msra.mxu0 %v499
      %v501 = vand.u32 %v479, 4294901760
      %v502 = vsub.f32 %v479, %v501
      %v503 = vand.u32 %v502, 4294901760
      %v504 = vsub.f32 %v502, %v503
      %v505 = vand.u32 %v504, 4294901760
      %506 = vmatmul.f32.gmra.mxu0 %v505
      %v507 = vpop.f32.mrf.mxu0
      %v508 = vadd.f32 %v476, %v507
      %509 = vdwg.mxu0
      %510 = vmatpush.msra.mxu0 0.0
      %511 = vmatpush.msra.mxu0 0.0
      %512 = vmatpush.msra.mxu0 0.0
      %513 = vmatpush.msra.mxu0 0.0
      %514 = vmatpush.msra.mxu0 0.0
      %515 = vmatpush.msra.mxu0 0.0
      %516 = vmatpush.msra.mxu0 0.0
      %517 = vmatpush.msra.mxu0 0.0
      %518 = vmatpush.msra.mxu0 0.0
      %519 = vmatpush.msra.mxu0 0.0
      %520 = vmatpush.msra.mxu0 0.0
      %521 = vmatpush.msra.mxu0 0.0
      %v522 = vand.u32 %v303, 4294901760
      %v523 = vsub.f32 %v303, %v522
      %v524 = vand.u32 %v523, 4294901760
      %v525 = vsub.f32 %v523, %v524
      %v526 = vand.u32 %v525, 4294901760
      %527 = vmatpush.msra.mxu0 %v526
      %v528 = vand.u32 %v302, 4294901760
      %v529 = vsub.f32 %v302, %v528
      %v530 = vand.u32 %v529, 4294901760
      %v531 = vsub.f32 %v529, %v530
      %v532 = vand.u32 %v531, 4294901760
      %533 = vmatpush.msra.mxu0 %v532
      %v534 = vand.u32 %v301, 4294901760
      %v535 = vsub.f32 %v301, %v534
      %v536 = vand.u32 %v535, 4294901760
      %v537 = vsub.f32 %v535, %v536
      %v538 = vand.u32 %v537, 4294901760
      %539 = vmatpush.msra.mxu0 %v538
      %v540 = vand.u32 %v300, 4294901760
      %v541 = vsub.f32 %v300, %v540
      %v542 = vand.u32 %v541, 4294901760
      %v543 = vsub.f32 %v541, %v542
      %v544 = vand.u32 %v543, 4294901760
      %545 = vmatpush.msra.mxu0 %v544
      %v546 = vand.u32 %v479, 4294901760
      %547 = vmatmul.f32.gmra.mxu0 %v546
      %v548 = vpop.f32.mrf.mxu0
      %v549 = vadd.f32 %v508, %v548
      %550 = vdwg.mxu0
      %551 = vmatpush.msra.mxu0 0.0
      %552 = vmatpush.msra.mxu0 0.0
      %553 = vmatpush.msra.mxu0 0.0
      %554 = vmatpush.msra.mxu0 0.0
      %555 = vmatpush.msra.mxu0 0.0
      %556 = vmatpush.msra.mxu0 0.0
      %557 = vmatpush.msra.mxu0 0.0
      %558 = vmatpush.msra.mxu0 0.0
      %559 = vmatpush.msra.mxu0 0.0
      %560 = vmatpush.msra.mxu0 0.0
      %561 = vmatpush.msra.mxu0 0.0
      %562 = vmatpush.msra.mxu0 0.0
      %v563 = vand.u32 %v303, 4294901760
      %v564 = vsub.f32 %v303, %v563
      %565 = vmatpush.msra.mxu0 %v564
      %v566 = vand.u32 %v302, 4294901760
      %v567 = vsub.f32 %v302, %v566
      %568 = vmatpush.msra.mxu0 %v567
      %v569 = vand.u32 %v301, 4294901760
      %v570 = vsub.f32 %v301, %v569
      %571 = vmatpush.msra.mxu0 %v570
      %v572 = vand.u32 %v300, 4294901760
      %v573 = vsub.f32 %v300, %v572
      %574 = vmatpush.msra.mxu0 %v573
      %v575 = vand.u32 %v479, 4294901760
      %v576 = vsub.f32 %v479, %v575
      %577 = vmatmul.f32.gmra.mxu0 %v576
      %v578 = vpop.f32.mrf.mxu0
      %v579 = vadd.f32 %v549, %v578
      %580 = vdwg.mxu0
      %581 = vmatpush.msra.mxu0 0.0
      %582 = vmatpush.msra.mxu0 0.0
      %583 = vmatpush.msra.mxu0 0.0
      %584 = vmatpush.msra.mxu0 0.0
      %585 = vmatpush.msra.mxu0 0.0
      %586 = vmatpush.msra.mxu0 0.0
      %587 = vmatpush.msra.mxu0 0.0
      %588 = vmatpush.msra.mxu0 0.0
      %589 = vmatpush.msra.mxu0 0.0
      %590 = vmatpush.msra.mxu0 0.0
      %591 = vmatpush.msra.mxu0 0.0
      %592 = vmatpush.msra.mxu0 0.0
      %v593 = vand.u32 %v303, 4294901760
      %594 = vmatpush.msra.mxu0 %v593
      %v595 = vand.u32 %v302, 4294901760
      %596 = vmatpush.msra.mxu0 %v595
      %v597 = vand.u32 %v301, 4294901760
      %598 = vmatpush.msra.mxu0 %v597
      %v599 = vand.u32 %v300, 4294901760
      %600 = vmatpush.msra.mxu0 %v599
      %v601 = vand.u32 %v479, 4294901760
      %v602 = vsub.f32 %v479, %v601
      %v603 = vand.u32 %v602, 4294901760
      %604 = vmatmul.f32.gmra.mxu0 %v603
      %v605 = vpop.f32.mrf.mxu0
      %v606 = vadd.f32 %v579, %v605
      %607 = vdwg.mxu0
      %608 = vmatpush.msra.mxu0 0.0
      %609 = vmatpush.msra.mxu0 0.0
      %610 = vmatpush.msra.mxu0 0.0
      %611 = vmatpush.msra.mxu0 0.0
      %612 = vmatpush.msra.mxu0 0.0
      %613 = vmatpush.msra.mxu0 0.0
      %614 = vmatpush.msra.mxu0 0.0
      %615 = vmatpush.msra.mxu0 0.0
      %616 = vmatpush.msra.mxu0 0.0
      %617 = vmatpush.msra.mxu0 0.0
      %618 = vmatpush.msra.mxu0 0.0
      %619 = vmatpush.msra.mxu0 0.0
      %v620 = vand.u32 %v303, 4294901760
      %v621 = vsub.f32 %v303, %v620
      %v622 = vand.u32 %v621, 4294901760
      %623 = vmatpush.msra.mxu0 %v622
      %v624 = vand.u32 %v302, 4294901760
      %v625 = vsub.f32 %v302, %v624
      %v626 = vand.u32 %v625, 4294901760
      %627 = vmatpush.msra.mxu0 %v626
      %v628 = vand.u32 %v301, 4294901760
      %v629 = vsub.f32 %v301, %v628
      %v630 = vand.u32 %v629, 4294901760
      %631 = vmatpush.msra.mxu0 %v630
      %v632 = vand.u32 %v300, 4294901760
      %v633 = vsub.f32 %v300, %v632
      %v634 = vand.u32 %v633, 4294901760
      %635 = vmatpush.msra.mxu0 %v634
      %v636 = vand.u32 %v479, 4294901760
      %637 = vmatmul.f32.gmra.mxu0 %v636
      %v638 = vpop.f32.mrf.mxu0
      %v639 = vadd.f32 %v606, %v638
      %640 = vdwg.mxu0
      %641 = vmatpush.msra.mxu0 0.0
      %642 = vmatpush.msra.mxu0 0.0
      %643 = vmatpush.msra.mxu0 0.0
      %644 = vmatpush.msra.mxu0 0.0
      %645 = vmatpush.msra.mxu0 0.0
      %646 = vmatpush.msra.mxu0 0.0
      %647 = vmatpush.msra.mxu0 0.0
      %648 = vmatpush.msra.mxu0 0.0
      %649 = vmatpush.msra.mxu0 0.0
      %650 = vmatpush.msra.mxu0 0.0
      %651 = vmatpush.msra.mxu0 0.0
      %652 = vmatpush.msra.mxu0 0.0
      %v653 = vand.u32 %v303, 4294901760
      %654 = vmatpush.msra.mxu0 %v653
      %v655 = vand.u32 %v302, 4294901760
      %656 = vmatpush.msra.mxu0 %v655
      %v657 = vand.u32 %v301, 4294901760
      %658 = vmatpush.msra.mxu0 %v657
      %v659 = vand.u32 %v300, 4294901760
      %660 = vmatpush.msra.mxu0 %v659
      %v661 = vand.u32 %v479, 4294901760
      %662 = vmatmul.f32.gmra.mxu0 %v661
      %v663 = vpop.f32.mrf.mxu0
      %v664 = vadd.f32 %v639, %v663
      %665 = vdwg.mxu0
      %v666 = vmul.f32 %v664, 0.5
      %v667 = vmul.f32 %v664, 0.044715
      %v668 = vmul.f32 %v667, %v664
      %v669 = vmul.f32 %v668, %v664
      %v670 = vadd.f32 %v664, %v669
      %v671 = vmul.f32 %v670, 0.7978846
      %v672 = vtanh.pop %v671
      %v673 = vadd.f32 %v672, 1.0
      %v674 = vmul.f32 %v666, %v673
      %v675 = vperm.slane %v310, 0
      %v677 = vsel %vm477, %v674, 0
      %679 = vmatpush.msra.mxu0 0.0
      %680 = vmatpush.msra.mxu0 0.0
      %681 = vmatpush.msra.mxu0 0.0
      %682 = vmatpush.msra.mxu0 0.0
      %683 = vmatpush.msra.mxu0 0.0
      %684 = vmatpush.msra.mxu0 0.0
      %685 = vmatpush.msra.mxu0 0.0
      %686 = vmatpush.msra.mxu0 0.0
      %687 = vmatpush.msra.mxu0 0.0
      %688 = vmatpush.msra.mxu0 0.0
      %689 = vmatpush.msra.mxu0 0.0
      %690 = vmatpush.msra.mxu0 0.0
      %v691 = vand.u32 %v307, 4294901760
      %692 = vmatpush.msra.mxu0 %v691
      %v693 = vand.u32 %v306, 4294901760
      %694 = vmatpush.msra.mxu0 %v693
      %v695 = vand.u32 %v305, 4294901760
      %696 = vmatpush.msra.mxu0 %v695
      %v697 = vand.u32 %v304, 4294901760
      %698 = vmatpush.msra.mxu0 %v697
      %v699 = vand.u32 %v677, 4294901760
      %v700 = vsub.f32 %v677, %v699
      %v701 = vand.u32 %v700, 4294901760
      %v702 = vsub.f32 %v700, %v701
      %v703 = vand.u32 %v702, 4294901760
      %704 = vmatmul.f32.gmra.mxu0 %v703
      %v705 = vpop.f32.mrf.mxu0
      %v706 = vadd.f32 %v675, %v705
      %707 = vdwg.mxu0
      %708 = vmatpush.msra.mxu0 0.0
      %709 = vmatpush.msra.mxu0 0.0
      %710 = vmatpush.msra.mxu0 0.0
      %711 = vmatpush.msra.mxu0 0.0
      %712 = vmatpush.msra.mxu0 0.0
      %713 = vmatpush.msra.mxu0 0.0
      %714 = vmatpush.msra.mxu0 0.0
      %715 = vmatpush.msra.mxu0 0.0
      %716 = vmatpush.msra.mxu0 0.0
      %717 = vmatpush.msra.mxu0 0.0
      %718 = vmatpush.msra.mxu0 0.0
      %719 = vmatpush.msra.mxu0 0.0
      %v720 = vand.u32 %v307, 4294901760
      %v721 = vsub.f32 %v307, %v720
      %v722 = vand.u32 %v721, 4294901760
      %v723 = vsub.f32 %v721, %v722
      %v724 = vand.u32 %v723, 4294901760
      %725 = vmatpush.msra.mxu0 %v724
      %v726 = vand.u32 %v306, 4294901760
      %v727 = vsub.f32 %v306, %v726
      %v728 = vand.u32 %v727, 4294901760
      %v729 = vsub.f32 %v727, %v728
      %v730 = vand.u32 %v729, 4294901760
      %731 = vmatpush.msra.mxu0 %v730
      %v732 = vand.u32 %v305, 4294901760
      %v733 = vsub.f32 %v305, %v732
      %v734 = vand.u32 %v733, 4294901760
      %v735 = vsub.f32 %v733, %v734
      %v736 = vand.u32 %v735, 4294901760
      %737 = vmatpush.msra.mxu0 %v736
      %v738 = vand.u32 %v304, 4294901760
      %v739 = vsub.f32 %v304, %v738
      %v740 = vand.u32 %v739, 4294901760
      %v741 = vsub.f32 %v739, %v740
      %v742 = vand.u32 %v741, 4294901760
      %743 = vmatpush.msra.mxu0 %v742
      %v744 = vand.u32 %v677, 4294901760
      %745 = vmatmul.f32.gmra.mxu0 %v744
      %v746 = vpop.f32.mrf.mxu0
      %v747 = vadd.f32 %v706, %v746
      %748 = vdwg.mxu0
      %749 = vmatpush.msra.mxu0 0.0
      %750 = vmatpush.msra.mxu0 0.0
      %751 = vmatpush.msra.mxu0 0.0
      %752 = vmatpush.msra.mxu0 0.0
      %753 = vmatpush.msra.mxu0 0.0
      %754 = vmatpush.msra.mxu0 0.0
      %755 = vmatpush.msra.mxu0 0.0
      %756 = vmatpush.msra.mxu0 0.0
      %757 = vmatpush.msra.mxu0 0.0
      %758 = vmatpush.msra.mxu0 0.0
      %759 = vmatpush.msra.mxu0 0.0
      %760 = vmatpush.msra.mxu0 0.0
      %v761 = vand.u32 %v307, 4294901760
      %v762 = vsub.f32 %v307, %v761
      %763 = vmatpush.msra.mxu0 %v762
      %v764 = vand.u32 %v306, 4294901760
      %v765 = vsub.f32 %v306, %v764
      %766 = vmatpush.msra.mxu0 %v765
      %v767 = vand.u32 %v305, 4294901760
      %v768 = vsub.f32 %v305, %v767
      %769 = vmatpush.msra.mxu0 %v768
      %v770 = vand.u32 %v304, 4294901760
      %v771 = vsub.f32 %v304, %v770
      %772 = vmatpush.msra.mxu0 %v771
      %v773 = vand.u32 %v677, 4294901760
      %v774 = vsub.f32 %v677, %v773
      %775 = vmatmul.f32.gmra.mxu0 %v774
      %v776 = vpop.f32.mrf.mxu0
      %v777 = vadd.f32 %v747, %v776
      %778 = vdwg.mxu0
      %779 = vmatpush.msra.mxu0 0.0
      %780 = vmatpush.msra.mxu0 0.0
      %781 = vmatpush.msra.mxu0 0.0
      %782 = vmatpush.msra.mxu0 0.0
      %783 = vmatpush.msra.mxu0 0.0
      %784 = vmatpush.msra.mxu0 0.0
      %785 = vmatpush.msra.mxu0 0.0
      %786 = vmatpush.msra.mxu0 0.0
      %787 = vmatpush.msra.mxu0 0.0
      %788 = vmatpush.msra.mxu0 0.0
      %789 = vmatpush.msra.mxu0 0.0
      %790 = vmatpush.msra.mxu0 0.0
      %v791 = vand.u32 %v307, 4294901760
      %792 = vmatpush.msra.mxu0 %v791
      %v793 = vand.u32 %v306, 4294901760
      %794 = vmatpush.msra.mxu0 %v793
      %v795 = vand.u32 %v305, 4294901760
      %796 = vmatpush.msra.mxu0 %v795
      %v797 = vand.u32 %v304, 4294901760
      %798 = vmatpush.msra.mxu0 %v797
      %v799 = vand.u32 %v677, 4294901760
      %v800 = vsub.f32 %v677, %v799
      %v801 = vand.u32 %v800, 4294901760
      %802 = vmatmul.f32.gmra.mxu0 %v801
      %v803 = vpop.f32.mrf.mxu0
      %v804 = vadd.f32 %v777, %v803
      %805 = vdwg.mxu0
      %806 = vmatpush.msra.mxu0 0.0
      %807 = vmatpush.msra.mxu0 0.0
      %808 = vmatpush.msra.mxu0 0.0
      %809 = vmatpush.msra.mxu0 0.0
      %810 = vmatpush.msra.mxu0 0.0
      %811 = vmatpush.msra.mxu0 0.0
      %812 = vmatpush.msra.mxu0 0.0
      %813 = vmatpush.msra.mxu0 0.0
      %814 = vmatpush.msra.mxu0 0.0
      %815 = vmatpush.msra.mxu0 0.0
      %816 = vmatpush.msra.mxu0 0.0
      %817 = vmatpush.msra.mxu0 0.0
      %v818 = vand.u32 %v307, 4294901760
      %v819 = vsub.f32 %v307, %v818
      %v820 = vand.u32 %v819, 4294901760
      %821 = vmatpush.msra.mxu0 %v820
      %v822 = vand.u32 %v306, 4294901760
      %v823 = vsub.f32 %v306, %v822
      %v824 = vand.u32 %v823, 4294901760
      %825 = vmatpush.msra.mxu0 %v824
      %v826 = vand.u32 %v305, 4294901760
      %v827 = vsub.f32 %v305, %v826
      %v828 = vand.u32 %v827, 4294901760
      %829 = vmatpush.msra.mxu0 %v828
      %v830 = vand.u32 %v304, 4294901760
      %v831 = vsub.f32 %v304, %v830
      %v832 = vand.u32 %v831, 4294901760
      %833 = vmatpush.msra.mxu0 %v832
      %v834 = vand.u32 %v677, 4294901760
      %835 = vmatmul.f32.gmra.mxu0 %v834
      %v836 = vpop.f32.mrf.mxu0
      %v837 = vadd.f32 %v804, %v836
      %838 = vdwg.mxu0
      %839 = vmatpush.msra.mxu0 0.0
      %840 = vmatpush.msra.mxu0 0.0
      %841 = vmatpush.msra.mxu0 0.0
      %842 = vmatpush.msra.mxu0 0.0
      %843 = vmatpush.msra.mxu0 0.0
      %844 = vmatpush.msra.mxu0 0.0
      %845 = vmatpush.msra.mxu0 0.0
      %846 = vmatpush.msra.mxu0 0.0
      %847 = vmatpush.msra.mxu0 0.0
      %848 = vmatpush.msra.mxu0 0.0
      %849 = vmatpush.msra.mxu0 0.0
      %850 = vmatpush.msra.mxu0 0.0
      %v851 = vand.u32 %v307, 4294901760
      %852 = vmatpush.msra.mxu0 %v851
      %v853 = vand.u32 %v306, 4294901760
      %854 = vmatpush.msra.mxu0 %v853
      %v855 = vand.u32 %v305, 4294901760
      %856 = vmatpush.msra.mxu0 %v855
      %v857 = vand.u32 %v304, 4294901760
      %858 = vmatpush.msra.mxu0 %v857
      %v859 = vand.u32 %v677, 4294901760
      %860 = vmatmul.f32.gmra.mxu0 %v859
      %v861 = vpop.f32.mrf.mxu0
      %v862 = vadd.f32 %v837, %v861
      %863 = vdwg.mxu0
      %v864 = vadd.f32 %v862, %v315
      %vm865 = vcmask 58368
      %v866 = vsel %vm865, %v864, 0.0
      %867 = vadd.xlane.f32.xlu0 %v866
      %v868 = vpop.xlane.xlu0 %867
      %v869 = vrcp.pop 8.0
      %v870 = vmul.f32 8.0, %v869
      %v871 = vsub.f32 1.0, %v870
      %v872 = vmul.f32 %v869, %v871
      %v873 = vadd.f32 %v869, %v872
      %vm874 = vweird.f32 %v869
      %v875 = vsel %vm874, %v869, %v873
      %v876 = vmul.f32 %v868, %v875
      %v877 = vsub.f32 %v864, %v876
      %v878 = vmul.f32 %v877, %v877
      %v879 = vsel %vm865, %v878, 0.0
      %880 = vadd.xlane.f32.xlu0 %v879
      %v881 = vpop.xlane.xlu0 %880
      %v882 = vmul.f32 %v881, %v875
      %v883 = vadd.f32 %v882, 1e-05
      %v884 = vrsqrt.pop %v883
      %v885 = vmul.f32 %v884, %v883
      %v886 = vmul.f32 %v885, %v884
      %v887 = vmul.f32 0.5, %v886
      %v888 = vsub.f32 1.5, %v887
      %v889 = vmul.f32 %v884, %v888
      %vm890 = vweird.f32 %v883
      %vm891 = vweird.f32 %v884
      %vm892 = vmor %vm890, %vm891
      %v893 = vsel %vm892, %v884, %v889
      %v894 = vmul.f32 %v877, %v893
      %v895 = vperm.slane %v311, 0
      %v896 = vmul.f32 %v894, %v895
      %v897 = vperm.slane %v312, 0
      %v898 = vadd.f32 %v896, %v897
      %s900 = vtos %v313
      %v901 = vstv %s900
      %v903 = vmul.f32 %v315, %v901
      %v904 = vadd.f32 %v903, %v898
      %v905 = vld [vmem:[%s283] sm:$0x3]
      %v906 = vadd.f32 %v904, %v905
      %v907 = vld [vmem:[%s288] sm:$0x3]
      %v909 = vsel %vm317, %v906, 0
      %911 = vmatpush.msra.mxu0 0.0
      %912 = vmatpush.msra.mxu0 0.0
      %913 = vmatpush.msra.mxu0 0.0
      %914 = vmatpush.msra.mxu0 0.0
      %915 = vmatpush.msra.mxu0 0.0
      %916 = vmatpush.msra.mxu0 0.0
      %917 = vmatpush.msra.mxu0 0.0
      %918 = vmatpush.msra.mxu0 0.0
      %919 = vmatpush.msra.mxu0 0.0
      %920 = vmatpush.msra.mxu0 0.0
      %921 = vmatpush.msra.mxu0 0.0
      %922 = vmatpush.msra.mxu0 0.0
      %923 = vmatpush.msra.mxu0 0.0
      %924 = vmatpush.msra.mxu0 0.0
      %925 = vmatpush.msra.mxu0 0.0
      %v926 = vand.u32 %v314, 4294901760
      %927 = vmatpush.msra.mxu0 %v926
      %v928 = vand.u32 %v909, 4294901760
      %v929 = vsub.f32 %v909, %v928
      %v930 = vand.u32 %v929, 4294901760
      %v931 = vsub.f32 %v929, %v930
      %v932 = vand.u32 %v931, 4294901760
      %933 = vmatmul.f32.gmra.mxu0 %v932
      %v934 = vpop.f32.mrf.mxu0
      %v935 = vadd.f32 0.0, %v934
      %936 = vdwg.mxu0
      %937 = vmatpush.msra.mxu0 0.0
      %938 = vmatpush.msra.mxu0 0.0
      %939 = vmatpush.msra.mxu0 0.0
      %940 = vmatpush.msra.mxu0 0.0
      %941 = vmatpush.msra.mxu0 0.0
      %942 = vmatpush.msra.mxu0 0.0
      %943 = vmatpush.msra.mxu0 0.0
      %944 = vmatpush.msra.mxu0 0.0
      %945 = vmatpush.msra.mxu0 0.0
      %946 = vmatpush.msra.mxu0 0.0
      %947 = vmatpush.msra.mxu0 0.0
      %948 = vmatpush.msra.mxu0 0.0
      %949 = vmatpush.msra.mxu0 0.0
      %950 = vmatpush.msra.mxu0 0.0
      %951 = vmatpush.msra.mxu0 0.0
      %v952 = vand.u32 %v314, 4294901760
      %v953 = vsub.f32 %v314, %v952
      %v954 = vand.u32 %v953, 4294901760
      %v955 = vsub.f32 %v953, %v954
      %v956 = vand.u32 %v955, 4294901760
      %957 = vmatpush.msra.mxu0 %v956
      %v958 = vand.u32 %v909, 4294901760
      %959 = vmatmul.f32.gmra.mxu0 %v958
      %v960 = vpop.f32.mrf.mxu0
      %v961 = vadd.f32 %v935, %v960
      %962 = vdwg.mxu0
      %963 = vmatpush.msra.mxu0 0.0
      %964 = vmatpush.msra.mxu0 0.0
      %965 = vmatpush.msra.mxu0 0.0
      %966 = vmatpush.msra.mxu0 0.0
      %967 = vmatpush.msra.mxu0 0.0
      %968 = vmatpush.msra.mxu0 0.0
      %969 = vmatpush.msra.mxu0 0.0
      %970 = vmatpush.msra.mxu0 0.0
      %971 = vmatpush.msra.mxu0 0.0
      %972 = vmatpush.msra.mxu0 0.0
      %973 = vmatpush.msra.mxu0 0.0
      %974 = vmatpush.msra.mxu0 0.0
      %975 = vmatpush.msra.mxu0 0.0
      %976 = vmatpush.msra.mxu0 0.0
      %977 = vmatpush.msra.mxu0 0.0
      %v978 = vand.u32 %v314, 4294901760
      %v979 = vsub.f32 %v314, %v978
      %980 = vmatpush.msra.mxu0 %v979
      %v981 = vand.u32 %v909, 4294901760
      %v982 = vsub.f32 %v909, %v981
      %983 = vmatmul.f32.gmra.mxu0 %v982
      %v984 = vpop.f32.mrf.mxu0
      %v985 = vadd.f32 %v961, %v984
      %986 = vdwg.mxu0
      %987 = vmatpush.msra.mxu0 0.0
      %988 = vmatpush.msra.mxu0 0.0
      %989 = vmatpush.msra.mxu0 0.0
      %990 = vmatpush.msra.mxu0 0.0
      %991 = vmatpush.msra.mxu0 0.0
      %992 = vmatpush.msra.mxu0 0.0
      %993 = vmatpush.msra.mxu0 0.0
      %994 = vmatpush.msra.mxu0 0.0
      %995 = vmatpush.msra.mxu0 0.0
      %996 = vmatpush.msra.mxu0 0.0
      %997 = vmatpush.msra.mxu0 0.0
      %998 = vmatpush.msra.mxu0 0.0
      %999 = vmatpush.msra.mxu0 0.0
      %1000 = vmatpush.msra.mxu0 0.0
      %1001 = vmatpush.msra.mxu0 0.0
      %v1002 = vand.u32 %v314, 4294901760
      %1003 = vmatpush.msra.mxu0 %v1002
      %v1004 = vand.u32 %v909, 4294901760
      %v1005 = vsub.f32 %v909, %v1004
      %v1006 = vand.u32 %v1005, 4294901760
      %1007 = vmatmul.f32.gmra.mxu0 %v1006
      %v1008 = vpop.f32.mrf.mxu0
      %v1009 = vadd.f32 %v985, %v1008
      %1010 = vdwg.mxu0
      %1011 = vmatpush.msra.mxu0 0.0
      %1012 = vmatpush.msra.mxu0 0.0
      %1013 = vmatpush.msra.mxu0 0.0
      %1014 = vmatpush.msra.mxu0 0.0
      %1015 = vmatpush.msra.mxu0 0.0
      %1016 = vmatpush.msra.mxu0 0.0
      %1017 = vmatpush.msra.mxu0 0.0
      %1018 = vmatpush.msra.mxu0 0.0
      %1019 = vmatpush.msra.mxu0 0.0
      %1020 = vmatpush.msra.mxu0 0.0
      %1021 = vmatpush.msra.mxu0 0.0
      %1022 = vmatpush.msra.mxu0 0.0
      %1023 = vmatpush.msra.mxu0 0.0
      %1024 = vmatpush.msra.mxu0 0.0
      %1025 = vmatpush.msra.mxu0 0.0
      %v1026 = vand.u32 %v314, 4294901760
      %v1027 = vsub.f32 %v314, %v1026
      %v1028 = vand.u32 %v1027, 4294901760
      %1029 = vmatpush.msra.mxu0 %v1028
      %v1030 = vand.u32 %v909, 4294901760
      %1031 = vmatmul.f32.gmra.mxu0 %v1030
      %v1032 = vpop.f32.mrf.mxu0
      %v1033 = vadd.f32 %v1009, %v1032
      %1034 = vdwg.mxu0
      %1035 = vmatpush.msra.mxu0 0.0
      %1036 = vmatpush.msra.mxu0 0.0
      %1037 = vmatpush.msra.mxu0 0.0
      %1038 = vmatpush.msra.mxu0 0.0
      %1039 = vmatpush.msra.mxu0 0.0
      %1040 = vmatpush.msra.mxu0 0.0
      %1041 = vmatpush.msra.mxu0 0.0
      %1042 = vmatpush.msra.mxu0 0.0
      %1043 = vmatpush.msra.mxu0 0.0
      %1044 = vmatpush.msra.mxu0 0.0
      %1045 = vmatpush.msra.mxu0 0.0
      %1046 = vmatpush.msra.mxu0 0.0
      %1047 = vmatpush.msra.mxu0 0.0
      %1048 = vmatpush.msra.mxu0 0.0
      %1049 = vmatpush.msra.mxu0 0.0
      %v1050 = vand.u32 %v314, 4294901760
      %1051 = vmatpush.msra.mxu0 %v1050
      %v1052 = vand.u32 %v909, 4294901760
      %1053 = vmatmul.f32.gmra.mxu0 %v1052
      %v1054 = vpop.f32.mrf.mxu0
      %v1055 = vadd.f32 %v1033, %v1054
      %1056 = vdwg.mxu0
      %v1057 = vadd.f32 %v907, %v1055
      %vm1058 = vcmask 123904
      %1059 = vst.msk [vmem:[%s298] sm:$0x3] %vm1058, %v1057
      %1060 = vmatpush.msra.mxu0 0.0
      %1061 = vmatpush.msra.mxu0 0.0
      %1062 = vmatpush.msra.mxu0 0.0
      %1063 = vmatpush.msra.mxu0 0.0
      %1064 = vmatpush.msra.mxu0 0.0
      %1065 = vmatpush.msra.mxu0 0.0
      %1066 = vmatpush.msra.mxu0 0.0
      %1067 = vmatpush.msra.mxu0 0.0
      %1068 = vmatpush.msra.mxu0 0.0
      %1069 = vmatpush.msra.mxu0 0.0
      %1070 = vmatpush.msra.mxu0 0.0
      %1071 = vmatpush.msra.mxu0 0.0
      %1072 = vmatpush.msra.mxu0 0.0
      %1073 = vmatpush.msra.mxu0 0.0
      %1074 = vmatpush.msra.mxu0 0.0
      %v1075 = vand.u32 %v299, 4294901760
      %1076 = vmatpush.msra.mxu0 %v1075
      %v1077 = vand.u32 %v909, 4294901760
      %v1078 = vsub.f32 %v909, %v1077
      %v1079 = vand.u32 %v1078, 4294901760
      %v1080 = vsub.f32 %v1078, %v1079
      %v1081 = vand.u32 %v1080, 4294901760
      %1082 = vmatmul.f32.gmra.mxu0 %v1081
      %v1083 = vpop.f32.mrf.mxu0
      %v1084 = vadd.f32 %v316, %v1083
      %1085 = vdwg.mxu0
      %1086 = vmatpush.msra.mxu0 0.0
      %1087 = vmatpush.msra.mxu0 0.0
      %1088 = vmatpush.msra.mxu0 0.0
      %1089 = vmatpush.msra.mxu0 0.0
      %1090 = vmatpush.msra.mxu0 0.0
      %1091 = vmatpush.msra.mxu0 0.0
      %1092 = vmatpush.msra.mxu0 0.0
      %1093 = vmatpush.msra.mxu0 0.0
      %1094 = vmatpush.msra.mxu0 0.0
      %1095 = vmatpush.msra.mxu0 0.0
      %1096 = vmatpush.msra.mxu0 0.0
      %1097 = vmatpush.msra.mxu0 0.0
      %1098 = vmatpush.msra.mxu0 0.0
      %1099 = vmatpush.msra.mxu0 0.0
      %1100 = vmatpush.msra.mxu0 0.0
      %v1101 = vand.u32 %v299, 4294901760
      %v1102 = vsub.f32 %v299, %v1101
      %v1103 = vand.u32 %v1102, 4294901760
      %v1104 = vsub.f32 %v1102, %v1103
      %v1105 = vand.u32 %v1104, 4294901760
      %1106 = vmatpush.msra.mxu0 %v1105
      %v1107 = vand.u32 %v909, 4294901760
      %1108 = vmatmul.f32.gmra.mxu0 %v1107
      %v1109 = vpop.f32.mrf.mxu0
      %v1110 = vadd.f32 %v1084, %v1109
      %1111 = vdwg.mxu0
      %1112 = vmatpush.msra.mxu0 0.0
      %1113 = vmatpush.msra.mxu0 0.0
      %1114 = vmatpush.msra.mxu0 0.0
      %1115 = vmatpush.msra.mxu0 0.0
      %1116 = vmatpush.msra.mxu0 0.0
      %1117 = vmatpush.msra.mxu0 0.0
      %1118 = vmatpush.msra.mxu0 0.0
      %1119 = vmatpush.msra.mxu0 0.0
      %1120 = vmatpush.msra.mxu0 0.0
      %1121 = vmatpush.msra.mxu0 0.0
      %1122 = vmatpush.msra.mxu0 0.0
      %1123 = vmatpush.msra.mxu0 0.0
      %1124 = vmatpush.msra.mxu0 0.0
      %1125 = vmatpush.msra.mxu0 0.0
      %1126 = vmatpush.msra.mxu0 0.0
      %v1127 = vand.u32 %v299, 4294901760
      %v1128 = vsub.f32 %v299, %v1127
      %1129 = vmatpush.msra.mxu0 %v1128
      %v1130 = vand.u32 %v909, 4294901760
      %v1131 = vsub.f32 %v909, %v1130
      %1132 = vmatmul.f32.gmra.mxu0 %v1131
      %v1133 = vpop.f32.mrf.mxu0
      %v1134 = vadd.f32 %v1110, %v1133
      %1135 = vdwg.mxu0
      %1136 = vmatpush.msra.mxu0 0.0
      %1137 = vmatpush.msra.mxu0 0.0
      %1138 = vmatpush.msra.mxu0 0.0
      %1139 = vmatpush.msra.mxu0 0.0
      %1140 = vmatpush.msra.mxu0 0.0
      %1141 = vmatpush.msra.mxu0 0.0
      %1142 = vmatpush.msra.mxu0 0.0
      %1143 = vmatpush.msra.mxu0 0.0
      %1144 = vmatpush.msra.mxu0 0.0
      %1145 = vmatpush.msra.mxu0 0.0
      %1146 = vmatpush.msra.mxu0 0.0
      %1147 = vmatpush.msra.mxu0 0.0
      %1148 = vmatpush.msra.mxu0 0.0
      %1149 = vmatpush.msra.mxu0 0.0
      %1150 = vmatpush.msra.mxu0 0.0
      %v1151 = vand.u32 %v299, 4294901760
      %1152 = vmatpush.msra.mxu0 %v1151
      %v1153 = vand.u32 %v909, 4294901760
      %v1154 = vsub.f32 %v909, %v1153
      %v1155 = vand.u32 %v1154, 4294901760
      %1156 = vmatmul.f32.gmra.mxu0 %v1155
      %v1157 = vpop.f32.mrf.mxu0
      %v1158 = vadd.f32 %v1134, %v1157
      %1159 = vdwg.mxu0
      %1160 = vmatpush.msra.mxu0 0.0
      %1161 = vmatpush.msra.mxu0 0.0
      %1162 = vmatpush.msra.mxu0 0.0
      %1163 = vmatpush.msra.mxu0 0.0
      %1164 = vmatpush.msra.mxu0 0.0
      %1165 = vmatpush.msra.mxu0 0.0
      %1166 = vmatpush.msra.mxu0 0.0
      %1167 = vmatpush.msra.mxu0 0.0
      %1168 = vmatpush.msra.mxu0 0.0
      %1169 = vmatpush.msra.mxu0 0.0
      %1170 = vmatpush.msra.mxu0 0.0
      %1171 = vmatpush.msra.mxu0 0.0
      %1172 = vmatpush.msra.mxu0 0.0
      %1173 = vmatpush.msra.mxu0 0.0
      %1174 = vmatpush.msra.mxu0 0.0
      %v1175 = vand.u32 %v299, 4294901760
      %v1176 = vsub.f32 %v299, %v1175
      %v1177 = vand.u32 %v1176, 4294901760
      %1178 = vmatpush.msra.mxu0 %v1177
      %v1179 = vand.u32 %v909, 4294901760
      %1180 = vmatmul.f32.gmra.mxu0 %v1179
      %v1181 = vpop.f32.mrf.mxu0
      %v1182 = vadd.f32 %v1158, %v1181
      %1183 = vdwg.mxu0
      %1184 = vmatpush.msra.mxu0 0.0
      %1185 = vmatpush.msra.mxu0 0.0
      %1186 = vmatpush.msra.mxu0 0.0
      %1187 = vmatpush.msra.mxu0 0.0
      %1188 = vmatpush.msra.mxu0 0.0
      %1189 = vmatpush.msra.mxu0 0.0
      %1190 = vmatpush.msra.mxu0 0.0
      %1191 = vmatpush.msra.mxu0 0.0
      %1192 = vmatpush.msra.mxu0 0.0
      %1193 = vmatpush.msra.mxu0 0.0
      %1194 = vmatpush.msra.mxu0 0.0
      %1195 = vmatpush.msra.mxu0 0.0
      %1196 = vmatpush.msra.mxu0 0.0
      %1197 = vmatpush.msra.mxu0 0.0
      %1198 = vmatpush.msra.mxu0 0.0
      %v1199 = vand.u32 %v299, 4294901760
      %1200 = vmatpush.msra.mxu0 %v1199
      %v1201 = vand.u32 %v909, 4294901760
      %1202 = vmatmul.f32.gmra.mxu0 %v1201
      %v1203 = vpop.f32.mrf.mxu0
      %v1204 = vadd.f32 %v1182, %v1203
      %1205 = vdwg.mxu0
      %v1206 = vmul.f32 %v1204, 0.5
      %v1207 = vmul.f32 %v1204, 0.044715
      %v1208 = vmul.f32 %v1207, %v1204
      %v1209 = vmul.f32 %v1208, %v1204
      %v1210 = vadd.f32 %v1204, %v1209
      %v1211 = vmul.f32 %v1210, 0.7978846
      %v1212 = vtanh.pop %v1211
      %v1213 = vadd.f32 %v1212, 1.0
      %v1214 = vmul.f32 %v1206, %v1213
      %v1216 = vsel %vm477, %v1214, 0
      %1218 = vmatpush.msra.mxu0 0.0
      %1219 = vmatpush.msra.mxu0 0.0
      %1220 = vmatpush.msra.mxu0 0.0
      %1221 = vmatpush.msra.mxu0 0.0
      %1222 = vmatpush.msra.mxu0 0.0
      %1223 = vmatpush.msra.mxu0 0.0
      %1224 = vmatpush.msra.mxu0 0.0
      %1225 = vmatpush.msra.mxu0 0.0
      %1226 = vmatpush.msra.mxu0 0.0
      %1227 = vmatpush.msra.mxu0 0.0
      %1228 = vmatpush.msra.mxu0 0.0
      %1229 = vmatpush.msra.mxu0 0.0
      %v1230 = vand.u32 %v303, 4294901760
      %1231 = vmatpush.msra.mxu0 %v1230
      %v1232 = vand.u32 %v302, 4294901760
      %1233 = vmatpush.msra.mxu0 %v1232
      %v1234 = vand.u32 %v301, 4294901760
      %1235 = vmatpush.msra.mxu0 %v1234
      %v1236 = vand.u32 %v300, 4294901760
      %1237 = vmatpush.msra.mxu0 %v1236
      %v1238 = vand.u32 %v1216, 4294901760
      %v1239 = vsub.f32 %v1216, %v1238
      %v1240 = vand.u32 %v1239, 4294901760
      %v1241 = vsub.f32 %v1239, %v1240
      %v1242 = vand.u32 %v1241, 4294901760
      %1243 = vmatmul.f32.gmra.mxu0 %v1242
      %v1244 = vpop.f32.mrf.mxu0
      %v1245 = vadd.f32 %v476, %v1244
      %1246 = vdwg.mxu0
      %1247 = vmatpush.msra.mxu0 0.0
      %1248 = vmatpush.msra.mxu0 0.0
      %1249 = vmatpush.msra.mxu0 0.0
      %1250 = vmatpush.msra.mxu0 0.0
      %1251 = vmatpush.msra.mxu0 0.0
      %1252 = vmatpush.msra.mxu0 0.0
      %1253 = vmatpush.msra.mxu0 0.0
      %1254 = vmatpush.msra.mxu0 0.0
      %1255 = vmatpush.msra.mxu0 0.0
      %1256 = vmatpush.msra.mxu0 0.0
      %1257 = vmatpush.msra.mxu0 0.0
      %1258 = vmatpush.msra.mxu0 0.0
      %v1259 = vand.u32 %v303, 4294901760
      %v1260 = vsub.f32 %v303, %v1259
      %v1261 = vand.u32 %v1260, 4294901760
      %v1262 = vsub.f32 %v1260, %v1261
      %v1263 = vand.u32 %v1262, 4294901760
      %1264 = vmatpush.msra.mxu0 %v1263
      %v1265 = vand.u32 %v302, 4294901760
      %v1266 = vsub.f32 %v302, %v1265
      %v1267 = vand.u32 %v1266, 4294901760
      %v1268 = vsub.f32 %v1266, %v1267
      %v1269 = vand.u32 %v1268, 4294901760
      %1270 = vmatpush.msra.mxu0 %v1269
      %v1271 = vand.u32 %v301, 4294901760
      %v1272 = vsub.f32 %v301, %v1271
      %v1273 = vand.u32 %v1272, 4294901760
      %v1274 = vsub.f32 %v1272, %v1273
      %v1275 = vand.u32 %v1274, 4294901760
      %1276 = vmatpush.msra.mxu0 %v1275
      %v1277 = vand.u32 %v300, 4294901760
      %v1278 = vsub.f32 %v300, %v1277
      %v1279 = vand.u32 %v1278, 4294901760
      %v1280 = vsub.f32 %v1278, %v1279
      %v1281 = vand.u32 %v1280, 4294901760
      %1282 = vmatpush.msra.mxu0 %v1281
      %v1283 = vand.u32 %v1216, 4294901760
      %1284 = vmatmul.f32.gmra.mxu0 %v1283
      %v1285 = vpop.f32.mrf.mxu0
      %v1286 = vadd.f32 %v1245, %v1285
      %1287 = vdwg.mxu0
      %1288 = vmatpush.msra.mxu0 0.0
      %1289 = vmatpush.msra.mxu0 0.0
      %1290 = vmatpush.msra.mxu0 0.0
      %1291 = vmatpush.msra.mxu0 0.0
      %1292 = vmatpush.msra.mxu0 0.0
      %1293 = vmatpush.msra.mxu0 0.0
      %1294 = vmatpush.msra.mxu0 0.0
      %1295 = vmatpush.msra.mxu0 0.0
      %1296 = vmatpush.msra.mxu0 0.0
      %1297 = vmatpush.msra.mxu0 0.0
      %1298 = vmatpush.msra.mxu0 0.0
      %1299 = vmatpush.msra.mxu0 0.0
      %v1300 = vand.u32 %v303, 4294901760
      %v1301 = vsub.f32 %v303, %v1300
      %1302 = vmatpush.msra.mxu0 %v1301
      %v1303 = vand.u32 %v302, 4294901760
      %v1304 = vsub.f32 %v302, %v1303
      %1305 = vmatpush.msra.mxu0 %v1304
      %v1306 = vand.u32 %v301, 4294901760
      %v1307 = vsub.f32 %v301, %v1306
      %1308 = vmatpush.msra.mxu0 %v1307
      %v1309 = vand.u32 %v300, 4294901760
      %v1310 = vsub.f32 %v300, %v1309
      %1311 = vmatpush.msra.mxu0 %v1310
      %v1312 = vand.u32 %v1216, 4294901760
      %v1313 = vsub.f32 %v1216, %v1312
      %1314 = vmatmul.f32.gmra.mxu0 %v1313
      %v1315 = vpop.f32.mrf.mxu0
      %v1316 = vadd.f32 %v1286, %v1315
      %1317 = vdwg.mxu0
      %1318 = vmatpush.msra.mxu0 0.0
      %1319 = vmatpush.msra.mxu0 0.0
      %1320 = vmatpush.msra.mxu0 0.0
      %1321 = vmatpush.msra.mxu0 0.0
      %1322 = vmatpush.msra.mxu0 0.0
      %1323 = vmatpush.msra.mxu0 0.0
      %1324 = vmatpush.msra.mxu0 0.0
      %1325 = vmatpush.msra.mxu0 0.0
      %1326 = vmatpush.msra.mxu0 0.0
      %1327 = vmatpush.msra.mxu0 0.0
      %1328 = vmatpush.msra.mxu0 0.0
      %1329 = vmatpush.msra.mxu0 0.0
      %v1330 = vand.u32 %v303, 4294901760
      %1331 = vmatpush.msra.mxu0 %v1330
      %v1332 = vand.u32 %v302, 4294901760
      %1333 = vmatpush.msra.mxu0 %v1332
      %v1334 = vand.u32 %v301, 4294901760
      %1335 = vmatpush.msra.mxu0 %v1334
      %v1336 = vand.u32 %v300, 4294901760
      %1337 = vmatpush.msra.mxu0 %v1336
      %v1338 = vand.u32 %v1216, 4294901760
      %v1339 = vsub.f32 %v1216, %v1338
      %v1340 = vand.u32 %v1339, 4294901760
      %1341 = vmatmul.f32.gmra.mxu0 %v1340
      %v1342 = vpop.f32.mrf.mxu0
      %v1343 = vadd.f32 %v1316, %v1342
      %1344 = vdwg.mxu0
      %1345 = vmatpush.msra.mxu0 0.0
      %1346 = vmatpush.msra.mxu0 0.0
      %1347 = vmatpush.msra.mxu0 0.0
      %1348 = vmatpush.msra.mxu0 0.0
      %1349 = vmatpush.msra.mxu0 0.0
      %1350 = vmatpush.msra.mxu0 0.0
      %1351 = vmatpush.msra.mxu0 0.0
      %1352 = vmatpush.msra.mxu0 0.0
      %1353 = vmatpush.msra.mxu0 0.0
      %1354 = vmatpush.msra.mxu0 0.0
      %1355 = vmatpush.msra.mxu0 0.0
      %1356 = vmatpush.msra.mxu0 0.0
      %v1357 = vand.u32 %v303, 4294901760
      %v1358 = vsub.f32 %v303, %v1357
      %v1359 = vand.u32 %v1358, 4294901760
      %1360 = vmatpush.msra.mxu0 %v1359
      %v1361 = vand.u32 %v302, 4294901760
      %v1362 = vsub.f32 %v302, %v1361
      %v1363 = vand.u32 %v1362, 4294901760
      %1364 = vmatpush.msra.mxu0 %v1363
      %v1365 = vand.u32 %v301, 4294901760
      %v1366 = vsub.f32 %v301, %v1365
      %v1367 = vand.u32 %v1366, 4294901760
      %1368 = vmatpush.msra.mxu0 %v1367
      %v1369 = vand.u32 %v300, 4294901760
      %v1370 = vsub.f32 %v300, %v1369
      %v1371 = vand.u32 %v1370, 4294901760
      %1372 = vmatpush.msra.mxu0 %v1371
      %v1373 = vand.u32 %v1216, 4294901760
      %1374 = vmatmul.f32.gmra.mxu0 %v1373
      %v1375 = vpop.f32.mrf.mxu0
      %v1376 = vadd.f32 %v1343, %v1375
      %1377 = vdwg.mxu0
      %1378 = vmatpush.msra.mxu0 0.0
      %1379 = vmatpush.msra.mxu0 0.0
      %1380 = vmatpush.msra.mxu0 0.0
      %1381 = vmatpush.msra.mxu0 0.0
      %1382 = vmatpush.msra.mxu0 0.0
      %1383 = vmatpush.msra.mxu0 0.0
      %1384 = vmatpush.msra.mxu0 0.0
      %1385 = vmatpush.msra.mxu0 0.0
      %1386 = vmatpush.msra.mxu0 0.0
      %1387 = vmatpush.msra.mxu0 0.0
      %1388 = vmatpush.msra.mxu0 0.0
      %1389 = vmatpush.msra.mxu0 0.0
      %v1390 = vand.u32 %v303, 4294901760
      %1391 = vmatpush.msra.mxu0 %v1390
      %v1392 = vand.u32 %v302, 4294901760
      %1393 = vmatpush.msra.mxu0 %v1392
      %v1394 = vand.u32 %v301, 4294901760
      %1395 = vmatpush.msra.mxu0 %v1394
      %v1396 = vand.u32 %v300, 4294901760
      %1397 = vmatpush.msra.mxu0 %v1396
      %v1398 = vand.u32 %v1216, 4294901760
      %1399 = vmatmul.f32.gmra.mxu0 %v1398
      %v1400 = vpop.f32.mrf.mxu0
      %v1401 = vadd.f32 %v1376, %v1400
      %1402 = vdwg.mxu0
      %v1403 = vmul.f32 %v1401, 0.5
      %v1404 = vmul.f32 %v1401, 0.044715
      %v1405 = vmul.f32 %v1404, %v1401
      %v1406 = vmul.f32 %v1405, %v1401
      %v1407 = vadd.f32 %v1401, %v1406
      %v1408 = vmul.f32 %v1407, 0.7978846
      %v1409 = vtanh.pop %v1408
      %v1410 = vadd.f32 %v1409, 1.0
      %v1411 = vmul.f32 %v1403, %v1410
      %v1413 = vsel %vm477, %v1411, 0
      %1415 = vmatpush.msra.mxu0 0.0
      %1416 = vmatpush.msra.mxu0 0.0
      %1417 = vmatpush.msra.mxu0 0.0
      %1418 = vmatpush.msra.mxu0 0.0
      %1419 = vmatpush.msra.mxu0 0.0
      %1420 = vmatpush.msra.mxu0 0.0
      %1421 = vmatpush.msra.mxu0 0.0
      %1422 = vmatpush.msra.mxu0 0.0
      %1423 = vmatpush.msra.mxu0 0.0
      %1424 = vmatpush.msra.mxu0 0.0
      %1425 = vmatpush.msra.mxu0 0.0
      %1426 = vmatpush.msra.mxu0 0.0
      %v1427 = vand.u32 %v307, 4294901760
      %1428 = vmatpush.msra.mxu0 %v1427
      %v1429 = vand.u32 %v306, 4294901760
      %1430 = vmatpush.msra.mxu0 %v1429
      %v1431 = vand.u32 %v305, 4294901760
      %1432 = vmatpush.msra.mxu0 %v1431
      %v1433 = vand.u32 %v304, 4294901760
      %1434 = vmatpush.msra.mxu0 %v1433
      %v1435 = vand.u32 %v1413, 4294901760
      %v1436 = vsub.f32 %v1413, %v1435
      %v1437 = vand.u32 %v1436, 4294901760
      %v1438 = vsub.f32 %v1436, %v1437
      %v1439 = vand.u32 %v1438, 4294901760
      %1440 = vmatmul.f32.gmra.mxu0 %v1439
      %v1441 = vpop.f32.mrf.mxu0
      %v1442 = vadd.f32 %v675, %v1441
      %1443 = vdwg.mxu0
      %1444 = vmatpush.msra.mxu0 0.0
      %1445 = vmatpush.msra.mxu0 0.0
      %1446 = vmatpush.msra.mxu0 0.0
      %1447 = vmatpush.msra.mxu0 0.0
      %1448 = vmatpush.msra.mxu0 0.0
      %1449 = vmatpush.msra.mxu0 0.0
      %1450 = vmatpush.msra.mxu0 0.0
      %1451 = vmatpush.msra.mxu0 0.0
      %1452 = vmatpush.msra.mxu0 0.0
      %1453 = vmatpush.msra.mxu0 0.0
      %1454 = vmatpush.msra.mxu0 0.0
      %1455 = vmatpush.msra.mxu0 0.0
      %v1456 = vand.u32 %v307, 4294901760
      %v1457 = vsub.f32 %v307, %v1456
      %v1458 = vand.u32 %v1457, 4294901760
      %v1459 = vsub.f32 %v1457, %v1458
      %v1460 = vand.u32 %v1459, 4294901760
      %1461 = vmatpush.msra.mxu0 %v1460
      %v1462 = vand.u32 %v306, 4294901760
      %v1463 = vsub.f32 %v306, %v1462
      %v1464 = vand.u32 %v1463, 4294901760
      %v1465 = vsub.f32 %v1463, %v1464
      %v1466 = vand.u32 %v1465, 4294901760
      %1467 = vmatpush.msra.mxu0 %v1466
      %v1468 = vand.u32 %v305, 4294901760
      %v1469 = vsub.f32 %v305, %v1468
      %v1470 = vand.u32 %v1469, 4294901760
      %v1471 = vsub.f32 %v1469, %v1470
      %v1472 = vand.u32 %v1471, 4294901760
      %1473 = vmatpush.msra.mxu0 %v1472
      %v1474 = vand.u32 %v304, 4294901760
      %v1475 = vsub.f32 %v304, %v1474
      %v1476 = vand.u32 %v1475, 4294901760
      %v1477 = vsub.f32 %v1475, %v1476
      %v1478 = vand.u32 %v1477, 4294901760
      %1479 = vmatpush.msra.mxu0 %v1478
      %v1480 = vand.u32 %v1413, 4294901760
      %1481 = vmatmul.f32.gmra.mxu0 %v1480
      %v1482 = vpop.f32.mrf.mxu0
      %v1483 = vadd.f32 %v1442, %v1482
      %1484 = vdwg.mxu0
      %1485 = vmatpush.msra.mxu0 0.0
      %1486 = vmatpush.msra.mxu0 0.0
      %1487 = vmatpush.msra.mxu0 0.0
      %1488 = vmatpush.msra.mxu0 0.0
      %1489 = vmatpush.msra.mxu0 0.0
      %1490 = vmatpush.msra.mxu0 0.0
      %1491 = vmatpush.msra.mxu0 0.0
      %1492 = vmatpush.msra.mxu0 0.0
      %1493 = vmatpush.msra.mxu0 0.0
      %1494 = vmatpush.msra.mxu0 0.0
      %1495 = vmatpush.msra.mxu0 0.0
      %1496 = vmatpush.msra.mxu0 0.0
      %v1497 = vand.u32 %v307, 4294901760
      %v1498 = vsub.f32 %v307, %v1497
      %1499 = vmatpush.msra.mxu0 %v1498
      %v1500 = vand.u32 %v306, 4294901760
      %v1501 = vsub.f32 %v306, %v1500
      %1502 = vmatpush.msra.mxu0 %v1501
      %v1503 = vand.u32 %v305, 4294901760
      %v1504 = vsub.f32 %v305, %v1503
      %1505 = vmatpush.msra.mxu0 %v1504
      %v1506 = vand.u32 %v304, 4294901760
      %v1507 = vsub.f32 %v304, %v1506
      %1508 = vmatpush.msra.mxu0 %v1507
      %v1509 = vand.u32 %v1413, 4294901760
      %v1510 = vsub.f32 %v1413, %v1509
      %1511 = vmatmul.f32.gmra.mxu0 %v1510
      %v1512 = vpop.f32.mrf.mxu0
      %v1513 = vadd.f32 %v1483, %v1512
      %1514 = vdwg.mxu0
      %1515 = vmatpush.msra.mxu0 0.0
      %1516 = vmatpush.msra.mxu0 0.0
      %1517 = vmatpush.msra.mxu0 0.0
      %1518 = vmatpush.msra.mxu0 0.0
      %1519 = vmatpush.msra.mxu0 0.0
      %1520 = vmatpush.msra.mxu0 0.0
      %1521 = vmatpush.msra.mxu0 0.0
      %1522 = vmatpush.msra.mxu0 0.0
      %1523 = vmatpush.msra.mxu0 0.0
      %1524 = vmatpush.msra.mxu0 0.0
      %1525 = vmatpush.msra.mxu0 0.0
      %1526 = vmatpush.msra.mxu0 0.0
      %v1527 = vand.u32 %v307, 4294901760
      %1528 = vmatpush.msra.mxu0 %v1527
      %v1529 = vand.u32 %v306, 4294901760
      %1530 = vmatpush.msra.mxu0 %v1529
      %v1531 = vand.u32 %v305, 4294901760
      %1532 = vmatpush.msra.mxu0 %v1531
      %v1533 = vand.u32 %v304, 4294901760
      %1534 = vmatpush.msra.mxu0 %v1533
      %v1535 = vand.u32 %v1413, 4294901760
      %v1536 = vsub.f32 %v1413, %v1535
      %v1537 = vand.u32 %v1536, 4294901760
      %1538 = vmatmul.f32.gmra.mxu0 %v1537
      %v1539 = vpop.f32.mrf.mxu0
      %v1540 = vadd.f32 %v1513, %v1539
      %1541 = vdwg.mxu0
      %1542 = vmatpush.msra.mxu0 0.0
      %1543 = vmatpush.msra.mxu0 0.0
      %1544 = vmatpush.msra.mxu0 0.0
      %1545 = vmatpush.msra.mxu0 0.0
      %1546 = vmatpush.msra.mxu0 0.0
      %1547 = vmatpush.msra.mxu0 0.0
      %1548 = vmatpush.msra.mxu0 0.0
      %1549 = vmatpush.msra.mxu0 0.0
      %1550 = vmatpush.msra.mxu0 0.0
      %1551 = vmatpush.msra.mxu0 0.0
      %1552 = vmatpush.msra.mxu0 0.0
      %1553 = vmatpush.msra.mxu0 0.0
      %v1554 = vand.u32 %v307, 4294901760
      %v1555 = vsub.f32 %v307, %v1554
      %v1556 = vand.u32 %v1555, 4294901760
      %1557 = vmatpush.msra.mxu0 %v1556
      %v1558 = vand.u32 %v306, 4294901760
      %v1559 = vsub.f32 %v306, %v1558
      %v1560 = vand.u32 %v1559, 4294901760
      %1561 = vmatpush.msra.mxu0 %v1560
      %v1562 = vand.u32 %v305, 4294901760
      %v1563 = vsub.f32 %v305, %v1562
      %v1564 = vand.u32 %v1563, 4294901760
      %1565 = vmatpush.msra.mxu0 %v1564
      %v1566 = vand.u32 %v304, 4294901760
      %v1567 = vsub.f32 %v304, %v1566
      %v1568 = vand.u32 %v1567, 4294901760
      %1569 = vmatpush.msra.mxu0 %v1568
      %v1570 = vand.u32 %v1413, 4294901760
      %1571 = vmatmul.f32.gmra.mxu0 %v1570
      %v1572 = vpop.f32.mrf.mxu0
      %v1573 = vadd.f32 %v1540, %v1572
      %1574 = vdwg.mxu0
      %1575 = vmatpush.msra.mxu0 0.0
      %1576 = vmatpush.msra.mxu0 0.0
      %1577 = vmatpush.msra.mxu0 0.0
      %1578 = vmatpush.msra.mxu0 0.0
      %1579 = vmatpush.msra.mxu0 0.0
      %1580 = vmatpush.msra.mxu0 0.0
      %1581 = vmatpush.msra.mxu0 0.0
      %1582 = vmatpush.msra.mxu0 0.0
      %1583 = vmatpush.msra.mxu0 0.0
      %1584 = vmatpush.msra.mxu0 0.0
      %1585 = vmatpush.msra.mxu0 0.0
      %1586 = vmatpush.msra.mxu0 0.0
      %v1587 = vand.u32 %v307, 4294901760
      %1588 = vmatpush.msra.mxu0 %v1587
      %v1589 = vand.u32 %v306, 4294901760
      %1590 = vmatpush.msra.mxu0 %v1589
      %v1591 = vand.u32 %v305, 4294901760
      %1592 = vmatpush.msra.mxu0 %v1591
      %v1593 = vand.u32 %v304, 4294901760
      %1594 = vmatpush.msra.mxu0 %v1593
      %v1595 = vand.u32 %v1413, 4294901760
      %1596 = vmatmul.f32.gmra.mxu0 %v1595
      %v1597 = vpop.f32.mrf.mxu0
      %v1598 = vadd.f32 %v1573, %v1597
      %1599 = vdwg.mxu0
      %v1600 = vadd.f32 %v1598, %v906
      %v1601 = vsel %vm865, %v1600, 0.0
      %1602 = vadd.xlane.f32.xlu0 %v1601
      %v1603 = vpop.xlane.xlu0 %1602
      %v1604 = vmul.f32 %v1603, %v875
      %v1605 = vsub.f32 %v1600, %v1604
      %v1606 = vmul.f32 %v1605, %v1605
      %v1607 = vsel %vm865, %v1606, 0.0
      %1608 = vadd.xlane.f32.xlu0 %v1607
      %v1609 = vpop.xlane.xlu0 %1608
      %v1610 = vmul.f32 %v1609, %v875
      %v1611 = vadd.f32 %v1610, 1e-05
      %v1612 = vrsqrt.pop %v1611
      %v1613 = vmul.f32 %v1612, %v1611
      %v1614 = vmul.f32 %v1613, %v1612
      %v1615 = vmul.f32 0.5, %v1614
      %v1616 = vsub.f32 1.5, %v1615
      %v1617 = vmul.f32 %v1612, %v1616
      %vm1618 = vweird.f32 %v1611
      %vm1619 = vweird.f32 %v1612
      %vm1620 = vmor %vm1618, %vm1619
      %v1621 = vsel %vm1620, %v1612, %v1617
      %v1622 = vmul.f32 %v1605, %v1621
      %v1623 = vmul.f32 %v1622, %v895
      %v1624 = vadd.f32 %v1623, %v897
      %v1625 = vmul.f32 %v906, %v901
      %v1626 = vadd.f32 %v1625, %v1624
      %s1627 = scalar_lea.vmem %s283, 2
      %v1628 = vld [vmem:[%s1627] sm:$0x3]
      %v1629 = vadd.f32 %v1626, %v1628
      %s1630 = scalar_lea.vmem %s288, 2
      %v1631 = vld [vmem:[%s1630] sm:$0x3]
      %v1633 = vsel %vm317, %v1629, 0
      %1635 = vmatpush.msra.mxu0 0.0
      %1636 = vmatpush.msra.mxu0 0.0
      %1637 = vmatpush.msra.mxu0 0.0
      %1638 = vmatpush.msra.mxu0 0.0
      %1639 = vmatpush.msra.mxu0 0.0
      %1640 = vmatpush.msra.mxu0 0.0
      %1641 = vmatpush.msra.mxu0 0.0
      %1642 = vmatpush.msra.mxu0 0.0
      %1643 = vmatpush.msra.mxu0 0.0
      %1644 = vmatpush.msra.mxu0 0.0
      %1645 = vmatpush.msra.mxu0 0.0
      %1646 = vmatpush.msra.mxu0 0.0
      %1647 = vmatpush.msra.mxu0 0.0
      %1648 = vmatpush.msra.mxu0 0.0
      %1649 = vmatpush.msra.mxu0 0.0
      %v1650 = vand.u32 %v314, 4294901760
      %1651 = vmatpush.msra.mxu0 %v1650
      %v1652 = vand.u32 %v1633, 4294901760
      %v1653 = vsub.f32 %v1633, %v1652
      %v1654 = vand.u32 %v1653, 4294901760
      %v1655 = vsub.f32 %v1653, %v1654
      %v1656 = vand.u32 %v1655, 4294901760
      %1657 = vmatmul.f32.gmra.mxu0 %v1656
      %v1658 = vpop.f32.mrf.mxu0
      %v1659 = vadd.f32 0.0, %v1658
      %1660 = vdwg.mxu0
      %1661 = vmatpush.msra.mxu0 0.0
      %1662 = vmatpush.msra.mxu0 0.0
      %1663 = vmatpush.msra.mxu0 0.0
      %1664 = vmatpush.msra.mxu0 0.0
      %1665 = vmatpush.msra.mxu0 0.0
      %1666 = vmatpush.msra.mxu0 0.0
      %1667 = vmatpush.msra.mxu0 0.0
      %1668 = vmatpush.msra.mxu0 0.0
      %1669 = vmatpush.msra.mxu0 0.0
      %1670 = vmatpush.msra.mxu0 0.0
      %1671 = vmatpush.msra.mxu0 0.0
      %1672 = vmatpush.msra.mxu0 0.0
      %1673 = vmatpush.msra.mxu0 0.0
      %1674 = vmatpush.msra.mxu0 0.0
      %1675 = vmatpush.msra.mxu0 0.0
      %v1676 = vand.u32 %v314, 4294901760
      %v1677 = vsub.f32 %v314, %v1676
      %v1678 = vand.u32 %v1677, 4294901760
      %v1679 = vsub.f32 %v1677, %v1678
      %v1680 = vand.u32 %v1679, 4294901760
      %1681 = vmatpush.msra.mxu0 %v1680
      %v1682 = vand.u32 %v1633, 4294901760
      %1683 = vmatmul.f32.gmra.mxu0 %v1682
      %v1684 = vpop.f32.mrf.mxu0
      %v1685 = vadd.f32 %v1659, %v1684
      %1686 = vdwg.mxu0
      %1687 = vmatpush.msra.mxu0 0.0
      %1688 = vmatpush.msra.mxu0 0.0
      %1689 = vmatpush.msra.mxu0 0.0
      %1690 = vmatpush.msra.mxu0 0.0
      %1691 = vmatpush.msra.mxu0 0.0
      %1692 = vmatpush.msra.mxu0 0.0
      %1693 = vmatpush.msra.mxu0 0.0
      %1694 = vmatpush.msra.mxu0 0.0
      %1695 = vmatpush.msra.mxu0 0.0
      %1696 = vmatpush.msra.mxu0 0.0
      %1697 = vmatpush.msra.mxu0 0.0
      %1698 = vmatpush.msra.mxu0 0.0
      %1699 = vmatpush.msra.mxu0 0.0
      %1700 = vmatpush.msra.mxu0 0.0
      %1701 = vmatpush.msra.mxu0 0.0
      %v1702 = vand.u32 %v314, 4294901760
      %v1703 = vsub.f32 %v314, %v1702
      %1704 = vmatpush.msra.mxu0 %v1703
      %v1705 = vand.u32 %v1633, 4294901760
      %v1706 = vsub.f32 %v1633, %v1705
      %1707 = vmatmul.f32.gmra.mxu0 %v1706
      %v1708 = vpop.f32.mrf.mxu0
      %v1709 = vadd.f32 %v1685, %v1708
      %1710 = vdwg.mxu0
      %1711 = vmatpush.msra.mxu0 0.0
      %1712 = vmatpush.msra.mxu0 0.0
      %1713 = vmatpush.msra.mxu0 0.0
      %1714 = vmatpush.msra.mxu0 0.0
      %1715 = vmatpush.msra.mxu0 0.0
      %1716 = vmatpush.msra.mxu0 0.0
      %1717 = vmatpush.msra.mxu0 0.0
      %1718 = vmatpush.msra.mxu0 0.0
      %1719 = vmatpush.msra.mxu0 0.0
      %1720 = vmatpush.msra.mxu0 0.0
      %1721 = vmatpush.msra.mxu0 0.0
      %1722 = vmatpush.msra.mxu0 0.0
      %1723 = vmatpush.msra.mxu0 0.0
      %1724 = vmatpush.msra.mxu0 0.0
      %1725 = vmatpush.msra.mxu0 0.0
      %v1726 = vand.u32 %v314, 4294901760
      %1727 = vmatpush.msra.mxu0 %v1726
      %v1728 = vand.u32 %v1633, 4294901760
      %v1729 = vsub.f32 %v1633, %v1728
      %v1730 = vand.u32 %v1729, 4294901760
      %1731 = vmatmul.f32.gmra.mxu0 %v1730
      %v1732 = vpop.f32.mrf.mxu0
      %v1733 = vadd.f32 %v1709, %v1732
      %1734 = vdwg.mxu0
      %1735 = vmatpush.msra.mxu0 0.0
      %1736 = vmatpush.msra.mxu0 0.0
      %1737 = vmatpush.msra.mxu0 0.0
      %1738 = vmatpush.msra.mxu0 0.0
      %1739 = vmatpush.msra.mxu0 0.0
      %1740 = vmatpush.msra.mxu0 0.0
      %1741 = vmatpush.msra.mxu0 0.0
      %1742 = vmatpush.msra.mxu0 0.0
      %1743 = vmatpush.msra.mxu0 0.0
      %1744 = vmatpush.msra.mxu0 0.0
      %1745 = vmatpush.msra.mxu0 0.0
      %1746 = vmatpush.msra.mxu0 0.0
      %1747 = vmatpush.msra.mxu0 0.0
      %1748 = vmatpush.msra.mxu0 0.0
      %1749 = vmatpush.msra.mxu0 0.0
      %v1750 = vand.u32 %v314, 4294901760
      %v1751 = vsub.f32 %v314, %v1750
      %v1752 = vand.u32 %v1751, 4294901760
      %1753 = vmatpush.msra.mxu0 %v1752
      %v1754 = vand.u32 %v1633, 4294901760
      %1755 = vmatmul.f32.gmra.mxu0 %v1754
      %v1756 = vpop.f32.mrf.mxu0
      %v1757 = vadd.f32 %v1733, %v1756
      %1758 = vdwg.mxu0
      %1759 = vmatpush.msra.mxu0 0.0
      %1760 = vmatpush.msra.mxu0 0.0
      %1761 = vmatpush.msra.mxu0 0.0
      %1762 = vmatpush.msra.mxu0 0.0
      %1763 = vmatpush.msra.mxu0 0.0
      %1764 = vmatpush.msra.mxu0 0.0
      %1765 = vmatpush.msra.mxu0 0.0
      %1766 = vmatpush.msra.mxu0 0.0
      %1767 = vmatpush.msra.mxu0 0.0
      %1768 = vmatpush.msra.mxu0 0.0
      %1769 = vmatpush.msra.mxu0 0.0
      %1770 = vmatpush.msra.mxu0 0.0
      %1771 = vmatpush.msra.mxu0 0.0
      %1772 = vmatpush.msra.mxu0 0.0
      %1773 = vmatpush.msra.mxu0 0.0
      %v1774 = vand.u32 %v314, 4294901760
      %1775 = vmatpush.msra.mxu0 %v1774
      %v1776 = vand.u32 %v1633, 4294901760
      %1777 = vmatmul.f32.gmra.mxu0 %v1776
      %v1778 = vpop.f32.mrf.mxu0
      %v1779 = vadd.f32 %v1757, %v1778
      %1780 = vdwg.mxu0
      %v1781 = vadd.f32 %v1631, %v1779
      %s1782 = scalar_lea.vmem %s298, 2
      %1783 = vst.msk [vmem:[%s1782] sm:$0x3] %vm1058, %v1781
      %1784 = vmatpush.msra.mxu0 0.0
      %1785 = vmatpush.msra.mxu0 0.0
      %1786 = vmatpush.msra.mxu0 0.0
      %1787 = vmatpush.msra.mxu0 0.0
      %1788 = vmatpush.msra.mxu0 0.0
      %1789 = vmatpush.msra.mxu0 0.0
      %1790 = vmatpush.msra.mxu0 0.0
      %1791 = vmatpush.msra.mxu0 0.0
      %1792 = vmatpush.msra.mxu0 0.0
      %1793 = vmatpush.msra.mxu0 0.0
      %1794 = vmatpush.msra.mxu0 0.0
      %1795 = vmatpush.msra.mxu0 0.0
      %1796 = vmatpush.msra.mxu0 0.0
      %1797 = vmatpush.msra.mxu0 0.0
      %1798 = vmatpush.msra.mxu0 0.0
      %v1799 = vand.u32 %v299, 4294901760
      %1800 = vmatpush.msra.mxu0 %v1799
      %v1801 = vand.u32 %v1633, 4294901760
      %v1802 = vsub.f32 %v1633, %v1801
      %v1803 = vand.u32 %v1802, 4294901760
      %v1804 = vsub.f32 %v1802, %v1803
      %v1805 = vand.u32 %v1804, 4294901760
      %1806 = vmatmul.f32.gmra.mxu0 %v1805
      %v1807 = vpop.f32.mrf.mxu0
      %v1808 = vadd.f32 %v316, %v1807
      %1809 = vdwg.mxu0
      %1810 = vmatpush.msra.mxu0 0.0
      %1811 = vmatpush.msra.mxu0 0.0
      %1812 = vmatpush.msra.mxu0 0.0
      %1813 = vmatpush.msra.mxu0 0.0
      %1814 = vmatpush.msra.mxu0 0.0
      %1815 = vmatpush.msra.mxu0 0.0
      %1816 = vmatpush.msra.mxu0 0.0
      %1817 = vmatpush.msra.mxu0 0.0
      %1818 = vmatpush.msra.mxu0 0.0
      %1819 = vmatpush.msra.mxu0 0.0
      %1820 = vmatpush.msra.mxu0 0.0
      %1821 = vmatpush.msra.mxu0 0.0
      %1822 = vmatpush.msra.mxu0 0.0
      %1823 = vmatpush.msra.mxu0 0.0
      %1824 = vmatpush.msra.mxu0 0.0
      %v1825 = vand.u32 %v299, 4294901760
      %v1826 = vsub.f32 %v299, %v1825
      %v1827 = vand.u32 %v1826, 4294901760
      %v1828 = vsub.f32 %v1826, %v1827
      %v1829 = vand.u32 %v1828, 4294901760
      %1830 = vmatpush.msra.mxu0 %v1829
      %v1831 = vand.u32 %v1633, 4294901760
      %1832 = vmatmul.f32.gmra.mxu0 %v1831
      %v1833 = vpop.f32.mrf.mxu0
      %v1834 = vadd.f32 %v1808, %v1833
      %1835 = vdwg.mxu0
      %1836 = vmatpush.msra.mxu0 0.0
      %1837 = vmatpush.msra.mxu0 0.0
      %1838 = vmatpush.msra.mxu0 0.0
      %1839 = vmatpush.msra.mxu0 0.0
      %1840 = vmatpush.msra.mxu0 0.0
      %1841 = vmatpush.msra.mxu0 0.0
      %1842 = vmatpush.msra.mxu0 0.0
      %1843 = vmatpush.msra.mxu0 0.0
      %1844 = vmatpush.msra.mxu0 0.0
      %1845 = vmatpush.msra.mxu0 0.0
      %1846 = vmatpush.msra.mxu0 0.0
      %1847 = vmatpush.msra.mxu0 0.0
      %1848 = vmatpush.msra.mxu0 0.0
      %1849 = vmatpush.msra.mxu0 0.0
      %1850 = vmatpush.msra.mxu0 0.0
      %v1851 = vand.u32 %v299, 4294901760
      %v1852 = vsub.f32 %v299, %v1851
      %1853 = vmatpush.msra.mxu0 %v1852
      %v1854 = vand.u32 %v1633, 4294901760
      %v1855 = vsub.f32 %v1633, %v1854
      %1856 = vmatmul.f32.gmra.mxu0 %v1855
      %v1857 = vpop.f32.mrf.mxu0
      %v1858 = vadd.f32 %v1834, %v1857
      %1859 = vdwg.mxu0
      %1860 = vmatpush.msra.mxu0 0.0
      %1861 = vmatpush.msra.mxu0 0.0
      %1862 = vmatpush.msra.mxu0 0.0
      %1863 = vmatpush.msra.mxu0 0.0
      %1864 = vmatpush.msra.mxu0 0.0
      %1865 = vmatpush.msra.mxu0 0.0
      %1866 = vmatpush.msra.mxu0 0.0
      %1867 = vmatpush.msra.mxu0 0.0
      %1868 = vmatpush.msra.mxu0 0.0
      %1869 = vmatpush.msra.mxu0 0.0
      %1870 = vmatpush.msra.mxu0 0.0
      %1871 = vmatpush.msra.mxu0 0.0
      %1872 = vmatpush.msra.mxu0 0.0
      %1873 = vmatpush.msra.mxu0 0.0
      %1874 = vmatpush.msra.mxu0 0.0
      %v1875 = vand.u32 %v299, 4294901760
      %1876 = vmatpush.msra.mxu0 %v1875
      %v1877 = vand.u32 %v1633, 4294901760
      %v1878 = vsub.f32 %v1633, %v1877
      %v1879 = vand.u32 %v1878, 4294901760
      %1880 = vmatmul.f32.gmra.mxu0 %v1879
      %v1881 = vpop.f32.mrf.mxu0
      %v1882 = vadd.f32 %v1858, %v1881
      %1883 = vdwg.mxu0
      %1884 = vmatpush.msra.mxu0 0.0
      %1885 = vmatpush.msra.mxu0 0.0
      %1886 = vmatpush.msra.mxu0 0.0
      %1887 = vmatpush.msra.mxu0 0.0
      %1888 = vmatpush.msra.mxu0 0.0
      %1889 = vmatpush.msra.mxu0 0.0
      %1890 = vmatpush.msra.mxu0 0.0
      %1891 = vmatpush.msra.mxu0 0.0
      %1892 = vmatpush.msra.mxu0 0.0
      %1893 = vmatpush.msra.mxu0 0.0
      %1894 = vmatpush.msra.mxu0 0.0
      %1895 = vmatpush.msra.mxu0 0.0
      %1896 = vmatpush.msra.mxu0 0.0
      %1897 = vmatpush.msra.mxu0 0.0
      %1898 = vmatpush.msra.mxu0 0.0
      %v1899 = vand.u32 %v299, 4294901760
      %v1900 = vsub.f32 %v299, %v1899
      %v1901 = vand.u32 %v1900, 4294901760
      %1902 = vmatpush.msra.mxu0 %v1901
      %v1903 = vand.u32 %v1633, 4294901760
      %1904 = vmatmul.f32.gmra.mxu0 %v1903
      %v1905 = vpop.f32.mrf.mxu0
      %v1906 = vadd.f32 %v1882, %v1905
      %1907 = vdwg.mxu0
      %1908 = vmatpush.msra.mxu0 0.0
      %1909 = vmatpush.msra.mxu0 0.0
      %1910 = vmatpush.msra.mxu0 0.0
      %1911 = vmatpush.msra.mxu0 0.0
      %1912 = vmatpush.msra.mxu0 0.0
      %1913 = vmatpush.msra.mxu0 0.0
      %1914 = vmatpush.msra.mxu0 0.0
      %1915 = vmatpush.msra.mxu0 0.0
      %1916 = vmatpush.msra.mxu0 0.0
      %1917 = vmatpush.msra.mxu0 0.0
      %1918 = vmatpush.msra.mxu0 0.0
      %1919 = vmatpush.msra.mxu0 0.0
      %1920 = vmatpush.msra.mxu0 0.0
      %1921 = vmatpush.msra.mxu0 0.0
      %1922 = vmatpush.msra.mxu0 0.0
      %v1923 = vand.u32 %v299, 4294901760
      %1924 = vmatpush.msra.mxu0 %v1923
      %v1925 = vand.u32 %v1633, 4294901760
      %1926 = vmatmul.f32.gmra.mxu0 %v1925
      %v1927 = vpop.f32.mrf.mxu0
      %v1928 = vadd.f32 %v1906, %v1927
      %1929 = vdwg.mxu0
      %v1930 = vmul.f32 %v1928, 0.5
      %v1931 = vmul.f32 %v1928, 0.044715
      %v1932 = vmul.f32 %v1931, %v1928
      %v1933 = vmul.f32 %v1932, %v1928
      %v1934 = vadd.f32 %v1928, %v1933
      %v1935 = vmul.f32 %v1934, 0.7978846
      %v1936 = vtanh.pop %v1935
      %v1937 = vadd.f32 %v1936, 1.0
      %v1938 = vmul.f32 %v1930, %v1937
      %v1940 = vsel %vm477, %v1938, 0
      %1942 = vmatpush.msra.mxu0 0.0
      %1943 = vmatpush.msra.mxu0 0.0
      %1944 = vmatpush.msra.mxu0 0.0
      %1945 = vmatpush.msra.mxu0 0.0
      %1946 = vmatpush.msra.mxu0 0.0
      %1947 = vmatpush.msra.mxu0 0.0
      %1948 = vmatpush.msra.mxu0 0.0
      %1949 = vmatpush.msra.mxu0 0.0
      %1950 = vmatpush.msra.mxu0 0.0
      %1951 = vmatpush.msra.mxu0 0.0
      %1952 = vmatpush.msra.mxu0 0.0
      %1953 = vmatpush.msra.mxu0 0.0
      %v1954 = vand.u32 %v303, 4294901760
      %1955 = vmatpush.msra.mxu0 %v1954
      %v1956 = vand.u32 %v302, 4294901760
      %1957 = vmatpush.msra.mxu0 %v1956
      %v1958 = vand.u32 %v301, 4294901760
      %1959 = vmatpush.msra.mxu0 %v1958
      %v1960 = vand.u32 %v300, 4294901760
      %1961 = vmatpush.msra.mxu0 %v1960
      %v1962 = vand.u32 %v1940, 4294901760
      %v1963 = vsub.f32 %v1940, %v1962
      %v1964 = vand.u32 %v1963, 4294901760
      %v1965 = vsub.f32 %v1963, %v1964
      %v1966 = vand.u32 %v1965, 4294901760
      %1967 = vmatmul.f32.gmra.mxu0 %v1966
      %v1968 = vpop.f32.mrf.mxu0
      %v1969 = vadd.f32 %v476, %v1968
      %1970 = vdwg.mxu0
      %1971 = vmatpush.msra.mxu0 0.0
      %1972 = vmatpush.msra.mxu0 0.0
      %1973 = vmatpush.msra.mxu0 0.0
      %1974 = vmatpush.msra.mxu0 0.0
      %1975 = vmatpush.msra.mxu0 0.0
      %1976 = vmatpush.msra.mxu0 0.0
      %1977 = vmatpush.msra.mxu0 0.0
      %1978 = vmatpush.msra.mxu0 0.0
      %1979 = vmatpush.msra.mxu0 0.0
      %1980 = vmatpush.msra.mxu0 0.0
      %1981 = vmatpush.msra.mxu0 0.0
      %1982 = vmatpush.msra.mxu0 0.0
      %v1983 = vand.u32 %v303, 4294901760
      %v1984 = vsub.f32 %v303, %v1983
      %v1985 = vand.u32 %v1984, 4294901760
      %v1986 = vsub.f32 %v1984, %v1985
      %v1987 = vand.u32 %v1986, 4294901760
      %1988 = vmatpush.msra.mxu0 %v1987
      %v1989 = vand.u32 %v302, 4294901760
      %v1990 = vsub.f32 %v302, %v1989
      %v1991 = vand.u32 %v1990, 4294901760
      %v1992 = vsub.f32 %v1990, %v1991
      %v1993 = vand.u32 %v1992, 4294901760
      %1994 = vmatpush.msra.mxu0 %v1993
      %v1995 = vand.u32 %v301, 4294901760
      %v1996 = vsub.f32 %v301, %v1995
      %v1997 = vand.u32 %v1996, 4294901760
      %v1998 = vsub.f32 %v1996, %v1997
      %v1999 = vand.u32 %v1998, 4294901760
      %2000 = vmatpush.msra.mxu0 %v1999
      %v2001 = vand.u32 %v300, 4294901760
      %v2002 = vsub.f32 %v300, %v2001
      %v2003 = vand.u32 %v2002, 4294901760
      %v2004 = vsub.f32 %v2002, %v2003
      %v2005 = vand.u32 %v2004, 4294901760
      %2006 = vmatpush.msra.mxu0 %v2005
      %v2007 = vand.u32 %v1940, 4294901760
      %2008 = vmatmul.f32.gmra.mxu0 %v2007
      %v2009 = vpop.f32.mrf.mxu0
      %v2010 = vadd.f32 %v1969, %v2009
      %2011 = vdwg.mxu0
      %2012 = vmatpush.msra.mxu0 0.0
      %2013 = vmatpush.msra.mxu0 0.0
      %2014 = vmatpush.msra.mxu0 0.0
      %2015 = vmatpush.msra.mxu0 0.0
      %2016 = vmatpush.msra.mxu0 0.0
      %2017 = vmatpush.msra.mxu0 0.0
      %2018 = vmatpush.msra.mxu0 0.0
      %2019 = vmatpush.msra.mxu0 0.0
      %2020 = vmatpush.msra.mxu0 0.0
      %2021 = vmatpush.msra.mxu0 0.0
      %2022 = vmatpush.msra.mxu0 0.0
      %2023 = vmatpush.msra.mxu0 0.0
      %v2024 = vand.u32 %v303, 4294901760
      %v2025 = vsub.f32 %v303, %v2024
      %2026 = vmatpush.msra.mxu0 %v2025
      %v2027 = vand.u32 %v302, 4294901760
      %v2028 = vsub.f32 %v302, %v2027
      %2029 = vmatpush.msra.mxu0 %v2028
      %v2030 = vand.u32 %v301, 4294901760
      %v2031 = vsub.f32 %v301, %v2030
      %2032 = vmatpush.msra.mxu0 %v2031
      %v2033 = vand.u32 %v300, 4294901760
      %v2034 = vsub.f32 %v300, %v2033
      %2035 = vmatpush.msra.mxu0 %v2034
      %v2036 = vand.u32 %v1940, 4294901760
      %v2037 = vsub.f32 %v1940, %v2036
      %2038 = vmatmul.f32.gmra.mxu0 %v2037
      %v2039 = vpop.f32.mrf.mxu0
      %v2040 = vadd.f32 %v2010, %v2039
      %2041 = vdwg.mxu0
      %2042 = vmatpush.msra.mxu0 0.0
      %2043 = vmatpush.msra.mxu0 0.0
      %2044 = vmatpush.msra.mxu0 0.0
      %2045 = vmatpush.msra.mxu0 0.0
      %2046 = vmatpush.msra.mxu0 0.0
      %2047 = vmatpush.msra.mxu0 0.0
      %2048 = vmatpush.msra.mxu0 0.0
      %2049 = vmatpush.msra.mxu0 0.0
      %2050 = vmatpush.msra.mxu0 0.0
      %2051 = vmatpush.msra.mxu0 0.0
      %2052 = vmatpush.msra.mxu0 0.0
      %2053 = vmatpush.msra.mxu0 0.0
      %v2054 = vand.u32 %v303, 4294901760
      %2055 = vmatpush.msra.mxu0 %v2054
      %v2056 = vand.u32 %v302, 4294901760
      %2057 = vmatpush.msra.mxu0 %v2056
      %v2058 = vand.u32 %v301, 4294901760
      %2059 = vmatpush.msra.mxu0 %v2058
      %v2060 = vand.u32 %v300, 4294901760
      %2061 = vmatpush.msra.mxu0 %v2060
      %v2062 = vand.u32 %v1940, 4294901760
      %v2063 = vsub.f32 %v1940, %v2062
      %v2064 = vand.u32 %v2063, 4294901760
      %2065 = vmatmul.f32.gmra.mxu0 %v2064
      %v2066 = vpop.f32.mrf.mxu0
      %v2067 = vadd.f32 %v2040, %v2066
      %2068 = vdwg.mxu0
      %2069 = vmatpush.msra.mxu0 0.0
      %2070 = vmatpush.msra.mxu0 0.0
      %2071 = vmatpush.msra.mxu0 0.0
      %2072 = vmatpush.msra.mxu0 0.0
      %2073 = vmatpush.msra.mxu0 0.0
      %2074 = vmatpush.msra.mxu0 0.0
      %2075 = vmatpush.msra.mxu0 0.0
      %2076 = vmatpush.msra.mxu0 0.0
      %2077 = vmatpush.msra.mxu0 0.0
      %2078 = vmatpush.msra.mxu0 0.0
      %2079 = vmatpush.msra.mxu0 0.0
      %2080 = vmatpush.msra.mxu0 0.0
      %v2081 = vand.u32 %v303, 4294901760
      %v2082 = vsub.f32 %v303, %v2081
      %v2083 = vand.u32 %v2082, 4294901760
      %2084 = vmatpush.msra.mxu0 %v2083
      %v2085 = vand.u32 %v302, 4294901760
      %v2086 = vsub.f32 %v302, %v2085
      %v2087 = vand.u32 %v2086, 4294901760
      %2088 = vmatpush.msra.mxu0 %v2087
      %v2089 = vand.u32 %v301, 4294901760
      %v2090 = vsub.f32 %v301, %v2089
      %v2091 = vand.u32 %v2090, 4294901760
      %2092 = vmatpush.msra.mxu0 %v2091
      %v2093 = vand.u32 %v300, 4294901760
      %v2094 = vsub.f32 %v300, %v2093
      %v2095 = vand.u32 %v2094, 4294901760
      %2096 = vmatpush.msra.mxu0 %v2095
      %v2097 = vand.u32 %v1940, 4294901760
      %2098 = vmatmul.f32.gmra.mxu0 %v2097
      %v2099 = vpop.f32.mrf.mxu0
      %v2100 = vadd.f32 %v2067, %v2099
      %2101 = vdwg.mxu0
      %2102 = vmatpush.msra.mxu0 0.0
      %2103 = vmatpush.msra.mxu0 0.0
      %2104 = vmatpush.msra.mxu0 0.0
      %2105 = vmatpush.msra.mxu0 0.0
      %2106 = vmatpush.msra.mxu0 0.0
      %2107 = vmatpush.msra.mxu0 0.0
      %2108 = vmatpush.msra.mxu0 0.0
      %2109 = vmatpush.msra.mxu0 0.0
      %2110 = vmatpush.msra.mxu0 0.0
      %2111 = vmatpush.msra.mxu0 0.0
      %2112 = vmatpush.msra.mxu0 0.0
      %2113 = vmatpush.msra.mxu0 0.0
      %v2114 = vand.u32 %v303, 4294901760
      %2115 = vmatpush.msra.mxu0 %v2114
      %v2116 = vand.u32 %v302, 4294901760
      %2117 = vmatpush.msra.mxu0 %v2116
      %v2118 = vand.u32 %v301, 4294901760
      %2119 = vmatpush.msra.mxu0 %v2118
      %v2120 = vand.u32 %v300, 4294901760
      %2121 = vmatpush.msra.mxu0 %v2120
      %v2122 = vand.u32 %v1940, 4294901760
      %2123 = vmatmul.f32.gmra.mxu0 %v2122
      %v2124 = vpop.f32.mrf.mxu0
      %v2125 = vadd.f32 %v2100, %v2124
      %2126 = vdwg.mxu0
      %v2127 = vmul.f32 %v2125, 0.5
      %v2128 = vmul.f32 %v2125, 0.044715
      %v2129 = vmul.f32 %v2128, %v2125
      %v2130 = vmul.f32 %v2129, %v2125
      %v2131 = vadd.f32 %v2125, %v2130
      %v2132 = vmul.f32 %v2131, 0.7978846
      %v2133 = vtanh.pop %v2132
      %v2134 = vadd.f32 %v2133, 1.0
      %v2135 = vmul.f32 %v2127, %v2134
      %v2137 = vsel %vm477, %v2135, 0
      %2139 = vmatpush.msra.mxu0 0.0
      %2140 = vmatpush.msra.mxu0 0.0
      %2141 = vmatpush.msra.mxu0 0.0
      %2142 = vmatpush.msra.mxu0 0.0
      %2143 = vmatpush.msra.mxu0 0.0
      %2144 = vmatpush.msra.mxu0 0.0
      %2145 = vmatpush.msra.mxu0 0.0
      %2146 = vmatpush.msra.mxu0 0.0
      %2147 = vmatpush.msra.mxu0 0.0
      %2148 = vmatpush.msra.mxu0 0.0
      %2149 = vmatpush.msra.mxu0 0.0
      %2150 = vmatpush.msra.mxu0 0.0
      %v2151 = vand.u32 %v307, 4294901760
      %2152 = vmatpush.msra.mxu0 %v2151
      %v2153 = vand.u32 %v306, 4294901760
      %2154 = vmatpush.msra.mxu0 %v2153
      %v2155 = vand.u32 %v305, 4294901760
      %2156 = vmatpush.msra.mxu0 %v2155
      %v2157 = vand.u32 %v304, 4294901760
      %2158 = vmatpush.msra.mxu0 %v2157
      %v2159 = vand.u32 %v2137, 4294901760
      %v2160 = vsub.f32 %v2137, %v2159
      %v2161 = vand.u32 %v2160, 4294901760
      %v2162 = vsub.f32 %v2160, %v2161
      %v2163 = vand.u32 %v2162, 4294901760
      %2164 = vmatmul.f32.gmra.mxu0 %v2163
      %v2165 = vpop.f32.mrf.mxu0
      %v2166 = vadd.f32 %v675, %v2165
      %2167 = vdwg.mxu0
      %2168 = vmatpush.msra.mxu0 0.0
      %2169 = vmatpush.msra.mxu0 0.0
      %2170 = vmatpush.msra.mxu0 0.0
      %2171 = vmatpush.msra.mxu0 0.0
      %2172 = vmatpush.msra.mxu0 0.0
      %2173 = vmatpush.msra.mxu0 0.0
      %2174 = vmatpush.msra.mxu0 0.0
      %2175 = vmatpush.msra.mxu0 0.0
      %2176 = vmatpush.msra.mxu0 0.0
      %2177 = vmatpush.msra.mxu0 0.0
      %2178 = vmatpush.msra.mxu0 0.0
      %2179 = vmatpush.msra.mxu0 0.0
      %v2180 = vand.u32 %v307, 4294901760
      %v2181 = vsub.f32 %v307, %v2180
      %v2182 = vand.u32 %v2181, 4294901760
      %v2183 = vsub.f32 %v2181, %v2182
      %v2184 = vand.u32 %v2183, 4294901760
      %2185 = vmatpush.msra.mxu0 %v2184
      %v2186 = vand.u32 %v306, 4294901760
      %v2187 = vsub.f32 %v306, %v2186
      %v2188 = vand.u32 %v2187, 4294901760
      %v2189 = vsub.f32 %v2187, %v2188
      %v2190 = vand.u32 %v2189, 4294901760
      %2191 = vmatpush.msra.mxu0 %v2190
      %v2192 = vand.u32 %v305, 4294901760
      %v2193 = vsub.f32 %v305, %v2192
      %v2194 = vand.u32 %v2193, 4294901760
      %v2195 = vsub.f32 %v2193, %v2194
      %v2196 = vand.u32 %v2195, 4294901760
      %2197 = vmatpush.msra.mxu0 %v2196
      %v2198 = vand.u32 %v304, 4294901760
      %v2199 = vsub.f32 %v304, %v2198
      %v2200 = vand.u32 %v2199, 4294901760
      %v2201 = vsub.f32 %v2199, %v2200
      %v2202 = vand.u32 %v2201, 4294901760
      %2203 = vmatpush.msra.mxu0 %v2202
      %v2204 = vand.u32 %v2137, 4294901760
      %2205 = vmatmul.f32.gmra.mxu0 %v2204
      %v2206 = vpop.f32.mrf.mxu0
      %v2207 = vadd.f32 %v2166, %v2206
      %2208 = vdwg.mxu0
      %2209 = vmatpush.msra.mxu0 0.0
      %2210 = vmatpush.msra.mxu0 0.0
      %2211 = vmatpush.msra.mxu0 0.0
      %2212 = vmatpush.msra.mxu0 0.0
      %2213 = vmatpush.msra.mxu0 0.0
      %2214 = vmatpush.msra.mxu0 0.0
      %2215 = vmatpush.msra.mxu0 0.0
      %2216 = vmatpush.msra.mxu0 0.0
      %2217 = vmatpush.msra.mxu0 0.0
      %2218 = vmatpush.msra.mxu0 0.0
      %2219 = vmatpush.msra.mxu0 0.0
      %2220 = vmatpush.msra.mxu0 0.0
      %v2221 = vand.u32 %v307, 4294901760
      %v2222 = vsub.f32 %v307, %v2221
      %2223 = vmatpush.msra.mxu0 %v2222
      %v2224 = vand.u32 %v306, 4294901760
      %v2225 = vsub.f32 %v306, %v2224
      %2226 = vmatpush.msra.mxu0 %v2225
      %v2227 = vand.u32 %v305, 4294901760
      %v2228 = vsub.f32 %v305, %v2227
      %2229 = vmatpush.msra.mxu0 %v2228
      %v2230 = vand.u32 %v304, 4294901760
      %v2231 = vsub.f32 %v304, %v2230
      %2232 = vmatpush.msra.mxu0 %v2231
      %v2233 = vand.u32 %v2137, 4294901760
      %v2234 = vsub.f32 %v2137, %v2233
      %2235 = vmatmul.f32.gmra.mxu0 %v2234
      %v2236 = vpop.f32.mrf.mxu0
      %v2237 = vadd.f32 %v2207, %v2236
      %2238 = vdwg.mxu0
      %2239 = vmatpush.msra.mxu0 0.0
      %2240 = vmatpush.msra.mxu0 0.0
      %2241 = vmatpush.msra.mxu0 0.0
      %2242 = vmatpush.msra.mxu0 0.0
      %2243 = vmatpush.msra.mxu0 0.0
      %2244 = vmatpush.msra.mxu0 0.0
      %2245 = vmatpush.msra.mxu0 0.0
      %2246 = vmatpush.msra.mxu0 0.0
      %2247 = vmatpush.msra.mxu0 0.0
      %2248 = vmatpush.msra.mxu0 0.0
      %2249 = vmatpush.msra.mxu0 0.0
      %2250 = vmatpush.msra.mxu0 0.0
      %v2251 = vand.u32 %v307, 4294901760
      %2252 = vmatpush.msra.mxu0 %v2251
      %v2253 = vand.u32 %v306, 4294901760
      %2254 = vmatpush.msra.mxu0 %v2253
      %v2255 = vand.u32 %v305, 4294901760
      %2256 = vmatpush.msra.mxu0 %v2255
      %v2257 = vand.u32 %v304, 4294901760
      %2258 = vmatpush.msra.mxu0 %v2257
      %v2259 = vand.u32 %v2137, 4294901760
      %v2260 = vsub.f32 %v2137, %v2259
      %v2261 = vand.u32 %v2260, 4294901760
      %2262 = vmatmul.f32.gmra.mxu0 %v2261
      %v2263 = vpop.f32.mrf.mxu0
      %v2264 = vadd.f32 %v2237, %v2263
      %2265 = vdwg.mxu0
      %2266 = vmatpush.msra.mxu0 0.0
      %2267 = vmatpush.msra.mxu0 0.0
      %2268 = vmatpush.msra.mxu0 0.0
      %2269 = vmatpush.msra.mxu0 0.0
      %2270 = vmatpush.msra.mxu0 0.0
      %2271 = vmatpush.msra.mxu0 0.0
      %2272 = vmatpush.msra.mxu0 0.0
      %2273 = vmatpush.msra.mxu0 0.0
      %2274 = vmatpush.msra.mxu0 0.0
      %2275 = vmatpush.msra.mxu0 0.0
      %2276 = vmatpush.msra.mxu0 0.0
      %2277 = vmatpush.msra.mxu0 0.0
      %v2278 = vand.u32 %v307, 4294901760
      %v2279 = vsub.f32 %v307, %v2278
      %v2280 = vand.u32 %v2279, 4294901760
      %2281 = vmatpush.msra.mxu0 %v2280
      %v2282 = vand.u32 %v306, 4294901760
      %v2283 = vsub.f32 %v306, %v2282
      %v2284 = vand.u32 %v2283, 4294901760
      %2285 = vmatpush.msra.mxu0 %v2284
      %v2286 = vand.u32 %v305, 4294901760
      %v2287 = vsub.f32 %v305, %v2286
      %v2288 = vand.u32 %v2287, 4294901760
      %2289 = vmatpush.msra.mxu0 %v2288
      %v2290 = vand.u32 %v304, 4294901760
      %v2291 = vsub.f32 %v304, %v2290
      %v2292 = vand.u32 %v2291, 4294901760
      %2293 = vmatpush.msra.mxu0 %v2292
      %v2294 = vand.u32 %v2137, 4294901760
      %2295 = vmatmul.f32.gmra.mxu0 %v2294
      %v2296 = vpop.f32.mrf.mxu0
      %v2297 = vadd.f32 %v2264, %v2296
      %2298 = vdwg.mxu0
      %2299 = vmatpush.msra.mxu0 0.0
      %2300 = vmatpush.msra.mxu0 0.0
      %2301 = vmatpush.msra.mxu0 0.0
      %2302 = vmatpush.msra.mxu0 0.0
      %2303 = vmatpush.msra.mxu0 0.0
      %2304 = vmatpush.msra.mxu0 0.0
      %2305 = vmatpush.msra.mxu0 0.0
      %2306 = vmatpush.msra.mxu0 0.0
      %2307 = vmatpush.msra.mxu0 0.0
      %2308 = vmatpush.msra.mxu0 0.0
      %2309 = vmatpush.msra.mxu0 0.0
      %2310 = vmatpush.msra.mxu0 0.0
      %v2311 = vand.u32 %v307, 4294901760
      %2312 = vmatpush.msra.mxu0 %v2311
      %v2313 = vand.u32 %v306, 4294901760
      %2314 = vmatpush.msra.mxu0 %v2313
      %v2315 = vand.u32 %v305, 4294901760
      %2316 = vmatpush.msra.mxu0 %v2315
      %v2317 = vand.u32 %v304, 4294901760
      %2318 = vmatpush.msra.mxu0 %v2317
      %v2319 = vand.u32 %v2137, 4294901760
      %2320 = vmatmul.f32.gmra.mxu0 %v2319
      %v2321 = vpop.f32.mrf.mxu0
      %v2322 = vadd.f32 %v2297, %v2321
      %2323 = vdwg.mxu0
      %v2324 = vadd.f32 %v2322, %v1629
      %v2325 = vsel %vm865, %v2324, 0.0
      %2326 = vadd.xlane.f32.xlu0 %v2325
      %v2327 = vpop.xlane.xlu0 %2326
      %v2328 = vmul.f32 %v2327, %v875
      %v2329 = vsub.f32 %v2324, %v2328
      %v2330 = vmul.f32 %v2329, %v2329
      %v2331 = vsel %vm865, %v2330, 0.0
      %2332 = vadd.xlane.f32.xlu0 %v2331
      %v2333 = vpop.xlane.xlu0 %2332
      %v2334 = vmul.f32 %v2333, %v875
      %v2335 = vadd.f32 %v2334, 1e-05
      %v2336 = vrsqrt.pop %v2335
      %v2337 = vmul.f32 %v2336, %v2335
      %v2338 = vmul.f32 %v2337, %v2336
      %v2339 = vmul.f32 0.5, %v2338
      %v2340 = vsub.f32 1.5, %v2339
      %v2341 = vmul.f32 %v2336, %v2340
      %vm2342 = vweird.f32 %v2335
      %vm2343 = vweird.f32 %v2336
      %vm2344 = vmor %vm2342, %vm2343
      %v2345 = vsel %vm2344, %v2336, %v2341
      %v2346 = vmul.f32 %v2329, %v2345
      %v2347 = vmul.f32 %v2346, %v895
      %v2348 = vadd.f32 %v2347, %v897
      %v2349 = vmul.f32 %v1629, %v901
      %v2350 = vadd.f32 %v2349, %v2348
      %s2351 = scalar_lea.vmem %s283, 4
      %v2352 = vld [vmem:[%s2351] sm:$0x3]
      %v2353 = vadd.f32 %v2350, %v2352
      %s2354 = scalar_lea.vmem %s288, 4
      %v2355 = vld [vmem:[%s2354] sm:$0x3]
      %v2357 = vsel %vm317, %v2353, 0
      %2359 = vmatpush.msra.mxu0 0.0
      %2360 = vmatpush.msra.mxu0 0.0
      %2361 = vmatpush.msra.mxu0 0.0
      %2362 = vmatpush.msra.mxu0 0.0
      %2363 = vmatpush.msra.mxu0 0.0
      %2364 = vmatpush.msra.mxu0 0.0
      %2365 = vmatpush.msra.mxu0 0.0
      %2366 = vmatpush.msra.mxu0 0.0
      %2367 = vmatpush.msra.mxu0 0.0
      %2368 = vmatpush.msra.mxu0 0.0
      %2369 = vmatpush.msra.mxu0 0.0
      %2370 = vmatpush.msra.mxu0 0.0
      %2371 = vmatpush.msra.mxu0 0.0
      %2372 = vmatpush.msra.mxu0 0.0
      %2373 = vmatpush.msra.mxu0 0.0
      %v2374 = vand.u32 %v314, 4294901760
      %2375 = vmatpush.msra.mxu0 %v2374
      %v2376 = vand.u32 %v2357, 4294901760
      %v2377 = vsub.f32 %v2357, %v2376
      %v2378 = vand.u32 %v2377, 4294901760
      %v2379 = vsub.f32 %v2377, %v2378
      %v2380 = vand.u32 %v2379, 4294901760
      %2381 = vmatmul.f32.gmra.mxu0 %v2380
      %v2382 = vpop.f32.mrf.mxu0
      %v2383 = vadd.f32 0.0, %v2382
      %2384 = vdwg.mxu0
      %2385 = vmatpush.msra.mxu0 0.0
      %2386 = vmatpush.msra.mxu0 0.0
      %2387 = vmatpush.msra.mxu0 0.0
      %2388 = vmatpush.msra.mxu0 0.0
      %2389 = vmatpush.msra.mxu0 0.0
      %2390 = vmatpush.msra.mxu0 0.0
      %2391 = vmatpush.msra.mxu0 0.0
      %2392 = vmatpush.msra.mxu0 0.0
      %2393 = vmatpush.msra.mxu0 0.0
      %2394 = vmatpush.msra.mxu0 0.0
      %2395 = vmatpush.msra.mxu0 0.0
      %2396 = vmatpush.msra.mxu0 0.0
      %2397 = vmatpush.msra.mxu0 0.0
      %2398 = vmatpush.msra.mxu0 0.0
      %2399 = vmatpush.msra.mxu0 0.0
      %v2400 = vand.u32 %v314, 4294901760
      %v2401 = vsub.f32 %v314, %v2400
      %v2402 = vand.u32 %v2401, 4294901760
      %v2403 = vsub.f32 %v2401, %v2402
      %v2404 = vand.u32 %v2403, 4294901760
      %2405 = vmatpush.msra.mxu0 %v2404
      %v2406 = vand.u32 %v2357, 4294901760
      %2407 = vmatmul.f32.gmra.mxu0 %v2406
      %v2408 = vpop.f32.mrf.mxu0
      %v2409 = vadd.f32 %v2383, %v2408
      %2410 = vdwg.mxu0
      %2411 = vmatpush.msra.mxu0 0.0
      %2412 = vmatpush.msra.mxu0 0.0
      %2413 = vmatpush.msra.mxu0 0.0
      %2414 = vmatpush.msra.mxu0 0.0
      %2415 = vmatpush.msra.mxu0 0.0
      %2416 = vmatpush.msra.mxu0 0.0
      %2417 = vmatpush.msra.mxu0 0.0
      %2418 = vmatpush.msra.mxu0 0.0
      %2419 = vmatpush.msra.mxu0 0.0
      %2420 = vmatpush.msra.mxu0 0.0
      %2421 = vmatpush.msra.mxu0 0.0
      %2422 = vmatpush.msra.mxu0 0.0
      %2423 = vmatpush.msra.mxu0 0.0
      %2424 = vmatpush.msra.mxu0 0.0
      %2425 = vmatpush.msra.mxu0 0.0
      %v2426 = vand.u32 %v314, 4294901760
      %v2427 = vsub.f32 %v314, %v2426
      %2428 = vmatpush.msra.mxu0 %v2427
      %v2429 = vand.u32 %v2357, 4294901760
      %v2430 = vsub.f32 %v2357, %v2429
      %2431 = vmatmul.f32.gmra.mxu0 %v2430
      %v2432 = vpop.f32.mrf.mxu0
      %v2433 = vadd.f32 %v2409, %v2432
      %2434 = vdwg.mxu0
      %2435 = vmatpush.msra.mxu0 0.0
      %2436 = vmatpush.msra.mxu0 0.0
      %2437 = vmatpush.msra.mxu0 0.0
      %2438 = vmatpush.msra.mxu0 0.0
      %2439 = vmatpush.msra.mxu0 0.0
      %2440 = vmatpush.msra.mxu0 0.0
      %2441 = vmatpush.msra.mxu0 0.0
      %2442 = vmatpush.msra.mxu0 0.0
      %2443 = vmatpush.msra.mxu0 0.0
      %2444 = vmatpush.msra.mxu0 0.0
      %2445 = vmatpush.msra.mxu0 0.0
      %2446 = vmatpush.msra.mxu0 0.0
      %2447 = vmatpush.msra.mxu0 0.0
      %2448 = vmatpush.msra.mxu0 0.0
      %2449 = vmatpush.msra.mxu0 0.0
      %v2450 = vand.u32 %v314, 4294901760
      %2451 = vmatpush.msra.mxu0 %v2450
      %v2452 = vand.u32 %v2357, 4294901760
      %v2453 = vsub.f32 %v2357, %v2452
      %v2454 = vand.u32 %v2453, 4294901760
      %2455 = vmatmul.f32.gmra.mxu0 %v2454
      %v2456 = vpop.f32.mrf.mxu0
      %v2457 = vadd.f32 %v2433, %v2456
      %2458 = vdwg.mxu0
      %2459 = vmatpush.msra.mxu0 0.0
      %2460 = vmatpush.msra.mxu0 0.0
      %2461 = vmatpush.msra.mxu0 0.0
      %2462 = vmatpush.msra.mxu0 0.0
      %2463 = vmatpush.msra.mxu0 0.0
      %2464 = vmatpush.msra.mxu0 0.0
      %2465 = vmatpush.msra.mxu0 0.0
      %2466 = vmatpush.msra.mxu0 0.0
      %2467 = vmatpush.msra.mxu0 0.0
      %2468 = vmatpush.msra.mxu0 0.0
      %2469 = vmatpush.msra.mxu0 0.0
      %2470 = vmatpush.msra.mxu0 0.0
      %2471 = vmatpush.msra.mxu0 0.0
      %2472 = vmatpush.msra.mxu0 0.0
      %2473 = vmatpush.msra.mxu0 0.0
      %v2474 = vand.u32 %v314, 4294901760
      %v2475 = vsub.f32 %v314, %v2474
      %v2476 = vand.u32 %v2475, 4294901760
      %2477 = vmatpush.msra.mxu0 %v2476
      %v2478 = vand.u32 %v2357, 4294901760
      %2479 = vmatmul.f32.gmra.mxu0 %v2478
      %v2480 = vpop.f32.mrf.mxu0
      %v2481 = vadd.f32 %v2457, %v2480
      %2482 = vdwg.mxu0
      %2483 = vmatpush.msra.mxu0 0.0
      %2484 = vmatpush.msra.mxu0 0.0
      %2485 = vmatpush.msra.mxu0 0.0
      %2486 = vmatpush.msra.mxu0 0.0
      %2487 = vmatpush.msra.mxu0 0.0
      %2488 = vmatpush.msra.mxu0 0.0
      %2489 = vmatpush.msra.mxu0 0.0
      %2490 = vmatpush.msra.mxu0 0.0
      %2491 = vmatpush.msra.mxu0 0.0
      %2492 = vmatpush.msra.mxu0 0.0
      %2493 = vmatpush.msra.mxu0 0.0
      %2494 = vmatpush.msra.mxu0 0.0
      %2495 = vmatpush.msra.mxu0 0.0
      %2496 = vmatpush.msra.mxu0 0.0
      %2497 = vmatpush.msra.mxu0 0.0
      %v2498 = vand.u32 %v314, 4294901760
      %2499 = vmatpush.msra.mxu0 %v2498
      %v2500 = vand.u32 %v2357, 4294901760
      %2501 = vmatmul.f32.gmra.mxu0 %v2500
      %v2502 = vpop.f32.mrf.mxu0
      %v2503 = vadd.f32 %v2481, %v2502
      %2504 = vdwg.mxu0
      %v2505 = vadd.f32 %v2355, %v2503
      %s2506 = scalar_lea.vmem %s298, 4
      %2507 = vst.msk [vmem:[%s2506] sm:$0x3] %vm1058, %v2505
      %2508 = vmatpush.msra.mxu0 0.0
      %2509 = vmatpush.msra.mxu0 0.0
      %2510 = vmatpush.msra.mxu0 0.0
      %2511 = vmatpush.msra.mxu0 0.0
      %2512 = vmatpush.msra.mxu0 0.0
      %2513 = vmatpush.msra.mxu0 0.0
      %2514 = vmatpush.msra.mxu0 0.0
      %2515 = vmatpush.msra.mxu0 0.0
      %2516 = vmatpush.msra.mxu0 0.0
      %2517 = vmatpush.msra.mxu0 0.0
      %2518 = vmatpush.msra.mxu0 0.0
      %2519 = vmatpush.msra.mxu0 0.0
      %2520 = vmatpush.msra.mxu0 0.0
      %2521 = vmatpush.msra.mxu0 0.0
      %2522 = vmatpush.msra.mxu0 0.0
      %v2523 = vand.u32 %v299, 4294901760
      %2524 = vmatpush.msra.mxu0 %v2523
      %v2525 = vand.u32 %v2357, 4294901760
      %v2526 = vsub.f32 %v2357, %v2525
      %v2527 = vand.u32 %v2526, 4294901760
      %v2528 = vsub.f32 %v2526, %v2527
      %v2529 = vand.u32 %v2528, 4294901760
      %2530 = vmatmul.f32.gmra.mxu0 %v2529
      %v2531 = vpop.f32.mrf.mxu0
      %v2532 = vadd.f32 %v316, %v2531
      %2533 = vdwg.mxu0
      %2534 = vmatpush.msra.mxu0 0.0
      %2535 = vmatpush.msra.mxu0 0.0
      %2536 = vmatpush.msra.mxu0 0.0
      %2537 = vmatpush.msra.mxu0 0.0
      %2538 = vmatpush.msra.mxu0 0.0
      %2539 = vmatpush.msra.mxu0 0.0
      %2540 = vmatpush.msra.mxu0 0.0
      %2541 = vmatpush.msra.mxu0 0.0
      %2542 = vmatpush.msra.mxu0 0.0
      %2543 = vmatpush.msra.mxu0 0.0
      %2544 = vmatpush.msra.mxu0 0.0
      %2545 = vmatpush.msra.mxu0 0.0
      %2546 = vmatpush.msra.mxu0 0.0
      %2547 = vmatpush.msra.mxu0 0.0
      %2548 = vmatpush.msra.mxu0 0.0
      %v2549 = vand.u32 %v299, 4294901760
      %v2550 = vsub.f32 %v299, %v2549
      %v2551 = vand.u32 %v2550, 4294901760
      %v2552 = vsub.f32 %v2550, %v2551
      %v2553 = vand.u32 %v2552, 4294901760
      %2554 = vmatpush.msra.mxu0 %v2553
      %v2555 = vand.u32 %v2357, 4294901760
      %2556 = vmatmul.f32.gmra.mxu0 %v2555
      %v2557 = vpop.f32.mrf.mxu0
      %v2558 = vadd.f32 %v2532, %v2557
      %2559 = vdwg.mxu0
      %2560 = vmatpush.msra.mxu0 0.0
      %2561 = vmatpush.msra.mxu0 0.0
      %2562 = vmatpush.msra.mxu0 0.0
      %2563 = vmatpush.msra.mxu0 0.0
      %2564 = vmatpush.msra.mxu0 0.0
      %2565 = vmatpush.msra.mxu0 0.0
      %2566 = vmatpush.msra.mxu0 0.0
      %2567 = vmatpush.msra.mxu0 0.0
      %2568 = vmatpush.msra.mxu0 0.0
      %2569 = vmatpush.msra.mxu0 0.0
      %2570 = vmatpush.msra.mxu0 0.0
      %2571 = vmatpush.msra.mxu0 0.0
      %2572 = vmatpush.msra.mxu0 0.0
      %2573 = vmatpush.msra.mxu0 0.0
      %2574 = vmatpush.msra.mxu0 0.0
      %v2575 = vand.u32 %v299, 4294901760
      %v2576 = vsub.f32 %v299, %v2575
      %2577 = vmatpush.msra.mxu0 %v2576
      %v2578 = vand.u32 %v2357, 4294901760
      %v2579 = vsub.f32 %v2357, %v2578
      %2580 = vmatmul.f32.gmra.mxu0 %v2579
      %v2581 = vpop.f32.mrf.mxu0
      %v2582 = vadd.f32 %v2558, %v2581
      %2583 = vdwg.mxu0
      %2584 = vmatpush.msra.mxu0 0.0
      %2585 = vmatpush.msra.mxu0 0.0
      %2586 = vmatpush.msra.mxu0 0.0
      %2587 = vmatpush.msra.mxu0 0.0
      %2588 = vmatpush.msra.mxu0 0.0
      %2589 = vmatpush.msra.mxu0 0.0
      %2590 = vmatpush.msra.mxu0 0.0
      %2591 = vmatpush.msra.mxu0 0.0
      %2592 = vmatpush.msra.mxu0 0.0
      %2593 = vmatpush.msra.mxu0 0.0
      %2594 = vmatpush.msra.mxu0 0.0
      %2595 = vmatpush.msra.mxu0 0.0
      %2596 = vmatpush.msra.mxu0 0.0
      %2597 = vmatpush.msra.mxu0 0.0
      %2598 = vmatpush.msra.mxu0 0.0
      %v2599 = vand.u32 %v299, 4294901760
      %2600 = vmatpush.msra.mxu0 %v2599
      %v2601 = vand.u32 %v2357, 4294901760
      %v2602 = vsub.f32 %v2357, %v2601
      %v2603 = vand.u32 %v2602, 4294901760
      %2604 = vmatmul.f32.gmra.mxu0 %v2603
      %v2605 = vpop.f32.mrf.mxu0
      %v2606 = vadd.f32 %v2582, %v2605
      %2607 = vdwg.mxu0
      %2608 = vmatpush.msra.mxu0 0.0
      %2609 = vmatpush.msra.mxu0 0.0
      %2610 = vmatpush.msra.mxu0 0.0
      %2611 = vmatpush.msra.mxu0 0.0
      %2612 = vmatpush.msra.mxu0 0.0
      %2613 = vmatpush.msra.mxu0 0.0
      %2614 = vmatpush.msra.mxu0 0.0
      %2615 = vmatpush.msra.mxu0 0.0
      %2616 = vmatpush.msra.mxu0 0.0
      %2617 = vmatpush.msra.mxu0 0.0
      %2618 = vmatpush.msra.mxu0 0.0
      %2619 = vmatpush.msra.mxu0 0.0
      %2620 = vmatpush.msra.mxu0 0.0
      %2621 = vmatpush.msra.mxu0 0.0
      %2622 = vmatpush.msra.mxu0 0.0
      %v2623 = vand.u32 %v299, 4294901760
      %v2624 = vsub.f32 %v299, %v2623
      %v2625 = vand.u32 %v2624, 4294901760
      %2626 = vmatpush.msra.mxu0 %v2625
      %v2627 = vand.u32 %v2357, 4294901760
      %2628 = vmatmul.f32.gmra.mxu0 %v2627
      %v2629 = vpop.f32.mrf.mxu0
      %v2630 = vadd.f32 %v2606, %v2629
      %2631 = vdwg.mxu0
      %2632 = vmatpush.msra.mxu0 0.0
      %2633 = vmatpush.msra.mxu0 0.0
      %2634 = vmatpush.msra.mxu0 0.0
      %2635 = vmatpush.msra.mxu0 0.0
      %2636 = vmatpush.msra.mxu0 0.0
      %2637 = vmatpush.msra.mxu0 0.0
      %2638 = vmatpush.msra.mxu0 0.0
      %2639 = vmatpush.msra.mxu0 0.0
      %2640 = vmatpush.msra.mxu0 0.0
      %2641 = vmatpush.msra.mxu0 0.0
      %2642 = vmatpush.msra.mxu0 0.0
      %2643 = vmatpush.msra.mxu0 0.0
      %2644 = vmatpush.msra.mxu0 0.0
      %2645 = vmatpush.msra.mxu0 0.0
      %2646 = vmatpush.msra.mxu0 0.0
      %v2647 = vand.u32 %v299, 4294901760
      %2648 = vmatpush.msra.mxu0 %v2647
      %v2649 = vand.u32 %v2357, 4294901760
      %2650 = vmatmul.f32.gmra.mxu0 %v2649
      %v2651 = vpop.f32.mrf.mxu0
      %v2652 = vadd.f32 %v2630, %v2651
      %2653 = vdwg.mxu0
      %v2654 = vmul.f32 %v2652, 0.5
      %v2655 = vmul.f32 %v2652, 0.044715
      %v2656 = vmul.f32 %v2655, %v2652
      %v2657 = vmul.f32 %v2656, %v2652
      %v2658 = vadd.f32 %v2652, %v2657
      %v2659 = vmul.f32 %v2658, 0.7978846
      %v2660 = vtanh.pop %v2659
      %v2661 = vadd.f32 %v2660, 1.0
      %v2662 = vmul.f32 %v2654, %v2661
      %v2664 = vsel %vm477, %v2662, 0
      %2666 = vmatpush.msra.mxu0 0.0
      %2667 = vmatpush.msra.mxu0 0.0
      %2668 = vmatpush.msra.mxu0 0.0
      %2669 = vmatpush.msra.mxu0 0.0
      %2670 = vmatpush.msra.mxu0 0.0
      %2671 = vmatpush.msra.mxu0 0.0
      %2672 = vmatpush.msra.mxu0 0.0
      %2673 = vmatpush.msra.mxu0 0.0
      %2674 = vmatpush.msra.mxu0 0.0
      %2675 = vmatpush.msra.mxu0 0.0
      %2676 = vmatpush.msra.mxu0 0.0
      %2677 = vmatpush.msra.mxu0 0.0
      %v2678 = vand.u32 %v303, 4294901760
      %2679 = vmatpush.msra.mxu0 %v2678
      %v2680 = vand.u32 %v302, 4294901760
      %2681 = vmatpush.msra.mxu0 %v2680
      %v2682 = vand.u32 %v301, 4294901760
      %2683 = vmatpush.msra.mxu0 %v2682
      %v2684 = vand.u32 %v300, 4294901760
      %2685 = vmatpush.msra.mxu0 %v2684
      %v2686 = vand.u32 %v2664, 4294901760
      %v2687 = vsub.f32 %v2664, %v2686
      %v2688 = vand.u32 %v2687, 4294901760
      %v2689 = vsub.f32 %v2687, %v2688
      %v2690 = vand.u32 %v2689, 4294901760
      %2691 = vmatmul.f32.gmra.mxu0 %v2690
      %v2692 = vpop.f32.mrf.mxu0
      %v2693 = vadd.f32 %v476, %v2692
      %2694 = vdwg.mxu0
      %2695 = vmatpush.msra.mxu0 0.0
      %2696 = vmatpush.msra.mxu0 0.0
      %2697 = vmatpush.msra.mxu0 0.0
      %2698 = vmatpush.msra.mxu0 0.0
      %2699 = vmatpush.msra.mxu0 0.0
      %2700 = vmatpush.msra.mxu0 0.0
      %2701 = vmatpush.msra.mxu0 0.0
      %2702 = vmatpush.msra.mxu0 0.0
      %2703 = vmatpush.msra.mxu0 0.0
      %2704 = vmatpush.msra.mxu0 0.0
      %2705 = vmatpush.msra.mxu0 0.0
      %2706 = vmatpush.msra.mxu0 0.0
      %v2707 = vand.u32 %v303, 4294901760
      %v2708 = vsub.f32 %v303, %v2707
      %v2709 = vand.u32 %v2708, 4294901760
      %v2710 = vsub.f32 %v2708, %v2709
      %v2711 = vand.u32 %v2710, 4294901760
      %2712 = vmatpush.msra.mxu0 %v2711
      %v2713 = vand.u32 %v302, 4294901760
      %v2714 = vsub.f32 %v302, %v2713
      %v2715 = vand.u32 %v2714, 4294901760
      %v2716 = vsub.f32 %v2714, %v2715
      %v2717 = vand.u32 %v2716, 4294901760
      %2718 = vmatpush.msra.mxu0 %v2717
      %v2719 = vand.u32 %v301, 4294901760
      %v2720 = vsub.f32 %v301, %v2719
      %v2721 = vand.u32 %v2720, 4294901760
      %v2722 = vsub.f32 %v2720, %v2721
      %v2723 = vand.u32 %v2722, 4294901760
      %2724 = vmatpush.msra.mxu0 %v2723
      %v2725 = vand.u32 %v300, 4294901760
      %v2726 = vsub.f32 %v300, %v2725
      %v2727 = vand.u32 %v2726, 4294901760
      %v2728 = vsub.f32 %v2726, %v2727
      %v2729 = vand.u32 %v2728, 4294901760
      %2730 = vmatpush.msra.mxu0 %v2729
      %v2731 = vand.u32 %v2664, 4294901760
      %2732 = vmatmul.f32.gmra.mxu0 %v2731
      %v2733 = vpop.f32.mrf.mxu0
      %v2734 = vadd.f32 %v2693, %v2733
      %2735 = vdwg.mxu0
      %2736 = vmatpush.msra.mxu0 0.0
      %2737 = vmatpush.msra.mxu0 0.0
      %2738 = vmatpush.msra.mxu0 0.0
      %2739 = vmatpush.msra.mxu0 0.0
      %2740 = vmatpush.msra.mxu0 0.0
      %2741 = vmatpush.msra.mxu0 0.0
      %2742 = vmatpush.msra.mxu0 0.0
      %2743 = vmatpush.msra.mxu0 0.0
      %2744 = vmatpush.msra.mxu0 0.0
      %2745 = vmatpush.msra.mxu0 0.0
      %2746 = vmatpush.msra.mxu0 0.0
      %2747 = vmatpush.msra.mxu0 0.0
      %v2748 = vand.u32 %v303, 4294901760
      %v2749 = vsub.f32 %v303, %v2748
      %2750 = vmatpush.msra.mxu0 %v2749
      %v2751 = vand.u32 %v302, 4294901760
      %v2752 = vsub.f32 %v302, %v2751
      %2753 = vmatpush.msra.mxu0 %v2752
      %v2754 = vand.u32 %v301, 4294901760
      %v2755 = vsub.f32 %v301, %v2754
      %2756 = vmatpush.msra.mxu0 %v2755
      %v2757 = vand.u32 %v300, 4294901760
      %v2758 = vsub.f32 %v300, %v2757
      %2759 = vmatpush.msra.mxu0 %v2758
      %v2760 = vand.u32 %v2664, 4294901760
      %v2761 = vsub.f32 %v2664, %v2760
      %2762 = vmatmul.f32.gmra.mxu0 %v2761
      %v2763 = vpop.f32.mrf.mxu0
      %v2764 = vadd.f32 %v2734, %v2763
      %2765 = vdwg.mxu0
      %2766 = vmatpush.msra.mxu0 0.0
      %2767 = vmatpush.msra.mxu0 0.0
      %2768 = vmatpush.msra.mxu0 0.0
      %2769 = vmatpush.msra.mxu0 0.0
      %2770 = vmatpush.msra.mxu0 0.0
      %2771 = vmatpush.msra.mxu0 0.0
      %2772 = vmatpush.msra.mxu0 0.0
      %2773 = vmatpush.msra.mxu0 0.0
      %2774 = vmatpush.msra.mxu0 0.0
      %2775 = vmatpush.msra.mxu0 0.0
      %2776 = vmatpush.msra.mxu0 0.0
      %2777 = vmatpush.msra.mxu0 0.0
      %v2778 = vand.u32 %v303, 4294901760
      %2779 = vmatpush.msra.mxu0 %v2778
      %v2780 = vand.u32 %v302, 4294901760
      %2781 = vmatpush.msra.mxu0 %v2780
      %v2782 = vand.u32 %v301, 4294901760
      %2783 = vmatpush.msra.mxu0 %v2782
      %v2784 = vand.u32 %v300, 4294901760
      %2785 = vmatpush.msra.mxu0 %v2784
      %v2786 = vand.u32 %v2664, 4294901760
      %v2787 = vsub.f32 %v2664, %v2786
      %v2788 = vand.u32 %v2787, 4294901760
      %2789 = vmatmul.f32.gmra.mxu0 %v2788
      %v2790 = vpop.f32.mrf.mxu0
      %v2791 = vadd.f32 %v2764, %v2790
      %2792 = vdwg.mxu0
      %2793 = vmatpush.msra.mxu0 0.0
      %2794 = vmatpush.msra.mxu0 0.0
      %2795 = vmatpush.msra.mxu0 0.0
      %2796 = vmatpush.msra.mxu0 0.0
      %2797 = vmatpush.msra.mxu0 0.0
      %2798 = vmatpush.msra.mxu0 0.0
      %2799 = vmatpush.msra.mxu0 0.0
      %2800 = vmatpush.msra.mxu0 0.0
      %2801 = vmatpush.msra.mxu0 0.0
      %2802 = vmatpush.msra.mxu0 0.0
      %2803 = vmatpush.msra.mxu0 0.0
      %2804 = vmatpush.msra.mxu0 0.0
      %v2805 = vand.u32 %v303, 4294901760
      %v2806 = vsub.f32 %v303, %v2805
      %v2807 = vand.u32 %v2806, 4294901760
      %2808 = vmatpush.msra.mxu0 %v2807
      %v2809 = vand.u32 %v302, 4294901760
      %v2810 = vsub.f32 %v302, %v2809
      %v2811 = vand.u32 %v2810, 4294901760
      %2812 = vmatpush.msra.mxu0 %v2811
      %v2813 = vand.u32 %v301, 4294901760
      %v2814 = vsub.f32 %v301, %v2813
      %v2815 = vand.u32 %v2814, 4294901760
      %2816 = vmatpush.msra.mxu0 %v2815
      %v2817 = vand.u32 %v300, 4294901760
      %v2818 = vsub.f32 %v300, %v2817
      %v2819 = vand.u32 %v2818, 4294901760
      %2820 = vmatpush.msra.mxu0 %v2819
      %v2821 = vand.u32 %v2664, 4294901760
      %2822 = vmatmul.f32.gmra.mxu0 %v2821
      %v2823 = vpop.f32.mrf.mxu0
      %v2824 = vadd.f32 %v2791, %v2823
      %2825 = vdwg.mxu0
      %2826 = vmatpush.msra.mxu0 0.0
      %2827 = vmatpush.msra.mxu0 0.0
      %2828 = vmatpush.msra.mxu0 0.0
      %2829 = vmatpush.msra.mxu0 0.0
      %2830 = vmatpush.msra.mxu0 0.0
      %2831 = vmatpush.msra.mxu0 0.0
      %2832 = vmatpush.msra.mxu0 0.0
      %2833 = vmatpush.msra.mxu0 0.0
      %2834 = vmatpush.msra.mxu0 0.0
      %2835 = vmatpush.msra.mxu0 0.0
      %2836 = vmatpush.msra.mxu0 0.0
      %2837 = vmatpush.msra.mxu0 0.0
      %v2838 = vand.u32 %v303, 4294901760
      %2839 = vmatpush.msra.mxu0 %v2838
      %v2840 = vand.u32 %v302, 4294901760
      %2841 = vmatpush.msra.mxu0 %v2840
      %v2842 = vand.u32 %v301, 4294901760
      %2843 = vmatpush.msra.mxu0 %v2842
      %v2844 = vand.u32 %v300, 4294901760
      %2845 = vmatpush.msra.mxu0 %v2844
      %v2846 = vand.u32 %v2664, 4294901760
      %2847 = vmatmul.f32.gmra.mxu0 %v2846
      %v2848 = vpop.f32.mrf.mxu0
      %v2849 = vadd.f32 %v2824, %v2848
      %2850 = vdwg.mxu0
      %v2851 = vmul.f32 %v2849, 0.5
      %v2852 = vmul.f32 %v2849, 0.044715
      %v2853 = vmul.f32 %v2852, %v2849
      %v2854 = vmul.f32 %v2853, %v2849
      %v2855 = vadd.f32 %v2849, %v2854
      %v2856 = vmul.f32 %v2855, 0.7978846
      %v2857 = vtanh.pop %v2856
      %v2858 = vadd.f32 %v2857, 1.0
      %v2859 = vmul.f32 %v2851, %v2858
      %v2861 = vsel %vm477, %v2859, 0
      %2863 = vmatpush.msra.mxu0 0.0
      %2864 = vmatpush.msra.mxu0 0.0
      %2865 = vmatpush.msra.mxu0 0.0
      %2866 = vmatpush.msra.mxu0 0.0
      %2867 = vmatpush.msra.mxu0 0.0
      %2868 = vmatpush.msra.mxu0 0.0
      %2869 = vmatpush.msra.mxu0 0.0
      %2870 = vmatpush.msra.mxu0 0.0
      %2871 = vmatpush.msra.mxu0 0.0
      %2872 = vmatpush.msra.mxu0 0.0
      %2873 = vmatpush.msra.mxu0 0.0
      %2874 = vmatpush.msra.mxu0 0.0
      %v2875 = vand.u32 %v307, 4294901760
      %2876 = vmatpush.msra.mxu0 %v2875
      %v2877 = vand.u32 %v306, 4294901760
      %2878 = vmatpush.msra.mxu0 %v2877
      %v2879 = vand.u32 %v305, 4294901760
      %2880 = vmatpush.msra.mxu0 %v2879
      %v2881 = vand.u32 %v304, 4294901760
      %2882 = vmatpush.msra.mxu0 %v2881
      %v2883 = vand.u32 %v2861, 4294901760
      %v2884 = vsub.f32 %v2861, %v2883
      %v2885 = vand.u32 %v2884, 4294901760
      %v2886 = vsub.f32 %v2884, %v2885
      %v2887 = vand.u32 %v2886, 4294901760
      %2888 = vmatmul.f32.gmra.mxu0 %v2887
      %v2889 = vpop.f32.mrf.mxu0
      %v2890 = vadd.f32 %v675, %v2889
      %2891 = vdwg.mxu0
      %2892 = vmatpush.msra.mxu0 0.0
      %2893 = vmatpush.msra.mxu0 0.0
      %2894 = vmatpush.msra.mxu0 0.0
      %2895 = vmatpush.msra.mxu0 0.0
      %2896 = vmatpush.msra.mxu0 0.0
      %2897 = vmatpush.msra.mxu0 0.0
      %2898 = vmatpush.msra.mxu0 0.0
      %2899 = vmatpush.msra.mxu0 0.0
      %2900 = vmatpush.msra.mxu0 0.0
      %2901 = vmatpush.msra.mxu0 0.0
      %2902 = vmatpush.msra.mxu0 0.0
      %2903 = vmatpush.msra.mxu0 0.0
      %v2904 = vand.u32 %v307, 4294901760
      %v2905 = vsub.f32 %v307, %v2904
      %v2906 = vand.u32 %v2905, 4294901760
      %v2907 = vsub.f32 %v2905, %v2906
      %v2908 = vand.u32 %v2907, 4294901760
      %2909 = vmatpush.msra.mxu0 %v2908
      %v2910 = vand.u32 %v306, 4294901760
      %v2911 = vsub.f32 %v306, %v2910
      %v2912 = vand.u32 %v2911, 4294901760
      %v2913 = vsub.f32 %v2911, %v2912
      %v2914 = vand.u32 %v2913, 4294901760
      %2915 = vmatpush.msra.mxu0 %v2914
      %v2916 = vand.u32 %v305, 4294901760
      %v2917 = vsub.f32 %v305, %v2916
      %v2918 = vand.u32 %v2917, 4294901760
      %v2919 = vsub.f32 %v2917, %v2918
      %v2920 = vand.u32 %v2919, 4294901760
      %2921 = vmatpush.msra.mxu0 %v2920
      %v2922 = vand.u32 %v304, 4294901760
      %v2923 = vsub.f32 %v304, %v2922
      %v2924 = vand.u32 %v2923, 4294901760
      %v2925 = vsub.f32 %v2923, %v2924
      %v2926 = vand.u32 %v2925, 4294901760
      %2927 = vmatpush.msra.mxu0 %v2926
      %v2928 = vand.u32 %v2861, 4294901760
      %2929 = vmatmul.f32.gmra.mxu0 %v2928
      %v2930 = vpop.f32.mrf.mxu0
      %v2931 = vadd.f32 %v2890, %v2930
      %2932 = vdwg.mxu0
      %2933 = vmatpush.msra.mxu0 0.0
      %2934 = vmatpush.msra.mxu0 0.0
      %2935 = vmatpush.msra.mxu0 0.0
      %2936 = vmatpush.msra.mxu0 0.0
      %2937 = vmatpush.msra.mxu0 0.0
      %2938 = vmatpush.msra.mxu0 0.0
      %2939 = vmatpush.msra.mxu0 0.0
      %2940 = vmatpush.msra.mxu0 0.0
      %2941 = vmatpush.msra.mxu0 0.0
      %2942 = vmatpush.msra.mxu0 0.0
      %2943 = vmatpush.msra.mxu0 0.0
      %2944 = vmatpush.msra.mxu0 0.0
      %v2945 = vand.u32 %v307, 4294901760
      %v2946 = vsub.f32 %v307, %v2945
      %2947 = vmatpush.msra.mxu0 %v2946
      %v2948 = vand.u32 %v306, 4294901760
      %v2949 = vsub.f32 %v306, %v2948
      %2950 = vmatpush.msra.mxu0 %v2949
      %v2951 = vand.u32 %v305, 4294901760
      %v2952 = vsub.f32 %v305, %v2951
      %2953 = vmatpush.msra.mxu0 %v2952
      %v2954 = vand.u32 %v304, 4294901760
      %v2955 = vsub.f32 %v304, %v2954
      %2956 = vmatpush.msra.mxu0 %v2955
      %v2957 = vand.u32 %v2861, 4294901760
      %v2958 = vsub.f32 %v2861, %v2957
      %2959 = vmatmul.f32.gmra.mxu0 %v2958
      %v2960 = vpop.f32.mrf.mxu0
      %v2961 = vadd.f32 %v2931, %v2960
      %2962 = vdwg.mxu0
      %2963 = vmatpush.msra.mxu0 0.0
      %2964 = vmatpush.msra.mxu0 0.0
      %2965 = vmatpush.msra.mxu0 0.0
      %2966 = vmatpush.msra.mxu0 0.0
      %2967 = vmatpush.msra.mxu0 0.0
      %2968 = vmatpush.msra.mxu0 0.0
      %2969 = vmatpush.msra.mxu0 0.0
      %2970 = vmatpush.msra.mxu0 0.0
      %2971 = vmatpush.msra.mxu0 0.0
      %2972 = vmatpush.msra.mxu0 0.0
      %2973 = vmatpush.msra.mxu0 0.0
      %2974 = vmatpush.msra.mxu0 0.0
      %v2975 = vand.u32 %v307, 4294901760
      %2976 = vmatpush.msra.mxu0 %v2975
      %v2977 = vand.u32 %v306, 4294901760
      %2978 = vmatpush.msra.mxu0 %v2977
      %v2979 = vand.u32 %v305, 4294901760
      %2980 = vmatpush.msra.mxu0 %v2979
      %v2981 = vand.u32 %v304, 4294901760
      %2982 = vmatpush.msra.mxu0 %v2981
      %v2983 = vand.u32 %v2861, 4294901760
      %v2984 = vsub.f32 %v2861, %v2983
      %v2985 = vand.u32 %v2984, 4294901760
      %2986 = vmatmul.f32.gmra.mxu0 %v2985
      %v2987 = vpop.f32.mrf.mxu0
      %v2988 = vadd.f32 %v2961, %v2987
      %2989 = vdwg.mxu0
      %2990 = vmatpush.msra.mxu0 0.0
      %2991 = vmatpush.msra.mxu0 0.0
      %2992 = vmatpush.msra.mxu0 0.0
      %2993 = vmatpush.msra.mxu0 0.0
      %2994 = vmatpush.msra.mxu0 0.0
      %2995 = vmatpush.msra.mxu0 0.0
      %2996 = vmatpush.msra.mxu0 0.0
      %2997 = vmatpush.msra.mxu0 0.0
      %2998 = vmatpush.msra.mxu0 0.0
      %2999 = vmatpush.msra.mxu0 0.0
      %3000 = vmatpush.msra.mxu0 0.0
      %3001 = vmatpush.msra.mxu0 0.0
      %v3002 = vand.u32 %v307, 4294901760
      %v3003 = vsub.f32 %v307, %v3002
      %v3004 = vand.u32 %v3003, 4294901760
      %3005 = vmatpush.msra.mxu0 %v3004
      %v3006 = vand.u32 %v306, 4294901760
      %v3007 = vsub.f32 %v306, %v3006
      %v3008 = vand.u32 %v3007, 4294901760
      %3009 = vmatpush.msra.mxu0 %v3008
      %v3010 = vand.u32 %v305, 4294901760
      %v3011 = vsub.f32 %v305, %v3010
      %v3012 = vand.u32 %v3011, 4294901760
      %3013 = vmatpush.msra.mxu0 %v3012
      %v3014 = vand.u32 %v304, 4294901760
      %v3015 = vsub.f32 %v304, %v3014
      %v3016 = vand.u32 %v3015, 4294901760
      %3017 = vmatpush.msra.mxu0 %v3016
      %v3018 = vand.u32 %v2861, 4294901760
      %3019 = vmatmul.f32.gmra.mxu0 %v3018
      %v3020 = vpop.f32.mrf.mxu0
      %v3021 = vadd.f32 %v2988, %v3020
      %3022 = vdwg.mxu0
      %3023 = vmatpush.msra.mxu0 0.0
      %3024 = vmatpush.msra.mxu0 0.0
      %3025 = vmatpush.msra.mxu0 0.0
      %3026 = vmatpush.msra.mxu0 0.0
      %3027 = vmatpush.msra.mxu0 0.0
      %3028 = vmatpush.msra.mxu0 0.0
      %3029 = vmatpush.msra.mxu0 0.0
      %3030 = vmatpush.msra.mxu0 0.0
      %3031 = vmatpush.msra.mxu0 0.0
      %3032 = vmatpush.msra.mxu0 0.0
      %3033 = vmatpush.msra.mxu0 0.0
      %3034 = vmatpush.msra.mxu0 0.0
      %v3035 = vand.u32 %v307, 4294901760
      %3036 = vmatpush.msra.mxu0 %v3035
      %v3037 = vand.u32 %v306, 4294901760
      %3038 = vmatpush.msra.mxu0 %v3037
      %v3039 = vand.u32 %v305, 4294901760
      %3040 = vmatpush.msra.mxu0 %v3039
      %v3041 = vand.u32 %v304, 4294901760
      %3042 = vmatpush.msra.mxu0 %v3041
      %v3043 = vand.u32 %v2861, 4294901760
      %3044 = vmatmul.f32.gmra.mxu0 %v3043
      %v3045 = vpop.f32.mrf.mxu0
      %v3046 = vadd.f32 %v3021, %v3045
      %3047 = vdwg.mxu0
      %v3048 = vadd.f32 %v3046, %v2353
      %v3049 = vsel %vm865, %v3048, 0.0
      %3050 = vadd.xlane.f32.xlu0 %v3049
      %v3051 = vpop.xlane.xlu0 %3050
      %v3052 = vmul.f32 %v3051, %v875
      %v3053 = vsub.f32 %v3048, %v3052
      %v3054 = vmul.f32 %v3053, %v3053
      %v3055 = vsel %vm865, %v3054, 0.0
      %3056 = vadd.xlane.f32.xlu0 %v3055
      %v3057 = vpop.xlane.xlu0 %3056
      %v3058 = vmul.f32 %v3057, %v875
      %v3059 = vadd.f32 %v3058, 1e-05
      %v3060 = vrsqrt.pop %v3059
      %v3061 = vmul.f32 %v3060, %v3059
      %v3062 = vmul.f32 %v3061, %v3060
      %v3063 = vmul.f32 0.5, %v3062
      %v3064 = vsub.f32 1.5, %v3063
      %v3065 = vmul.f32 %v3060, %v3064
      %vm3066 = vweird.f32 %v3059
      %vm3067 = vweird.f32 %v3060
      %vm3068 = vmor %vm3066, %vm3067
      %v3069 = vsel %vm3068, %v3060, %v3065
      %v3070 = vmul.f32 %v3053, %v3069
      %v3071 = vmul.f32 %v3070, %v895
      %v3072 = vadd.f32 %v3071, %v897
      %v3073 = vmul.f32 %v2353, %v901
      %v3074 = vadd.f32 %v3073, %v3072
      %s3075 = scalar_lea.vmem %s283, 6
      %v3076 = vld [vmem:[%s3075] sm:$0x3]
      %v3077 = vadd.f32 %v3074, %v3076
      %s3078 = scalar_lea.vmem %s288, 6
      %v3079 = vld [vmem:[%s3078] sm:$0x3]
      %v3081 = vsel %vm317, %v3077, 0
      %3083 = vmatpush.msra.mxu0 0.0
      %3084 = vmatpush.msra.mxu0 0.0
      %3085 = vmatpush.msra.mxu0 0.0
      %3086 = vmatpush.msra.mxu0 0.0
      %3087 = vmatpush.msra.mxu0 0.0
      %3088 = vmatpush.msra.mxu0 0.0
      %3089 = vmatpush.msra.mxu0 0.0
      %3090 = vmatpush.msra.mxu0 0.0
      %3091 = vmatpush.msra.mxu0 0.0
      %3092 = vmatpush.msra.mxu0 0.0
      %3093 = vmatpush.msra.mxu0 0.0
      %3094 = vmatpush.msra.mxu0 0.0
      %3095 = vmatpush.msra.mxu0 0.0
      %3096 = vmatpush.msra.mxu0 0.0
      %3097 = vmatpush.msra.mxu0 0.0
      %v3098 = vand.u32 %v314, 4294901760
      %3099 = vmatpush.msra.mxu0 %v3098
      %v3100 = vand.u32 %v3081, 4294901760
      %v3101 = vsub.f32 %v3081, %v3100
      %v3102 = vand.u32 %v3101, 4294901760
      %v3103 = vsub.f32 %v3101, %v3102
      %v3104 = vand.u32 %v3103, 4294901760
      %3105 = vmatmul.f32.gmra.mxu0 %v3104
      %v3106 = vpop.f32.mrf.mxu0
      %v3107 = vadd.f32 0.0, %v3106
      %3108 = vdwg.mxu0
      %3109 = vmatpush.msra.mxu0 0.0
      %3110 = vmatpush.msra.mxu0 0.0
      %3111 = vmatpush.msra.mxu0 0.0
      %3112 = vmatpush.msra.mxu0 0.0
      %3113 = vmatpush.msra.mxu0 0.0
      %3114 = vmatpush.msra.mxu0 0.0
      %3115 = vmatpush.msra.mxu0 0.0
      %3116 = vmatpush.msra.mxu0 0.0
      %3117 = vmatpush.msra.mxu0 0.0
      %3118 = vmatpush.msra.mxu0 0.0
      %3119 = vmatpush.msra.mxu0 0.0
      %3120 = vmatpush.msra.mxu0 0.0
      %3121 = vmatpush.msra.mxu0 0.0
      %3122 = vmatpush.msra.mxu0 0.0
      %3123 = vmatpush.msra.mxu0 0.0
      %v3124 = vand.u32 %v314, 4294901760
      %v3125 = vsub.f32 %v314, %v3124
      %v3126 = vand.u32 %v3125, 4294901760
      %v3127 = vsub.f32 %v3125, %v3126
      %v3128 = vand.u32 %v3127, 4294901760
      %3129 = vmatpush.msra.mxu0 %v3128
      %v3130 = vand.u32 %v3081, 4294901760
      %3131 = vmatmul.f32.gmra.mxu0 %v3130
      %v3132 = vpop.f32.mrf.mxu0
      %v3133 = vadd.f32 %v3107, %v3132
      %3134 = vdwg.mxu0
      %3135 = vmatpush.msra.mxu0 0.0
      %3136 = vmatpush.msra.mxu0 0.0
      %3137 = vmatpush.msra.mxu0 0.0
      %3138 = vmatpush.msra.mxu0 0.0
      %3139 = vmatpush.msra.mxu0 0.0
      %3140 = vmatpush.msra.mxu0 0.0
      %3141 = vmatpush.msra.mxu0 0.0
      %3142 = vmatpush.msra.mxu0 0.0
      %3143 = vmatpush.msra.mxu0 0.0
      %3144 = vmatpush.msra.mxu0 0.0
      %3145 = vmatpush.msra.mxu0 0.0
      %3146 = vmatpush.msra.mxu0 0.0
      %3147 = vmatpush.msra.mxu0 0.0
      %3148 = vmatpush.msra.mxu0 0.0
      %3149 = vmatpush.msra.mxu0 0.0
      %v3150 = vand.u32 %v314, 4294901760
      %v3151 = vsub.f32 %v314, %v3150
      %3152 = vmatpush.msra.mxu0 %v3151
      %v3153 = vand.u32 %v3081, 4294901760
      %v3154 = vsub.f32 %v3081, %v3153
      %3155 = vmatmul.f32.gmra.mxu0 %v3154
      %v3156 = vpop.f32.mrf.mxu0
      %v3157 = vadd.f32 %v3133, %v3156
      %3158 = vdwg.mxu0
      %3159 = vmatpush.msra.mxu0 0.0
      %3160 = vmatpush.msra.mxu0 0.0
      %3161 = vmatpush.msra.mxu0 0.0
      %3162 = vmatpush.msra.mxu0 0.0
      %3163 = vmatpush.msra.mxu0 0.0
      %3164 = vmatpush.msra.mxu0 0.0
      %3165 = vmatpush.msra.mxu0 0.0
      %3166 = vmatpush.msra.mxu0 0.0
      %3167 = vmatpush.msra.mxu0 0.0
      %3168 = vmatpush.msra.mxu0 0.0
      %3169 = vmatpush.msra.mxu0 0.0
      %3170 = vmatpush.msra.mxu0 0.0
      %3171 = vmatpush.msra.mxu0 0.0
      %3172 = vmatpush.msra.mxu0 0.0
      %3173 = vmatpush.msra.mxu0 0.0
      %v3174 = vand.u32 %v314, 4294901760
      %3175 = vmatpush.msra.mxu0 %v3174
      %v3176 = vand.u32 %v3081, 4294901760
      %v3177 = vsub.f32 %v3081, %v3176
      %v3178 = vand.u32 %v3177, 4294901760
      %3179 = vmatmul.f32.gmra.mxu0 %v3178
      %v3180 = vpop.f32.mrf.mxu0
      %v3181 = vadd.f32 %v3157, %v3180
      %3182 = vdwg.mxu0
      %3183 = vmatpush.msra.mxu0 0.0
      %3184 = vmatpush.msra.mxu0 0.0
      %3185 = vmatpush.msra.mxu0 0.0
      %3186 = vmatpush.msra.mxu0 0.0
      %3187 = vmatpush.msra.mxu0 0.0
      %3188 = vmatpush.msra.mxu0 0.0
      %3189 = vmatpush.msra.mxu0 0.0
      %3190 = vmatpush.msra.mxu0 0.0
      %3191 = vmatpush.msra.mxu0 0.0
      %3192 = vmatpush.msra.mxu0 0.0
      %3193 = vmatpush.msra.mxu0 0.0
      %3194 = vmatpush.msra.mxu0 0.0
      %3195 = vmatpush.msra.mxu0 0.0
      %3196 = vmatpush.msra.mxu0 0.0
      %3197 = vmatpush.msra.mxu0 0.0
      %v3198 = vand.u32 %v314, 4294901760
      %v3199 = vsub.f32 %v314, %v3198
      %v3200 = vand.u32 %v3199, 4294901760
      %3201 = vmatpush.msra.mxu0 %v3200
      %v3202 = vand.u32 %v3081, 4294901760
      %3203 = vmatmul.f32.gmra.mxu0 %v3202
      %v3204 = vpop.f32.mrf.mxu0
      %v3205 = vadd.f32 %v3181, %v3204
      %3206 = vdwg.mxu0
      %3207 = vmatpush.msra.mxu0 0.0
      %3208 = vmatpush.msra.mxu0 0.0
      %3209 = vmatpush.msra.mxu0 0.0
      %3210 = vmatpush.msra.mxu0 0.0
      %3211 = vmatpush.msra.mxu0 0.0
      %3212 = vmatpush.msra.mxu0 0.0
      %3213 = vmatpush.msra.mxu0 0.0
      %3214 = vmatpush.msra.mxu0 0.0
      %3215 = vmatpush.msra.mxu0 0.0
      %3216 = vmatpush.msra.mxu0 0.0
      %3217 = vmatpush.msra.mxu0 0.0
      %3218 = vmatpush.msra.mxu0 0.0
      %3219 = vmatpush.msra.mxu0 0.0
      %3220 = vmatpush.msra.mxu0 0.0
      %3221 = vmatpush.msra.mxu0 0.0
      %v3222 = vand.u32 %v314, 4294901760
      %3223 = vmatpush.msra.mxu0 %v3222
      %v3224 = vand.u32 %v3081, 4294901760
      %3225 = vmatmul.f32.gmra.mxu0 %v3224
      %v3226 = vpop.f32.mrf.mxu0
      %v3227 = vadd.f32 %v3205, %v3226
      %3228 = vdwg.mxu0
      %v3229 = vadd.f32 %v3079, %v3227
      %s3230 = scalar_lea.vmem %s298, 6
      %3231 = vst.msk [vmem:[%s3230] sm:$0x3] %vm1058, %v3229
      %p3232 = scmp.lt.s32.totalorder %s16, 1
      %s3233 = scalar_select %p3232, %s16, 1
      %s3234 = smul.addr %s3233, 4
      %s3235 = smul.addr %s3234, 2
      %s3236 = scalar_lea.vmem %s5, %s3235
      // Predicated region
      $region41: #{multivar_attention_rom_forward.1} parent=39 // pred_check
        %p3237 = pneg %p164
      $region42: #{multivar_attention_rom_forward.1} parent=39 // pred_check_branch
        %3239 = sbr.rel (%p3237) target = $region44
      $region43: #{multivar_attention_rom_forward.1} parent=39 // pred_region
        _
      $region44: #{multivar_attention_rom_forward.1} parent=39 // pred_fallthru
        _
    $region40: #{multivar_attention_rom_forward.1} parent=5 // pred_fallthru
      _
    %p3240 = scmp.le.s32.totalorder 2, %s11
    // Predicated region
    $region45: #{multivar_attention_rom_forward.1} parent=5 // pred_check
      %p3241 = pneg %p3240
    $region46: #{multivar_attention_rom_forward.1} parent=5 // pred_check_branch
      %3243 = sbr.rel (%p3241) target = $region48
    $region47: #{multivar_attention_rom_forward.1} parent=5 // pred_region
      %s3244 = ssub.s32 %s11, 2
      // Predicated region
      $region49: #{multivar_attention_rom_forward.1} parent=47 // pred_check
        %p3245 = pneg %p170
      $region50: #{multivar_attention_rom_forward.1} parent=47 // pred_check_branch
        %3247 = sbr.rel (%p3245) target = $region52
      $region51: #{multivar_attention_rom_forward.1} parent=47 // pred_region
        %p3248 = scmp.lt.s32.totalorder %s17, 1
        %s3249 = scalar_select %p3248, %s17, 1
        %s3250 = smul.addr %s3249, 4
        %s3251 = smul.addr %s3250, 2
        %s3252 = scalar_lea.vmem %s5, %s3251
      $region52: #{multivar_attention_rom_forward.1} parent=47 // pred_fallthru
        _
    $region48: #{multivar_attention_rom_forward.1} parent=5 // pred_fallthru
      _
  $region6: #{multivar_attention_rom_forward.1} parent=0 // loop_footer
    %s15 = sadd.s32 1, %s11
  $region7: #{multivar_attention_rom_forward.1} parent=0 // loop_footer_branch
    %10 = sbr.rel target = $region3
  $region8: #{multivar_attention_rom_forward.1} parent=0 // loop_exit
    _

</llo_original>
